<compile_context>
chip_gen: v7x
topology: tpu7x:2x2x1
jax: 0.10.0
libtpu: 0.0.40
codegen_flags: <defaults>
</compile_context>

<pallas_src>
import jax
import jax.numpy as jnp
import numpy as np
from jax import lax
from jax.experimental import pallas as pl
from jax.experimental.pallas import tpu as pltpu

# ----- config (mirrors Generator.__init__) -----------------------------------
NUM_GRAMMAR = 24   # config['grammar_size']
NUM_ATOMS   = 16   # config['atom_size']
NUM_BONDS   = 4    # config['bond_size']
LAYERS      = 2    # config['gen_layers']
EMB         = 32   # self.emb_size
BOND_EMB    = 8    # self.bond_emb_size
G_PAD       = 128  # grammar dim padded to a full lane tile


# ----- Pallas kernel: mask build + GCN stack + readout + softmax --------------
def _gen_kernel(mol_ref, adj_ref, mm_ref, mmt_ref,
                wself_ref, bself_ref, wcomb_ref, wgen_ref, bgen_ref,
                out_ref):
    BB, N, E = mol_ref.shape
    h = mol_ref[...]                       # (BB, N, EMB)  masked atom embeddings
    mm = mm_ref[...]                       # (BB, N, 1)    node mask

    # pair mask: clip(mm_i * mm_j - eye, 0, 1), built in VMEM from tiny inputs
    ii = lax.broadcasted_iota(jnp.int32, (N, N), 0)
    jj = lax.broadcasted_iota(jnp.int32, (N, N), 1)
    eyef = (ii == jj).astype(jnp.float32)                                # (N, N)
    pairmask = jnp.clip(mm * mmt_ref[...] - eyef[None, :, :], 0.0, 1.0)  # (BB,N,N)

    # masked one-hot adjacency per bond type (replaces the f32 (8,N,N) embedding)
    adj_ids = adj_ref[...]                                               # (BB,N,N) int32
    adj_t = [(adj_ids == t).astype(jnp.float32) * pairmask
             for t in range(NUM_BONDS)]

    # TODO(synk): gcn_layer source is not provided with the module; implemented
    # here as a standard relational GCN layer (bn=False):
    #   h <- relu(h @ W_self + b_self + sum_e adj_emb[e] @ (h @ W_rel[e])) * maskmol
    # with bond_linear folded into Wcomb[l,t] = sum_e (W_bond[e,t]+b_bond[e])*W_rel[l,e]
    # (an exact algebraic refactoring of the reference computation).
    for l in range(LAYERS):
        h_flat = h.reshape(BB * N, E)
        msg_flat = (jnp.dot(h_flat, wself_ref[l], preferred_element_type=jnp.float32)
                    + bself_ref[l])                                      # (BB*N, EMB)
        v_flat = jnp.dot(h_flat, wcomb_ref[l],
                         preferred_element_type=jnp.float32)             # (BB*N, 4*EMB)
        msg = msg_flat.reshape(BB, N, E)
        v = v_flat.reshape(BB, N, NUM_BONDS * E)
        for t in range(NUM_BONDS):
            msg = msg + jnp.einsum('bij,bjd->bid', adj_t[t],
                                   v[:, :, t * E:(t + 1) * E],
                                   preferred_element_type=jnp.float32)
        h = jnp.maximum(msg, 0.0) * mm

    # readout: cat([h[:,0], h.mean(1)], -1) @ W_gen + b_gen, softmax over grammar
    h0 = h[:, 0, :]                           # (BB, EMB)
    hmean = jnp.sum(h, axis=1) * (1.0 / N)    # (BB, EMB)  (mean over ALL N, as in torch)
    feat = jnp.concatenate([h0, hmean], axis=-1)                         # (BB, 2*EMB)
    logits = (jnp.dot(feat, wgen_ref[...], preferred_element_type=jnp.float32)
              + bgen_ref[...])                                           # (BB, G_PAD)
    m = jnp.max(logits, axis=-1, keepdims=True)
    ex = jnp.exp(logits - m)                  # padded lanes carry -1e30 bias -> exp==0
    out_ref[...] = ex / jnp.sum(ex, axis=-1, keepdims=True)


def generator_forward_pallas(mol, adj, params, block_b=8):
    B, N = mol.shape
    G = NUM_GRAMMAR

    # pad batch to a multiple of the per-step block (padding rows are fully masked)
    BB = block_b
    Bp = ((B + BB - 1) // BB) * BB
    if Bp != B:
        mol = jnp.pad(mol, ((0, Bp - B), (0, 0)))
        adj = jnp.pad(adj, ((0, Bp - B), (0, 0), (0, 0)))

    # --- glue (atom embedding / masks / weight folding), plain JAX -----------
    mmf = jnp.clip(mol, 0, 1).astype(jnp.float32)
    mm = mmf[:, :, None]                        # (Bp, N, 1)
    mmt = mmf[:, None, :]                       # (Bp, 1, N)

    mol_oh = jax.nn.one_hot(mol, NUM_ATOMS, dtype=jnp.float32)
    mol_emb = (mol_oh @ params['w_atom'].T + params['b_atom']) * mm      # (Bp,N,EMB)

    # fold bond_linear into per-bond-type relational weights (exact)
    bond_tab = params['w_bond'] + params['b_bond'][:, None]              # (BOND_EMB, NUM_BONDS)
    wcomb = jnp.einsum('et,lekd->ltkd', bond_tab, params['w_rel'])       # (L, NB, EMB, EMB)
    wcomb_flat = jnp.transpose(wcomb, (0, 2, 1, 3)).reshape(LAYERS, EMB, NUM_BONDS * EMB)

    # lane-dense gen_linear: pad grammar dim to 128; -1e30 bias kills padded lanes
    wgen = jnp.zeros((2 * EMB, G_PAD), jnp.float32).at[:, :G].set(params['w_gen'].T)
    bgen = jnp.full((1, G_PAD), -1e30, jnp.float32).at[0, :G].set(params['b_gen'])

    adj_i = adj.astype(jnp.int32)

    out = pl.pallas_call(
        _gen_kernel,
        out_shape=jax.ShapeDtypeStruct((Bp, G_PAD), jnp.float32),
        grid=(Bp // BB,),
        in_specs=[
            pl.BlockSpec((BB, N, EMB), lambda g: (g, 0, 0)),             # mol_emb
            pl.BlockSpec((BB, N, N), lambda g: (g, 0, 0)),               # adj ids (int32)
            pl.BlockSpec((BB, N, 1), lambda g: (g, 0, 0)),               # maskmol
            pl.BlockSpec((BB, 1, N), lambda g: (g, 0, 0)),               # maskmol^T
            pl.BlockSpec((LAYERS, EMB, EMB), lambda g: (0, 0, 0)),       # W_self
            pl.BlockSpec((LAYERS, 1, EMB), lambda g: (0, 0, 0)),         # b_self
            pl.BlockSpec((LAYERS, EMB, NUM_BONDS * EMB), lambda g: (0, 0, 0)),  # Wcomb
            pl.BlockSpec((2 * EMB, G_PAD), lambda g: (0, 0)),            # gen_linear W (padded)
            pl.BlockSpec((1, G_PAD), lambda g: (0, 0)),                  # gen_linear b (padded)
        ],
        out_specs=pl.BlockSpec((BB, G_PAD), lambda g: (g, 0)),
        compiler_params=pltpu.CompilerParams(dimension_semantics=("parallel",)),
    )(mol_emb, adj_i, mm, mmt,
      params['w_self'], params['b_self'], wcomb_flat, wgen, bgen)

    return out[:B, :G]   # (B, G)


# ----- pure-JAX reference (mirrors the torch forward; original formulation) ----
def generator_forward_ref(mol, adj, params):
    N = mol.shape[1]
    maskmol = jnp.clip(mol, 0, 1).astype(jnp.float32)[:, :, None]
    eye = jnp.eye(N, dtype=jnp.float32)[None, :, :, None]
    mask = jnp.clip(maskmol[:, None, :, :] * maskmol[:, :, None, :] - eye, 0.0, 1.0)

    mol_oh = jax.nn.one_hot(mol, NUM_ATOMS, dtype=jnp.float32)
    adj_oh = jax.nn.one_hot(adj, NUM_BONDS, dtype=jnp.float32)
    h = (mol_oh @ params['w_atom'].T + params['b_atom']) * maskmol
    adj_emb = (adj_oh @ params['w_bond'].T + params['b_bond']) * mask
    adj_emb = jnp.transpose(adj_emb, (0, 3, 1, 2))

    for l in range(LAYERS):
        msg = jnp.einsum('bnd,de->bne', h, params['w_self'][l]) + params['b_self'][l]
        for e in range(BOND_EMB):
            msg = msg + jnp.einsum('bnm,bmd->bnd', adj_emb[:, e], h @ params['w_rel'][l, e])
        h = jnp.maximum(msg, 0.0) * maskmol

    feat = jnp.concatenate([h[:, 0], h.mean(axis=1)], axis=1)     # (B, 2*EMB)
    logits = feat @ params['w_gen'].T + params['b_gen']           # (B, G)
    return jax.nn.softmax(logits, axis=1)


# ----- parameters (deterministic, synthetic) -----------------------------------
def make_params(key):
    ks = jax.random.split(key, 9)
    n = lambda k, s: 0.1 * jax.random.normal(k, s, dtype=jnp.float32)
    return {
        'w_atom': n(ks[0], (EMB, NUM_ATOMS)),             # nn.Linear(num_atoms, 32)
        'b_atom': n(ks[1], (EMB,)),
        'w_bond': n(ks[2], (BOND_EMB, NUM_BONDS)),        # nn.Linear(num_bonds, 8)
        'b_bond': n(ks[3], (BOND_EMB,)),
        'w_self': n(ks[4], (LAYERS, EMB, EMB)),           # gcn_layer self weights
        'b_self': n(ks[5], (LAYERS, 1, EMB)),             # gcn_layer self biases
        'w_rel':  n(ks[6], (LAYERS, BOND_EMB, EMB, EMB)), # gcn_layer relational weights
        'w_gen':  n(ks[7], (NUM_GRAMMAR, 2 * EMB)),       # nn.Linear(64, num_grammar)
        'b_gen':  n(ks[8], (NUM_GRAMMAR,)),
    }


if __name__ == "__main__":
    key = jax.random.PRNGKey(0)
    kp, km, ka = jax.random.split(key, 3)

    B, N = 16, 8     # 16 molecules -> 2 grid steps of 8 molecules each
    params = make_params(kp)
    mol = jax.random.randint(km, (B, N), 0, NUM_ATOMS, dtype=jnp.int32)     # node ids
    adj = jax.random.randint(ka, (B, N, N), 0, NUM_BONDS, dtype=jnp.int32)  # bond ids

    out = jax.block_until_ready(generator_forward_pallas(mol, adj, params))
    ref = jax.block_until_ready(generator_forward_ref(mol, adj, params))

    assert out.shape == (B, NUM_GRAMMAR)
    np.testing.assert_allclose(np.asarray(out), np.asarray(ref), rtol=1e-4, atol=1e-5)
    np.testing.assert_allclose(np.asarray(out).sum(axis=1), np.ones(B), rtol=1e-5, atol=1e-5)

    print("KERNEL_OK")
</pallas_src>

<mosaic_0001>
module attributes {stable_mosaic.version = 11 : i64} {
  func.func @_gen_kernel(%arg0: i32, %arg1: memref<8x8x32xf32, #tpu.memory_space<vmem>>, %arg2: memref<8x8x8xi32, #tpu.memory_space<vmem>>, %arg3: memref<8x8x1xf32, #tpu.memory_space<vmem>>, %arg4: memref<8x1x8xf32, #tpu.memory_space<vmem>>, %arg5: memref<2x32x32xf32, #tpu.memory_space<vmem>>, %arg6: memref<2x1x32xf32, #tpu.memory_space<vmem>>, %arg7: memref<2x32x128xf32, #tpu.memory_space<vmem>>, %arg8: memref<64x128xf32, #tpu.memory_space<vmem>>, %arg9: memref<1x128xf32, #tpu.memory_space<vmem>>, %arg10: memref<8x128xf32, #tpu.memory_space<vmem>>) attributes {dimension_semantics = [#tpu.dimension_semantics<parallel>], iteration_bounds = array<i64: 2>, scalar_prefetch = 0 : i64, scratch_operands = 0 : i64, tpu.core_type = #tpu.core_type<tc>, window_params = [{transform_indices = @transform_0, window_bounds = array<i64: 8, 8, 32>}, {transform_indices = @transform_1, window_bounds = array<i64: 8, 8, 8>}, {transform_indices = @transform_2, window_bounds = array<i64: 8, 8, 1>}, {transform_indices = @transform_3, window_bounds = array<i64: 8, 1, 8>}, {pipeline_mode = #tpu.pipeline_mode<synchronous>, transform_indices = @transform_4, window_bounds = array<i64: 2, 32, 32>}, {pipeline_mode = #tpu.pipeline_mode<synchronous>, transform_indices = @transform_5, window_bounds = array<i64: 2, 1, 32>}, {pipeline_mode = #tpu.pipeline_mode<synchronous>, transform_indices = @transform_6, window_bounds = array<i64: 2, 32, 128>}, {pipeline_mode = #tpu.pipeline_mode<synchronous>, transform_indices = @transform_7, window_bounds = array<i64: 64, 128>}, {pipeline_mode = #tpu.pipeline_mode<synchronous>, transform_indices = @transform_8, window_bounds = array<i64: 1, 128>}, {transform_indices = @transform_9, window_bounds = array<i64: 8, 128>}]} {
    %c0 = arith.constant 0 : index
    %c0_0 = arith.constant 0 : index
    %c0_1 = arith.constant 0 : index
    %0 = vector.load %arg1[%c0, %c0_0, %c0_1] : memref<8x8x32xf32, #tpu.memory_space<vmem>>, vector<8x8x32xf32>
    %c0_2 = arith.constant 0 : index
    %c0_3 = arith.constant 0 : index
    %c0_4 = arith.constant 0 : index
    %1 = vector.load %arg3[%c0_2, %c0_3, %c0_4] : memref<8x8x1xf32, #tpu.memory_space<vmem>>, vector<8x8x1xf32>
    %2 = tpu.iota {dimensions = array<i32: 0>} : vector<8x8xi32>
    %3 = tpu.iota {dimensions = array<i32: 1>} : vector<8x8xi32>
    %4 = arith.cmpi eq, %2, %3 : vector<8x8xi32>
    %5 = arith.extui %4 : vector<8x8xi1> to vector<8x8xi32>
    %6 = arith.sitofp %5 : vector<8x8xi32> to vector<8x8xf32>
    %c0_5 = arith.constant 0 : index
    %c0_6 = arith.constant 0 : index
    %c0_7 = arith.constant 0 : index
    %7 = vector.load %arg4[%c0_5, %c0_6, %c0_7] : memref<8x1x8xf32, #tpu.memory_space<vmem>>, vector<8x1x8xf32>
    %8 = vector.broadcast %1 : vector<8x8x1xf32> to vector<8x8x8xf32>
    %9 = vector.broadcast %7 : vector<8x1x8xf32> to vector<8x8x8xf32>
    %10 = arith.mulf %8, %9 : vector<8x8x8xf32>
    %11 = vector.shape_cast %6 : vector<8x8xf32> to vector<1x8x8xf32>
    %12 = vector.broadcast %11 : vector<1x8x8xf32> to vector<8x8x8xf32>
    %13 = arith.subf %10, %12 : vector<8x8x8xf32>
    %cst = arith.constant 0.000000e+00 : f32
    %cst_8 = arith.constant 1.000000e+00 : f32
    %14 = vector.broadcast %cst : f32 to vector<8x8x8xf32>
    %15 = arith.maximumf %14, %13 : vector<8x8x8xf32>
    %16 = vector.broadcast %cst_8 : f32 to vector<8x8x8xf32>
    %17 = arith.minimumf %16, %15 : vector<8x8x8xf32>
    %c0_9 = arith.constant 0 : index
    %c0_10 = arith.constant 0 : index
    %c0_11 = arith.constant 0 : index
    %18 = vector.load %arg2[%c0_9, %c0_10, %c0_11] : memref<8x8x8xi32, #tpu.memory_space<vmem>>, vector<8x8x8xi32>
    %c0_i32 = arith.constant 0 : i32
    %19 = vector.broadcast %c0_i32 : i32 to vector<8x8x8xi32>
    %20 = arith.cmpi eq, %18, %19 : vector<8x8x8xi32>
    %21 = arith.extui %20 : vector<8x8x8xi1> to vector<8x8x8xi32>
    %22 = arith.sitofp %21 : vector<8x8x8xi32> to vector<8x8x8xf32>
    %23 = arith.mulf %22, %17 : vector<8x8x8xf32>
    %c1_i32 = arith.constant 1 : i32
    %24 = vector.broadcast %c1_i32 : i32 to vector<8x8x8xi32>
    %25 = arith.cmpi eq, %18, %24 : vector<8x8x8xi32>
    %26 = arith.extui %25 : vector<8x8x8xi1> to vector<8x8x8xi32>
    %27 = arith.sitofp %26 : vector<8x8x8xi32> to vector<8x8x8xf32>
    %28 = arith.mulf %27, %17 : vector<8x8x8xf32>
    %c2_i32 = arith.constant 2 : i32
    %29 = vector.broadcast %c2_i32 : i32 to vector<8x8x8xi32>
    %30 = arith.cmpi eq, %18, %29 : vector<8x8x8xi32>
    %31 = arith.extui %30 : vector<8x8x8xi1> to vector<8x8x8xi32>
    %32 = arith.sitofp %31 : vector<8x8x8xi32> to vector<8x8x8xf32>
    %33 = arith.mulf %32, %17 : vector<8x8x8xf32>
    %c3_i32 = arith.constant 3 : i32
    %34 = vector.broadcast %c3_i32 : i32 to vector<8x8x8xi32>
    %35 = arith.cmpi eq, %18, %34 : vector<8x8x8xi32>
    %36 = arith.extui %35 : vector<8x8x8xi1> to vector<8x8x8xi32>
    %37 = arith.sitofp %36 : vector<8x8x8xi32> to vector<8x8x8xf32>
    %38 = arith.mulf %37, %17 : vector<8x8x8xf32>
    %39 = vector.shape_cast %0 : vector<8x8x32xf32> to vector<64x32xf32>
    %c0_12 = arith.constant 0 : index
    %c0_13 = arith.constant 0 : index
    %c0_14 = arith.constant 0 : index
    %40 = vector.load %arg5[%c0_12, %c0_13, %c0_14] : memref<2x32x32xf32, #tpu.memory_space<vmem>>, vector<1x32x32xf32>
    %41 = vector.shape_cast %40 : vector<1x32x32xf32> to vector<32x32xf32>
    %cst_15 = arith.constant dense<0.000000e+00> : vector<64x32xf32>
    %42 = tpu.matmul %39, %41, %cst_15 {dimension_numbers = #tpu.dot_dimension_numbers<[1], [0], [0], [1], [0, 0, 1, 1], [], []>} : vector<64x32xf32>, vector<32x32xf32>, vector<64x32xf32> -> vector<64x32xf32>
    %c0_16 = arith.constant 0 : index
    %c0_17 = arith.constant 0 : index
    %c0_18 = arith.constant 0 : index
    %43 = vector.load %arg6[%c0_16, %c0_17, %c0_18] : memref<2x1x32xf32, #tpu.memory_space<vmem>>, vector<1x1x32xf32>
    %44 = vector.shape_cast %43 : vector<1x1x32xf32> to vector<1x32xf32>
    %45 = vector.broadcast %44 : vector<1x32xf32> to vector<64x32xf32>
    %46 = arith.addf %42, %45 : vector<64x32xf32>
    %c0_19 = arith.constant 0 : index
    %c0_20 = arith.constant 0 : index
    %c0_21 = arith.constant 0 : index
    %47 = vector.load %arg7[%c0_19, %c0_20, %c0_21] : memref<2x32x128xf32, #tpu.memory_space<vmem>>, vector<1x32x128xf32>
    %48 = vector.shape_cast %47 : vector<1x32x128xf32> to vector<32x128xf32>
    %cst_22 = arith.constant dense<0.000000e+00> : vector<64x128xf32>
    %49 = tpu.matmul %39, %48, %cst_22 {dimension_numbers = #tpu.dot_dimension_numbers<[1], [0], [0], [1], [0, 0, 1, 1], [], []>} : vector<64x32xf32>, vector<32x128xf32>, vector<64x128xf32> -> vector<64x128xf32>
    %50 = vector.shape_cast %46 : vector<64x32xf32> to vector<8x8x32xf32>
    %51 = vector.shape_cast %49 : vector<64x128xf32> to vector<8x8x128xf32>
    %52 = vector.extract_strided_slice %51 {offsets = [0, 0, 0], sizes = [8, 8, 32], strides = [1, 1, 1]} : vector<8x8x128xf32> to vector<8x8x32xf32>
    "tpu.trace_start"() <{level = 10 : i32, message = "bij,bjd->bid"}> : () -> ()
    %cst_23 = arith.constant dense<0.000000e+00> : vector<8x8x32xf32>
    %53 = tpu.matmul %23, %52, %cst_23 {dimension_numbers = #tpu.dot_dimension_numbers<[2], [1], [1], [2], [0, 0, 0, 1, 1, 2], [0], [0]>} : vector<8x8x8xf32>, vector<8x8x32xf32>, vector<8x8x32xf32> -> vector<8x8x32xf32>
    "tpu.trace_stop"() : () -> ()
    %54 = arith.addf %50, %53 : vector<8x8x32xf32>
    %55 = vector.extract_strided_slice %51 {offsets = [0, 0, 32], sizes = [8, 8, 32], strides = [1, 1, 1]} : vector<8x8x128xf32> to vector<8x8x32xf32>
    "tpu.trace_start"() <{level = 10 : i32, message = "bij,bjd->bid"}> : () -> ()
    %cst_24 = arith.constant dense<0.000000e+00> : vector<8x8x32xf32>
    %56 = tpu.matmul %28, %55, %cst_24 {dimension_numbers = #tpu.dot_dimension_numbers<[2], [1], [1], [2], [0, 0, 0, 1, 1, 2], [0], [0]>} : vector<8x8x8xf32>, vector<8x8x32xf32>, vector<8x8x32xf32> -> vector<8x8x32xf32>
    "tpu.trace_stop"() : () -> ()
    %57 = arith.addf %54, %56 : vector<8x8x32xf32>
    %58 = vector.extract_strided_slice %51 {offsets = [0, 0, 64], sizes = [8, 8, 32], strides = [1, 1, 1]} : vector<8x8x128xf32> to vector<8x8x32xf32>
    "tpu.trace_start"() <{level = 10 : i32, message = "bij,bjd->bid"}> : () -> ()
    %cst_25 = arith.constant dense<0.000000e+00> : vector<8x8x32xf32>
    %59 = tpu.matmul %33, %58, %cst_25 {dimension_numbers = #tpu.dot_dimension_numbers<[2], [1], [1], [2], [0, 0, 0, 1, 1, 2], [0], [0]>} : vector<8x8x8xf32>, vector<8x8x32xf32>, vector<8x8x32xf32> -> vector<8x8x32xf32>
    "tpu.trace_stop"() : () -> ()
    %60 = arith.addf %57, %59 : vector<8x8x32xf32>
    %61 = vector.extract_strided_slice %51 {offsets = [0, 0, 96], sizes = [8, 8, 32], strides = [1, 1, 1]} : vector<8x8x128xf32> to vector<8x8x32xf32>
    "tpu.trace_start"() <{level = 10 : i32, message = "bij,bjd->bid"}> : () -> ()
    %cst_26 = arith.constant dense<0.000000e+00> : vector<8x8x32xf32>
    %62 = tpu.matmul %38, %61, %cst_26 {dimension_numbers = #tpu.dot_dimension_numbers<[2], [1], [1], [2], [0, 0, 0, 1, 1, 2], [0], [0]>} : vector<8x8x8xf32>, vector<8x8x32xf32>, vector<8x8x32xf32> -> vector<8x8x32xf32>
    "tpu.trace_stop"() : () -> ()
    %63 = arith.addf %60, %62 : vector<8x8x32xf32>
    %cst_27 = arith.constant 0.000000e+00 : f32
    %64 = vector.broadcast %cst_27 : f32 to vector<8x8x32xf32>
    %65 = arith.maximumf %63, %64 : vector<8x8x32xf32>
    %66 = vector.broadcast %1 : vector<8x8x1xf32> to vector<8x8x32xf32>
    %67 = arith.mulf %65, %66 : vector<8x8x32xf32>
    %68 = vector.shape_cast %67 : vector<8x8x32xf32> to vector<64x32xf32>
    %c1 = arith.constant 1 : index
    %c0_28 = arith.constant 0 : index
    %c0_29 = arith.constant 0 : index
    %69 = vector.load %arg5[%c1, %c0_28, %c0_29] : memref<2x32x32xf32, #tpu.memory_space<vmem>>, vector<1x32x32xf32>
    %70 = vector.shape_cast %69 : vector<1x32x32xf32> to vector<32x32xf32>
    %cst_30 = arith.constant dense<0.000000e+00> : vector<64x32xf32>
    %71 = tpu.matmul %68, %70, %cst_30 {dimension_numbers = #tpu.dot_dimension_numbers<[1], [0], [0], [1], [0, 0, 1, 1], [], []>} : vector<64x32xf32>, vector<32x32xf32>, vector<64x32xf32> -> vector<64x32xf32>
    %c1_31 = arith.constant 1 : index
    %c0_32 = arith.constant 0 : index
    %c0_33 = arith.constant 0 : index
    %72 = vector.load %arg6[%c1_31, %c0_32, %c0_33] : memref<2x1x32xf32, #tpu.memory_space<vmem>>, vector<1x1x32xf32>
    %73 = vector.shape_cast %72 : vector<1x1x32xf32> to vector<1x32xf32>
    %74 = vector.broadcast %73 : vector<1x32xf32> to vector<64x32xf32>
    %75 = arith.addf %71, %74 : vector<64x32xf32>
    %c1_34 = arith.constant 1 : index
    %c0_35 = arith.constant 0 : index
    %c0_36 = arith.constant 0 : index
    %76 = vector.load %arg7[%c1_34, %c0_35, %c0_36] : memref<2x32x128xf32, #tpu.memory_space<vmem>>, vector<1x32x128xf32>
    %77 = vector.shape_cast %76 : vector<1x32x128xf32> to vector<32x128xf32>
    %cst_37 = arith.constant dense<0.000000e+00> : vector<64x128xf32>
    %78 = tpu.matmul %68, %77, %cst_37 {dimension_numbers = #tpu.dot_dimension_numbers<[1], [0], [0], [1], [0, 0, 1, 1], [], []>} : vector<64x32xf32>, vector<32x128xf32>, vector<64x128xf32> -> vector<64x128xf32>
    %79 = vector.shape_cast %75 : vector<64x32xf32> to vector<8x8x32xf32>
    %80 = vector.shape_cast %78 : vector<64x128xf32> to vector<8x8x128xf32>
    %81 = vector.extract_strided_slice %80 {offsets = [0, 0, 0], sizes = [8, 8, 32], strides = [1, 1, 1]} : vector<8x8x128xf32> to vector<8x8x32xf32>
    "tpu.trace_start"() <{level = 10 : i32, message = "bij,bjd->bid"}> : () -> ()
    %cst_38 = arith.constant dense<0.000000e+00> : vector<8x8x32xf32>
    %82 = tpu.matmul %23, %81, %cst_38 {dimension_numbers = #tpu.dot_dimension_numbers<[2], [1], [1], [2], [0, 0, 0, 1, 1, 2], [0], [0]>} : vector<8x8x8xf32>, vector<8x8x32xf32>, vector<8x8x32xf32> -> vector<8x8x32xf32>
    "tpu.trace_stop"() : () -> ()
    %83 = arith.addf %79, %82 : vector<8x8x32xf32>
    %84 = vector.extract_strided_slice %80 {offsets = [0, 0, 32], sizes = [8, 8, 32], strides = [1, 1, 1]} : vector<8x8x128xf32> to vector<8x8x32xf32>
    "tpu.trace_start"() <{level = 10 : i32, message = "bij,bjd->bid"}> : () -> ()
    %cst_39 = arith.constant dense<0.000000e+00> : vector<8x8x32xf32>
    %85 = tpu.matmul %28, %84, %cst_39 {dimension_numbers = #tpu.dot_dimension_numbers<[2], [1], [1], [2], [0, 0, 0, 1, 1, 2], [0], [0]>} : vector<8x8x8xf32>, vector<8x8x32xf32>, vector<8x8x32xf32> -> vector<8x8x32xf32>
    "tpu.trace_stop"() : () -> ()
    %86 = arith.addf %83, %85 : vector<8x8x32xf32>
    %87 = vector.extract_strided_slice %80 {offsets = [0, 0, 64], sizes = [8, 8, 32], strides = [1, 1, 1]} : vector<8x8x128xf32> to vector<8x8x32xf32>
    "tpu.trace_start"() <{level = 10 : i32, message = "bij,bjd->bid"}> : () -> ()
    %cst_40 = arith.constant dense<0.000000e+00> : vector<8x8x32xf32>
    %88 = tpu.matmul %33, %87, %cst_40 {dimension_numbers = #tpu.dot_dimension_numbers<[2], [1], [1], [2], [0, 0, 0, 1, 1, 2], [0], [0]>} : vector<8x8x8xf32>, vector<8x8x32xf32>, vector<8x8x32xf32> -> vector<8x8x32xf32>
    "tpu.trace_stop"() : () -> ()
    %89 = arith.addf %86, %88 : vector<8x8x32xf32>
    %90 = vector.extract_strided_slice %80 {offsets = [0, 0, 96], sizes = [8, 8, 32], strides = [1, 1, 1]} : vector<8x8x128xf32> to vector<8x8x32xf32>
    "tpu.trace_start"() <{level = 10 : i32, message = "bij,bjd->bid"}> : () -> ()
    %cst_41 = arith.constant dense<0.000000e+00> : vector<8x8x32xf32>
    %91 = tpu.matmul %38, %90, %cst_41 {dimension_numbers = #tpu.dot_dimension_numbers<[2], [1], [1], [2], [0, 0, 0, 1, 1, 2], [0], [0]>} : vector<8x8x8xf32>, vector<8x8x32xf32>, vector<8x8x32xf32> -> vector<8x8x32xf32>
    "tpu.trace_stop"() : () -> ()
    %92 = arith.addf %89, %91 : vector<8x8x32xf32>
    %cst_42 = arith.constant 0.000000e+00 : f32
    %93 = vector.broadcast %cst_42 : f32 to vector<8x8x32xf32>
    %94 = arith.maximumf %92, %93 : vector<8x8x32xf32>
    %95 = vector.broadcast %1 : vector<8x8x1xf32> to vector<8x8x32xf32>
    %96 = arith.mulf %94, %95 : vector<8x8x32xf32>
    %97 = vector.extract_strided_slice %96 {offsets = [0, 0, 0], sizes = [8, 1, 32], strides = [1, 1, 1]} : vector<8x8x32xf32> to vector<8x1x32xf32>
    %98 = vector.shape_cast %97 : vector<8x1x32xf32> to vector<8x32xf32>
    %cst_43 = arith.constant dense<0.000000e+00> : vector<8x32xf32>
    %99 = vector.multi_reduction <add>, %96, %cst_43 [1] : vector<8x8x32xf32> to vector<8x32xf32>
    %cst_44 = arith.constant 1.250000e-01 : f32
    %100 = vector.broadcast %cst_44 : f32 to vector<8x32xf32>
    %101 = arith.mulf %99, %100 : vector<8x32xf32>
    %102 = tpu.concatenate %98, %101 in 1 : vector<8x32xf32>, vector<8x32xf32> -> vector<8x64xf32>
    %c0_45 = arith.constant 0 : index
    %c0_46 = arith.constant 0 : index
    %103 = vector.load %arg8[%c0_45, %c0_46] : memref<64x128xf32, #tpu.memory_space<vmem>>, vector<64x128xf32>
    %cst_47 = arith.constant dense<0.000000e+00> : vector<8x128xf32>
    %104 = tpu.matmul %102, %103, %cst_47 {dimension_numbers = #tpu.dot_dimension_numbers<[1], [0], [0], [1], [0, 0, 1, 1], [], []>} : vector<8x64xf32>, vector<64x128xf32>, vector<8x128xf32> -> vector<8x128xf32>
    %c0_48 = arith.constant 0 : index
    %c0_49 = arith.constant 0 : index
    %105 = vector.load %arg9[%c0_48, %c0_49] : memref<1x128xf32, #tpu.memory_space<vmem>>, vector<1x128xf32>
    %106 = vector.broadcast %105 : vector<1x128xf32> to vector<8x128xf32>
    %107 = arith.addf %104, %106 : vector<8x128xf32>
    %cst_50 = arith.constant dense<0xFF800000> : vector<8xf32>
    %108 = vector.multi_reduction <maximumf>, %107, %cst_50 [1] : vector<8x128xf32> to vector<8xf32>
    %109 = vector.shape_cast %108 : vector<8xf32> to vector<8x1xf32>
    %110 = vector.broadcast %109 : vector<8x1xf32> to vector<8x128xf32>
    %111 = arith.subf %107, %110 : vector<8x128xf32>
    %112 = math.exp %111 : vector<8x128xf32>
    %cst_51 = arith.constant dense<0.000000e+00> : vector<8xf32>
    %113 = vector.multi_reduction <add>, %112, %cst_51 [1] : vector<8x128xf32> to vector<8xf32>
    %114 = vector.shape_cast %113 : vector<8xf32> to vector<8x1xf32>
    %115 = vector.broadcast %114 : vector<8x1xf32> to vector<8x128xf32>
    %116 = arith.divf %112, %115 : vector<8x128xf32>
    %c0_52 = arith.constant 0 : index
    %c0_53 = arith.constant 0 : index
    %117 = vector.load %arg10[%c0_52, %c0_53] : memref<8x128xf32, #tpu.memory_space<vmem>>, vector<8x128xf32>
    tpu.vector_store %arg10[%c0_52, %c0_53], %116 {strides = array<i32>} : memref<8x128xf32, #tpu.memory_space<vmem>>, vector<8x128xf32>,
    return
  }
  func.func @transform_0(%arg0: i32) -> (i32, i32, i32) {
    %c0_i32 = arith.constant 0 : i32
    %c0_i32_0 = arith.constant 0 : i32
    %c0_i32_1 = arith.constant 0 : i32
    return %arg0, %c0_i32, %c0_i32_0 : i32, i32, i32
  }
  func.func @transform_1(%arg0: i32) -> (i32, i32, i32) {
    %c0_i32 = arith.constant 0 : i32
    %c0_i32_0 = arith.constant 0 : i32
    %c0_i32_1 = arith.constant 0 : i32
    return %arg0, %c0_i32, %c0_i32_0 : i32, i32, i32
  }
  func.func @transform_2(%arg0: i32) -> (i32, i32, i32) {
    %c0_i32 = arith.constant 0 : i32
    %c0_i32_0 = arith.constant 0 : i32
    %c0_i32_1 = arith.constant 0 : i32
    return %arg0, %c0_i32, %c0_i32_0 : i32, i32, i32
  }
  func.func @transform_3(%arg0: i32) -> (i32, i32, i32) {
    %c0_i32 = arith.constant 0 : i32
    %c0_i32_0 = arith.constant 0 : i32
    %c0_i32_1 = arith.constant 0 : i32
    return %arg0, %c0_i32, %c0_i32_0 : i32, i32, i32
  }
  func.func @transform_4(%arg0: i32) -> (i32, i32, i32) {
    %c0_i32 = arith.constant 0 : i32
    %c0_i32_0 = arith.constant 0 : i32
    %c0_i32_1 = arith.constant 0 : i32
    %c0_i32_2 = arith.constant 0 : i32
    return %c0_i32, %c0_i32_0, %c0_i32_1 : i32, i32, i32
  }
  func.func @transform_5(%arg0: i32) -> (i32, i32, i32) {
    %c0_i32 = arith.constant 0 : i32
    %c0_i32_0 = arith.constant 0 : i32
    %c0_i32_1 = arith.constant 0 : i32
    %c0_i32_2 = arith.constant 0 : i32
    return %c0_i32, %c0_i32_0, %c0_i32_1 : i32, i32, i32
  }
  func.func @transform_6(%arg0: i32) -> (i32, i32, i32) {
    %c0_i32 = arith.constant 0 : i32
    %c0_i32_0 = arith.constant 0 : i32
    %c0_i32_1 = arith.constant 0 : i32
    %c0_i32_2 = arith.constant 0 : i32
    return %c0_i32, %c0_i32_0, %c0_i32_1 : i32, i32, i32
  }
  func.func @transform_7(%arg0: i32) -> (i32, i32) {
    %c0_i32 = arith.constant 0 : i32
    %c0_i32_0 = arith.constant 0 : i32
    %c0_i32_1 = arith.constant 0 : i32
    return %c0_i32, %c0_i32_0 : i32, i32
  }
  func.func @transform_8(%arg0: i32) -> (i32, i32) {
    %c0_i32 = arith.constant 0 : i32
    %c0_i32_0 = arith.constant 0 : i32
    %c0_i32_1 = arith.constant 0 : i32
    return %c0_i32, %c0_i32_0 : i32, i32
  }
  func.func @transform_9(%arg0: i32) -> (i32, i32) {
    %c0_i32 = arith.constant 0 : i32
    %c0_i32_0 = arith.constant 0 : i32
    return %arg0, %c0_i32 : i32, i32
  }
}

</mosaic_0001>

<llo_original>
// kernel: tpu_custom_call.1
$region0: #{tpu_custom_call.1}
  #allocation0 [shape = 'u32[]', space=smem, size = 0x4, offset = 0x4, fixed_abs, tag = 'smem constant byte address 0x4 - core index']
  #allocation1 [shape = 'u32[144,128]{1,0:T(1,128)}', space=vmem, size = 0x12000, scoped, tag = 'internal scratch']
  %s0 = inlined_call_operand.vmem [shape: f32[16,8,32], index: 0, kind: input, shape index: {}]
  %s1 = inlined_call_operand.vmem [shape: s32[16,8,8], index: 1, kind: input, shape index: {}]
  %s2 = inlined_call_operand.vmem [shape: f32[16,8,1], index: 2, kind: input, shape index: {}]
  %s3 = inlined_call_operand.vmem [shape: f32[16,1,8], index: 3, kind: input, shape index: {}]
  %s4 = inlined_call_operand.vmem [shape: f32[2,32,32], index: 4, kind: input, shape index: {}]
  %s5 = inlined_call_operand.vmem [shape: f32[2,1,32], index: 5, kind: input, shape index: {}]
  %s6 = inlined_call_operand.vmem [shape: f32[2,32,128], index: 6, kind: input, shape index: {}]
  %s7 = inlined_call_operand.vmem [shape: f32[64,128], index: 7, kind: input, shape index: {}]
  %s8 = inlined_call_operand.vmem [shape: f32[1,128], index: 8, kind: input, shape index: {}]
  %s9 = inlined_call_operand.hbm [shape: f32[16,128], index: 9, kind: output, shape index: {}]
  %s10 = sld [smem:[#allocation0]]
  $region69: #{tpu_custom_call.1} parent=0
    _
  %s12 = ssub.s32 1, %s10
  %s13 = scalar_select 0, %s12, %s10
  $region1: #{tpu_custom_call.1} parent=0
    #allocation2 [shape = 'u8[8192]{0}', space=vmem, size = 0x2000, scoped, tag = 'output window, operand 0']
    #allocation3 [shape = 's32[2]{0}', space=sflag, size = 0x8, scoped, tag = 'scoped memory for tpu_custom_call.1']
    %14 = vsyncpa [#allocation3], 0
    %s15 = scalar_lea.sflag [#allocation3], 1
    %16 = vsyncpa %s15, 0
    loop: start=0, step=1, limit=4
    $region2: #{tpu_custom_call.1} parent=1 // loop_pre_header
      _
    $region3: #{tpu_custom_call.1} parent=1 // loop_header
      %s18 = sphi 0, %s22
      %p19 = scmp.ge.s32.totalorder %s18, 4
      %s28 = sphi 0, %s30
      %s31 = sphi 0, %s28
      %s32 = sphi 0, %s31
      %s48 = sphi 0, %s32
      %s54 = sphi 0, %s56
      %s57 = sphi 0, %s54
      %s58 = sphi 0, %s57
      %s74 = sphi 0, %s58
      %s80 = sphi 0, %s82
      %s83 = sphi 0, %s80
      %s84 = sphi 0, %s83
      %s100 = sphi 0, %s84
      %s106 = sphi 0, %s108
      %s109 = sphi 0, %s106
      %s110 = sphi 0, %s109
      %s126 = sphi 0, %s110
      %s130 = sphi 0, %s130
      %s132 = sphi 0, %s130
      %s133 = sphi 0, %s132
      %s147 = sphi 0, %s133
      %s151 = sphi 0, %s151
      %s153 = sphi 0, %s151
      %s154 = sphi 0, %s153
      %s168 = sphi 0, %s154
      %s172 = sphi 0, %s172
      %s174 = sphi 0, %s172
      %s175 = sphi 0, %s174
      %s189 = sphi 0, %s175
      %s193 = sphi 0, %s193
      %s195 = sphi 0, %s193
      %s196 = sphi 0, %s195
      %s210 = sphi 0, %s196
      %s214 = sphi 0, %s214
      %s216 = sphi 0, %s214
      %s217 = sphi 0, %s216
      %s231 = sphi 0, %s217
      %s237 = sphi 0, %s239
      %s240 = sphi 0, %s237
      %s241 = sphi 0, %s240
      %s257 = sphi 0, %s241
    $region4: #{tpu_custom_call.1} parent=1 // loop_header_branch
      %21 = sbr.rel (%p19) target = $region8
    $region5: #{tpu_custom_call.1} parent=1 // loop_body
      %s23 = ssub.s32 %s18, 1
      %s24 = ssub.s32 %s18, 2
      %s25 = sadd.s32 %s18, 1
      %s26 = ssub.s32 %s18, %s25
      %p27 = scmp.eq.s32.totalorder %s26, 0
      %s29 = sadd.s32 %s28, 1
      %s30 = scalar_select %p27, %s28, %s29
      %p33 = pneg %p27
      %p34 = scmp.eq.s32.totalorder %s18, 1
      %p35 = por %p33, %p34
      %p36 = scmp.ne.s32.totalorder %s28, %s31
      %p37 = scmp.eq.s32.totalorder %s18, 0
      %p38 = por %p36, %p37
      %p39 = scmp.ne.s32.totalorder %s28, %s31
      %p40 = scmp.eq.s32.totalorder %s23, 1
      %p41 = por %p39, %p40
      %p42 = scmp.ne.s32.totalorder %s31, %s32
      %p43 = scmp.eq.s32.totalorder %s23, 0
      %p44 = por %p42, %p43
      %p45 = scmp.ne.s32.totalorder %s31, %s32
      %p46 = scmp.eq.s32.totalorder %s24, 1
      %p47 = por %p45, %p46
      %p49 = scmp.ne.s32.totalorder %s32, %s48
      %p50 = scmp.eq.s32.totalorder %s24, 0
      %p51 = por %p49, %p50
      %s52 = ssub.s32 %s18, %s25
      %p53 = scmp.eq.s32.totalorder %s52, 0
      %s55 = sadd.s32 %s54, 1
      %s56 = scalar_select %p53, %s54, %s55
      %p59 = pneg %p53
      %p60 = scmp.eq.s32.totalorder %s18, 1
      %p61 = por %p59, %p60
      %p62 = scmp.ne.s32.totalorder %s54, %s57
      %p63 = scmp.eq.s32.totalorder %s18, 0
      %p64 = por %p62, %p63
      %p65 = scmp.ne.s32.totalorder %s54, %s57
      %p66 = scmp.eq.s32.totalorder %s23, 1
      %p67 = por %p65, %p66
      %p68 = scmp.ne.s32.totalorder %s57, %s58
      %p69 = scmp.eq.s32.totalorder %s23, 0
      %p70 = por %p68, %p69
      %p71 = scmp.ne.s32.totalorder %s57, %s58
      %p72 = scmp.eq.s32.totalorder %s24, 1
      %p73 = por %p71, %p72
      %p75 = scmp.ne.s32.totalorder %s58, %s74
      %p76 = scmp.eq.s32.totalorder %s24, 0
      %p77 = por %p75, %p76
      %s78 = ssub.s32 %s18, %s25
      %p79 = scmp.eq.s32.totalorder %s78, 0
      %s81 = sadd.s32 %s80, 1
      %s82 = scalar_select %p79, %s80, %s81
      %p85 = pneg %p79
      %p86 = scmp.eq.s32.totalorder %s18, 1
      %p87 = por %p85, %p86
      %p88 = scmp.ne.s32.totalorder %s80, %s83
      %p89 = scmp.eq.s32.totalorder %s18, 0
      %p90 = por %p88, %p89
      %p91 = scmp.ne.s32.totalorder %s80, %s83
      %p92 = scmp.eq.s32.totalorder %s23, 1
      %p93 = por %p91, %p92
      %p94 = scmp.ne.s32.totalorder %s83, %s84
      %p95 = scmp.eq.s32.totalorder %s23, 0
      %p96 = por %p94, %p95
      %p97 = scmp.ne.s32.totalorder %s83, %s84
      %p98 = scmp.eq.s32.totalorder %s24, 1
      %p99 = por %p97, %p98
      %p101 = scmp.ne.s32.totalorder %s84, %s100
      %p102 = scmp.eq.s32.totalorder %s24, 0
      %p103 = por %p101, %p102
      %s104 = ssub.s32 %s18, %s25
      %p105 = scmp.eq.s32.totalorder %s104, 0
      %s107 = sadd.s32 %s106, 1
      %s108 = scalar_select %p105, %s106, %s107
      %p111 = pneg %p105
      %p112 = scmp.eq.s32.totalorder %s18, 1
      %p113 = por %p111, %p112
      %p114 = scmp.ne.s32.totalorder %s106, %s109
      %p115 = scmp.eq.s32.totalorder %s18, 0
      %p116 = por %p114, %p115
      %p117 = scmp.ne.s32.totalorder %s106, %s109
      %p118 = scmp.eq.s32.totalorder %s23, 1
      %p119 = por %p117, %p118
      %p120 = scmp.ne.s32.totalorder %s109, %s110
      %p121 = scmp.eq.s32.totalorder %s23, 0
      %p122 = por %p120, %p121
      %p123 = scmp.ne.s32.totalorder %s109, %s110
      %p124 = scmp.eq.s32.totalorder %s24, 1
      %p125 = por %p123, %p124
      %p127 = scmp.ne.s32.totalorder %s110, %s126
      %p128 = scmp.eq.s32.totalorder %s24, 0
      %p129 = por %p127, %p128
      %s131 = sadd.s32 %s130, 1
      %p134 = scmp.eq.s32.totalorder %s18, 1
      %p135 = scmp.ne.s32.totalorder %s130, %s132
      %p136 = scmp.eq.s32.totalorder %s18, 0
      %p137 = por %p135, %p136
      %p138 = scmp.ne.s32.totalorder %s130, %s132
      %p139 = scmp.eq.s32.totalorder %s23, 1
      %p140 = por %p138, %p139
      %p141 = scmp.ne.s32.totalorder %s132, %s133
      %p142 = scmp.eq.s32.totalorder %s23, 0
      %p143 = por %p141, %p142
      %p144 = scmp.ne.s32.totalorder %s132, %s133
      %p145 = scmp.eq.s32.totalorder %s24, 1
      %p146 = por %p144, %p145
      %p148 = scmp.ne.s32.totalorder %s133, %s147
      %p149 = scmp.eq.s32.totalorder %s24, 0
      %p150 = por %p148, %p149
      %s152 = sadd.s32 %s151, 1
      %p155 = scmp.eq.s32.totalorder %s18, 1
      %p156 = scmp.ne.s32.totalorder %s151, %s153
      %p157 = scmp.eq.s32.totalorder %s18, 0
      %p158 = por %p156, %p157
      %p159 = scmp.ne.s32.totalorder %s151, %s153
      %p160 = scmp.eq.s32.totalorder %s23, 1
      %p161 = por %p159, %p160
      %p162 = scmp.ne.s32.totalorder %s153, %s154
      %p163 = scmp.eq.s32.totalorder %s23, 0
      %p164 = por %p162, %p163
      %p165 = scmp.ne.s32.totalorder %s153, %s154
      %p166 = scmp.eq.s32.totalorder %s24, 1
      %p167 = por %p165, %p166
      %p169 = scmp.ne.s32.totalorder %s154, %s168
      %p170 = scmp.eq.s32.totalorder %s24, 0
      %p171 = por %p169, %p170
      %s173 = sadd.s32 %s172, 1
      %p176 = scmp.eq.s32.totalorder %s18, 1
      %p177 = scmp.ne.s32.totalorder %s172, %s174
      %p178 = scmp.eq.s32.totalorder %s18, 0
      %p179 = por %p177, %p178
      %p180 = scmp.ne.s32.totalorder %s172, %s174
      %p181 = scmp.eq.s32.totalorder %s23, 1
      %p182 = por %p180, %p181
      %p183 = scmp.ne.s32.totalorder %s174, %s175
      %p184 = scmp.eq.s32.totalorder %s23, 0
      %p185 = por %p183, %p184
      %p186 = scmp.ne.s32.totalorder %s174, %s175
      %p187 = scmp.eq.s32.totalorder %s24, 1
      %p188 = por %p186, %p187
      %p190 = scmp.ne.s32.totalorder %s175, %s189
      %p191 = scmp.eq.s32.totalorder %s24, 0
      %p192 = por %p190, %p191
      %s194 = sadd.s32 %s193, 1
      %p197 = scmp.eq.s32.totalorder %s18, 1
      %p198 = scmp.ne.s32.totalorder %s193, %s195
      %p199 = scmp.eq.s32.totalorder %s18, 0
      %p200 = por %p198, %p199
      %p201 = scmp.ne.s32.totalorder %s193, %s195
      %p202 = scmp.eq.s32.totalorder %s23, 1
      %p203 = por %p201, %p202
      %p204 = scmp.ne.s32.totalorder %s195, %s196
      %p205 = scmp.eq.s32.totalorder %s23, 0
      %p206 = por %p204, %p205
      %p207 = scmp.ne.s32.totalorder %s195, %s196
      %p208 = scmp.eq.s32.totalorder %s24, 1
      %p209 = por %p207, %p208
      %p211 = scmp.ne.s32.totalorder %s196, %s210
      %p212 = scmp.eq.s32.totalorder %s24, 0
      %p213 = por %p211, %p212
      %s215 = sadd.s32 %s214, 1
      %p218 = scmp.eq.s32.totalorder %s18, 1
      %p219 = scmp.ne.s32.totalorder %s214, %s216
      %p220 = scmp.eq.s32.totalorder %s18, 0
      %p221 = por %p219, %p220
      %p222 = scmp.ne.s32.totalorder %s214, %s216
      %p223 = scmp.eq.s32.totalorder %s23, 1
      %p224 = por %p222, %p223
      %p225 = scmp.ne.s32.totalorder %s216, %s217
      %p226 = scmp.eq.s32.totalorder %s23, 0
      %p227 = por %p225, %p226
      %p228 = scmp.ne.s32.totalorder %s216, %s217
      %p229 = scmp.eq.s32.totalorder %s24, 1
      %p230 = por %p228, %p229
      %p232 = scmp.ne.s32.totalorder %s217, %s231
      %p233 = scmp.eq.s32.totalorder %s24, 0
      %p234 = por %p232, %p233
      %s235 = ssub.s32 %s18, %s25
      %p236 = scmp.eq.s32.totalorder %s235, 0
      %s238 = sadd.s32 %s237, 1
      %s239 = scalar_select %p236, %s237, %s238
      %p242 = pneg %p236
      %p243 = scmp.eq.s32.totalorder %s18, 1
      %p244 = por %p242, %p243
      %p245 = scmp.ne.s32.totalorder %s237, %s240
      %p246 = scmp.eq.s32.totalorder %s18, 0
      %p247 = por %p245, %p246
      %p248 = scmp.ne.s32.totalorder %s237, %s240
      %p249 = scmp.eq.s32.totalorder %s23, 1
      %p250 = por %p248, %p249
      %p251 = scmp.ne.s32.totalorder %s240, %s241
      %p252 = scmp.eq.s32.totalorder %s23, 0
      %p253 = por %p251, %p252
      %p254 = scmp.ne.s32.totalorder %s240, %s241
      %p255 = scmp.eq.s32.totalorder %s24, 1
      %p256 = por %p254, %p255
      %p258 = scmp.ne.s32.totalorder %s241, %s257
      %p259 = scmp.eq.s32.totalorder %s24, 0
      %p260 = por %p258, %p259
      %p261 = scmp.le.s32.totalorder 1, %s18
      %p262 = scmp.lt.s32.totalorder %s18, 3
      %p263 = pnand %p261, %p262
      %p264 = pneg %p263
      // Predicated region
      $region9: #{tpu_custom_call.1} parent=5 // pred_check
        _
      $region10: #{tpu_custom_call.1} parent=5 // pred_check_branch
        %266 = sbr.rel (%p263) target = $region12
      $region11: #{tpu_custom_call.1} parent=5 // pred_region
        %s267 = ssub.s32 %s18, 1
        // Predicated region
        $region13: #{tpu_custom_call.1} parent=11 // pred_check
          %p268 = pneg %p143
        $region14: #{tpu_custom_call.1} parent=11 // pred_check_branch
          %270 = sbr.rel (%p268) target = $region16
        $region15: #{tpu_custom_call.1} parent=11 // pred_region
          _
        $region16: #{tpu_custom_call.1} parent=11 // pred_fallthru
          _
        // Predicated region
        $region17: #{tpu_custom_call.1} parent=11 // pred_check
          %p271 = pneg %p164
        $region18: #{tpu_custom_call.1} parent=11 // pred_check_branch
          %273 = sbr.rel (%p271) target = $region20
        $region19: #{tpu_custom_call.1} parent=11 // pred_region
          _
        $region20: #{tpu_custom_call.1} parent=11 // pred_fallthru
          _
        // Predicated region
        $region21: #{tpu_custom_call.1} parent=11 // pred_check
          %p274 = pneg %p185
        $region22: #{tpu_custom_call.1} parent=11 // pred_check_branch
          %276 = sbr.rel (%p274) target = $region24
        $region23: #{tpu_custom_call.1} parent=11 // pred_region
          _
        $region24: #{tpu_custom_call.1} parent=11 // pred_fallthru
          _
        // Predicated region
        $region25: #{tpu_custom_call.1} parent=11 // pred_check
          %p277 = pneg %p206
        $region26: #{tpu_custom_call.1} parent=11 // pred_check_branch
          %279 = sbr.rel (%p277) target = $region28
        $region27: #{tpu_custom_call.1} parent=11 // pred_region
          _
        $region28: #{tpu_custom_call.1} parent=11 // pred_fallthru
          _
        // Predicated region
        $region29: #{tpu_custom_call.1} parent=11 // pred_check
          %p280 = pneg %p227
        $region30: #{tpu_custom_call.1} parent=11 // pred_check_branch
          %282 = sbr.rel (%p280) target = $region32
        $region31: #{tpu_custom_call.1} parent=11 // pred_region
          _
        $region32: #{tpu_custom_call.1} parent=11 // pred_fallthru
          _
      $region12: #{tpu_custom_call.1} parent=5 // pred_fallthru
        _
      %p283 = scmp.lt.s32.totalorder %s18, 2
      // Predicated region
      $region33: #{tpu_custom_call.1} parent=5 // pred_check
        %p284 = pneg %p283
      $region34: #{tpu_custom_call.1} parent=5 // pred_check_branch
        %286 = sbr.rel (%p284) target = $region36
      $region35: #{tpu_custom_call.1} parent=5 // pred_region
        // Predicated region
        $region37: #{tpu_custom_call.1} parent=35 // pred_check
          %p287 = pneg %p38
        $region38: #{tpu_custom_call.1} parent=35 // pred_check_branch
          %289 = sbr.rel (%p287) target = $region40
        $region39: #{tpu_custom_call.1} parent=35 // pred_region
          %s290 = smul.u32 8, %s18
          %p291 = scmp.lt.s32.totalorder %s290, 15
          %s292 = scalar_select %p291, %s290, 15
          %s293 = smul.addr %s292, 8
          %s294 = scalar_lea.vmem %s0, %s293
          %s295 = smul.u32 8, %s18
        $region40: #{tpu_custom_call.1} parent=35 // pred_fallthru
          _
        // Predicated region
        $region41: #{tpu_custom_call.1} parent=35 // pred_check
          %p296 = pneg %p64
        $region42: #{tpu_custom_call.1} parent=35 // pred_check_branch
          %298 = sbr.rel (%p296) target = $region44
        $region43: #{tpu_custom_call.1} parent=35 // pred_region
          %s299 = smul.u32 8, %s18
          %p300 = scmp.lt.s32.totalorder %s299, 15
          %s301 = scalar_select %p300, %s299, 15
          %s302 = smul.addr %s301, 8
          %s303 = scalar_lea.vmem %s1, %s302
          %s304 = smul.u32 8, %s18
        $region44: #{tpu_custom_call.1} parent=35 // pred_fallthru
          _
        // Predicated region
        $region45: #{tpu_custom_call.1} parent=35 // pred_check
          %p305 = pneg %p90
        $region46: #{tpu_custom_call.1} parent=35 // pred_check_branch
          %307 = sbr.rel (%p305) target = $region48
        $region47: #{tpu_custom_call.1} parent=35 // pred_region
          %s308 = smul.u32 8, %s18
          %p309 = scmp.lt.s32.totalorder %s308, 15
          %s310 = scalar_select %p309, %s308, 15
          %s311 = smul.addr %s310, 8
          %s312 = scalar_lea.vmem %s2, %s311
          %s313 = smul.u32 8, %s18
        $region48: #{tpu_custom_call.1} parent=35 // pred_fallthru
          _
        // Predicated region
        $region49: #{tpu_custom_call.1} parent=35 // pred_check
          %p314 = pneg %p116
        $region50: #{tpu_custom_call.1} parent=35 // pred_check_branch
          %316 = sbr.rel (%p314) target = $region52
        $region51: #{tpu_custom_call.1} parent=35 // pred_region
          %s317 = smul.u32 8, %s18
          %p318 = scmp.lt.s32.totalorder %s317, 15
          %s319 = scalar_select %p318, %s317, 15
          %s320 = scalar_lea.vmem %s3, %s319
          %s321 = smul.u32 8, %s18
        $region52: #{tpu_custom_call.1} parent=35 // pred_fallthru
          _
      $region36: #{tpu_custom_call.1} parent=5 // pred_fallthru
        _
      %p322 = scmp.le.s32.totalorder 1, %s18
      %p323 = scmp.lt.s32.totalorder %s18, 3
      %p324 = pnand %p322, %p323
      %p325 = pneg %p324
      // Predicated region
      $region53: #{tpu_custom_call.1} parent=5 // pred_check
        _
      $region54: #{tpu_custom_call.1} parent=5 // pred_check_branch
        %327 = sbr.rel (%p324) target = $region56
      $region55: #{tpu_custom_call.1} parent=5 // pred_region
        %s328 = ssub.s32 %s18, 1
        %s329 = smul.u32 8, %s23
        %p330 = scmp.lt.s32.totalorder %s329, 15
        %s331 = scalar_select %p330, %s329, 15
        %s332 = smul.addr %s331, 8
        %s333 = scalar_lea.vmem %s0, %s332
        %p334 = pneg %p44
        %p335 = pneg %p41
        %s336 = smul.u32 8, %s23
        %p337 = scmp.lt.s32.totalorder %s336, 15
        %s338 = scalar_select %p337, %s336, 15
        %s339 = smul.addr %s338, 8
        %s340 = scalar_lea.vmem %s1, %s339
        %p341 = pneg %p70
        %p342 = pneg %p67
        %s343 = smul.u32 8, %s23
        %p344 = scmp.lt.s32.totalorder %s343, 15
        %s345 = scalar_select %p344, %s343, 15
        %s346 = smul.addr %s345, 8
        %s347 = scalar_lea.vmem %s2, %s346
        %p348 = pneg %p96
        %p349 = pneg %p93
        %s350 = smul.u32 8, %s23
        %p351 = scmp.lt.s32.totalorder %s350, 15
        %s352 = scalar_select %p351, %s350, 15
        %s353 = scalar_lea.vmem %s3, %s352
        %p354 = pneg %p122
        %p355 = pneg %p119
        %p356 = pneg %p143
        %p357 = pneg %p140
        %p358 = pneg %p164
        %p359 = pneg %p161
        %p360 = pneg %p185
        %p361 = pneg %p182
        %p362 = pneg %p206
        %p363 = pneg %p203
        %p364 = pneg %p227
        %p365 = pneg %p224
        %p366 = pneg %p253
        %p367 = pneg %p250
        %s368 = sand.u32 %s240, 1
        %s369 = scalar_lea.sflag [#allocation3], %s368
        %s370 = sand.u32 %s240, 1
        %s371 = smul.addr %s370, 8
        %s372 = scalar_lea.vmem [#allocation2], %s371
        %s373 = smul.u32 8, %s23
        %p374 = scmp.lt.s32.totalorder %s373, 15
        %s375 = scalar_select %p374, %s373, 15
        %s376 = smul.addr %s375, 8
        %s377 = scalar_lea.vmem %s0, %s376
        %s378 = smul.u32 8, %s23
        %s379 = smul.u32 8, %s23
        %p380 = scmp.lt.s32.totalorder %s379, 15
        %s381 = scalar_select %p380, %s379, 15
        %s382 = smul.addr %s381, 8
        %s383 = scalar_lea.vmem %s1, %s382
        %s384 = smul.u32 8, %s23
        %s385 = smul.u32 8, %s23
        %p386 = scmp.lt.s32.totalorder %s385, 15
        %s387 = scalar_select %p386, %s385, 15
        %s388 = smul.addr %s387, 8
        %s389 = scalar_lea.vmem %s2, %s388
        %s390 = smul.u32 8, %s23
        %s391 = smul.u32 8, %s23
        %p392 = scmp.lt.s32.totalorder %s391, 15
        %s393 = scalar_select %p392, %s391, 15
        %s394 = scalar_lea.vmem %s3, %s393
        %s395 = smul.u32 8, %s23
        %v396 = vld [vmem:[%s377] sm:$0xff]
        %v397 = vld [vmem:[%s377 + $0x8] sm:$0xff]
        %v398 = vld [vmem:[%s377 + $0x10] sm:$0xff]
        %v399 = vld [vmem:[%s377 + $0x18] sm:$0xff]
        %v400 = vld [vmem:[%s377 + $0x20] sm:$0xff]
        %v401 = vld [vmem:[%s377 + $0x28] sm:$0xff]
        %v402 = vld [vmem:[%s377 + $0x30] sm:$0xff]
        %v403 = vld [vmem:[%s377 + $0x38] sm:$0xff]
        %v404 = vld [vmem:[%s389] sm:$0xff]
        %v405 = vld [vmem:[%s389 + $0x8] sm:$0xff]
        %v406 = vld [vmem:[%s389 + $0x10] sm:$0xff]
        %v407 = vld [vmem:[%s389 + $0x18] sm:$0xff]
        %v408 = vld [vmem:[%s389 + $0x20] sm:$0xff]
        %v409 = vld [vmem:[%s389 + $0x28] sm:$0xff]
        %v410 = vld [vmem:[%s389 + $0x30] sm:$0xff]
        %v411 = vld [vmem:[%s389 + $0x38] sm:$0xff]
        %v412 = vlaneseq
        %v413 = vshrl.u32 %v412, 7
        %v414 = vlaneseq
        %v415 = vand.u32 %v414, 127
        %vm416 = vcmp.eq.s32.totalorder %v413, %v415
        %v417 = vsel %vm416, 1, 0
        %v418 = vcvt.s32.f32 %v417
        %v419 = vld [vmem:[%s394] sm:$0x1]
        %v420 = vld [vmem:[%s394 + $0x1] sm:$0x1]
        %v421 = vld [vmem:[%s394 + $0x2] sm:$0x1]
        %v422 = vld [vmem:[%s394 + $0x3] sm:$0x1]
        %v423 = vld [vmem:[%s394 + $0x4] sm:$0x1]
        %v424 = vld [vmem:[%s394 + $0x5] sm:$0x1]
        %v425 = vld [vmem:[%s394 + $0x6] sm:$0x1]
        %v426 = vld [vmem:[%s394 + $0x7] sm:$0x1]
        %428 = vset.pattern.permute.xlu0 0
        %429 = vperm.xlu0 %428, %v404
        %v430 = vpop.permute.xlu0 %429
        %433 = vset.pattern.permute.xlu0 0
        %434 = vperm.xlu0 %433, %v405
        %v435 = vpop.permute.xlu0 %434
        %438 = vset.pattern.permute.xlu0 0
        %439 = vperm.xlu0 %438, %v406
        %v440 = vpop.permute.xlu0 %439
        %443 = vset.pattern.permute.xlu0 0
        %444 = vperm.xlu0 %443, %v407
        %v445 = vpop.permute.xlu0 %444
        %448 = vset.pattern.permute.xlu0 0
        %449 = vperm.xlu0 %448, %v408
        %v450 = vpop.permute.xlu0 %449
        %453 = vset.pattern.permute.xlu0 0
        %454 = vperm.xlu0 %453, %v409
        %v455 = vpop.permute.xlu0 %454
        %458 = vset.pattern.permute.xlu0 0
        %459 = vperm.xlu0 %458, %v410
        %v460 = vpop.permute.xlu0 %459
        %463 = vset.pattern.permute.xlu0 0
        %464 = vperm.xlu0 %463, %v411
        %v465 = vpop.permute.xlu0 %464
        %v475 = vlaneseq
        %v476 = vshrl.u32 %v475, 7
        %v477 = vsub.s32 0, %v476
        %v478 = vrot.slane %v419, %v477
        %v479 = vlaneseq
        %v480 = vshrl.u32 %v479, 7
        %v481 = vsub.s32 0, %v480
        %v482 = vrot.slane %v420, %v481
        %v483 = vlaneseq
        %v484 = vshrl.u32 %v483, 7
        %v485 = vsub.s32 0, %v484
        %v486 = vrot.slane %v421, %v485
        %v487 = vlaneseq
        %v488 = vshrl.u32 %v487, 7
        %v489 = vsub.s32 0, %v488
        %v490 = vrot.slane %v422, %v489
        %v491 = vlaneseq
        %v492 = vshrl.u32 %v491, 7
        %v493 = vsub.s32 0, %v492
        %v494 = vrot.slane %v423, %v493
        %v495 = vlaneseq
        %v496 = vshrl.u32 %v495, 7
        %v497 = vsub.s32 0, %v496
        %v498 = vrot.slane %v424, %v497
        %v499 = vlaneseq
        %v500 = vshrl.u32 %v499, 7
        %v501 = vsub.s32 0, %v500
        %v502 = vrot.slane %v425, %v501
        %v503 = vlaneseq
        %v504 = vshrl.u32 %v503, 7
        %v505 = vsub.s32 0, %v504
        %v506 = vrot.slane %v426, %v505
        %v515 = vmul.f32 %v430, %v478
        %v516 = vmul.f32 %v435, %v482
        %v517 = vmul.f32 %v440, %v486
        %v518 = vmul.f32 %v445, %v490
        %v519 = vmul.f32 %v450, %v494
        %v520 = vmul.f32 %v455, %v498
        %v521 = vmul.f32 %v460, %v502
        %v522 = vmul.f32 %v465, %v506
        %v523 = vsub.f32 %v515, %v418
        %v524 = vsub.f32 %v516, %v418
        %v525 = vsub.f32 %v517, %v418
        %v526 = vsub.f32 %v518, %v418
        %v527 = vsub.f32 %v519, %v418
        %v528 = vsub.f32 %v520, %v418
        %v529 = vsub.f32 %v521, %v418
        %v530 = vsub.f32 %v522, %v418
        %v531 = vmax.f32 %v523, 0.0
        %v532 = vmax.f32 %v524, 0.0
        %v533 = vmax.f32 %v525, 0.0
        %v534 = vmax.f32 %v526, 0.0
        %v535 = vmax.f32 %v527, 0.0
        %v536 = vmax.f32 %v528, 0.0
        %v537 = vmax.f32 %v529, 0.0
        %v538 = vmax.f32 %v530, 0.0
        %v539 = vmin.f32 %v531, 1.0
        %v540 = vmin.f32 %v532, 1.0
        %v541 = vmin.f32 %v533, 1.0
        %v542 = vmin.f32 %v534, 1.0
        %v543 = vmin.f32 %v535, 1.0
        %v544 = vmin.f32 %v536, 1.0
        %v545 = vmin.f32 %v537, 1.0
        %v546 = vmin.f32 %v538, 1.0
        %v547 = vld [vmem:[%s383] sm:$0xff]
        %v548 = vld [vmem:[%s383 + $0x8] sm:$0xff]
        %v549 = vld [vmem:[%s383 + $0x10] sm:$0xff]
        %v550 = vld [vmem:[%s383 + $0x18] sm:$0xff]
        %v551 = vld [vmem:[%s383 + $0x20] sm:$0xff]
        %v552 = vld [vmem:[%s383 + $0x28] sm:$0xff]
        %v553 = vld [vmem:[%s383 + $0x30] sm:$0xff]
        %v554 = vld [vmem:[%s383 + $0x38] sm:$0xff]
        %vm555 = vcmp.eq.s32.totalorder %v547, 0
        %vm556 = vcmp.eq.s32.totalorder %v548, 0
        %vm557 = vcmp.eq.s32.totalorder %v549, 0
        %vm558 = vcmp.eq.s32.totalorder %v550, 0
        %vm559 = vcmp.eq.s32.totalorder %v551, 0
        %vm560 = vcmp.eq.s32.totalorder %v552, 0
        %vm561 = vcmp.eq.s32.totalorder %v553, 0
        %vm562 = vcmp.eq.s32.totalorder %v554, 0
        %v563 = vsel %vm555, 1, 0
        %v564 = vsel %vm556, 1, 0
        %v565 = vsel %vm557, 1, 0
        %v566 = vsel %vm558, 1, 0
        %v567 = vsel %vm559, 1, 0
        %v568 = vsel %vm560, 1, 0
        %v569 = vsel %vm561, 1, 0
        %v570 = vsel %vm562, 1, 0
        %v571 = vcvt.s32.f32 %v563
        %v572 = vcvt.s32.f32 %v564
        %v573 = vcvt.s32.f32 %v565
        %v574 = vcvt.s32.f32 %v566
        %v575 = vcvt.s32.f32 %v567
        %v576 = vcvt.s32.f32 %v568
        %v577 = vcvt.s32.f32 %v569
        %v578 = vcvt.s32.f32 %v570
        %v579 = vmul.f32 %v571, %v539
        %v580 = vmul.f32 %v572, %v540
        %v581 = vmul.f32 %v573, %v541
        %v582 = vmul.f32 %v574, %v542
        %v583 = vmul.f32 %v575, %v543
        %v584 = vmul.f32 %v576, %v544
        %v585 = vmul.f32 %v577, %v545
        %v586 = vmul.f32 %v578, %v546
        %vm587 = vcmp.eq.s32.totalorder %v547, 1
        %vm588 = vcmp.eq.s32.totalorder %v548, 1
        %vm589 = vcmp.eq.s32.totalorder %v549, 1
        %vm590 = vcmp.eq.s32.totalorder %v550, 1
        %vm591 = vcmp.eq.s32.totalorder %v551, 1
        %vm592 = vcmp.eq.s32.totalorder %v552, 1
        %vm593 = vcmp.eq.s32.totalorder %v553, 1
        %vm594 = vcmp.eq.s32.totalorder %v554, 1
        %v595 = vsel %vm587, 1, 0
        %v596 = vsel %vm588, 1, 0
        %v597 = vsel %vm589, 1, 0
        %v598 = vsel %vm590, 1, 0
        %v599 = vsel %vm591, 1, 0
        %v600 = vsel %vm592, 1, 0
        %v601 = vsel %vm593, 1, 0
        %v602 = vsel %vm594, 1, 0
        %v603 = vcvt.s32.f32 %v595
        %v604 = vcvt.s32.f32 %v596
        %v605 = vcvt.s32.f32 %v597
        %v606 = vcvt.s32.f32 %v598
        %v607 = vcvt.s32.f32 %v599
        %v608 = vcvt.s32.f32 %v600
        %v609 = vcvt.s32.f32 %v601
        %v610 = vcvt.s32.f32 %v602
        %v611 = vmul.f32 %v603, %v539
        %v612 = vmul.f32 %v604, %v540
        %v613 = vmul.f32 %v605, %v541
        %v614 = vmul.f32 %v606, %v542
        %v615 = vmul.f32 %v607, %v543
        %v616 = vmul.f32 %v608, %v544
        %v617 = vmul.f32 %v609, %v545
        %v618 = vmul.f32 %v610, %v546
        %vm619 = vcmp.eq.s32.totalorder %v547, 2
        %vm620 = vcmp.eq.s32.totalorder %v548, 2
        %vm621 = vcmp.eq.s32.totalorder %v549, 2
        %vm622 = vcmp.eq.s32.totalorder %v550, 2
        %vm623 = vcmp.eq.s32.totalorder %v551, 2
        %vm624 = vcmp.eq.s32.totalorder %v552, 2
        %vm625 = vcmp.eq.s32.totalorder %v553, 2
        %vm626 = vcmp.eq.s32.totalorder %v554, 2
        %v627 = vsel %vm619, 1, 0
        %v628 = vsel %vm620, 1, 0
        %v629 = vsel %vm621, 1, 0
        %v630 = vsel %vm622, 1, 0
        %v631 = vsel %vm623, 1, 0
        %v632 = vsel %vm624, 1, 0
        %v633 = vsel %vm625, 1, 0
        %v634 = vsel %vm626, 1, 0
        %v635 = vcvt.s32.f32 %v627
        %v636 = vcvt.s32.f32 %v628
        %v637 = vcvt.s32.f32 %v629
        %v638 = vcvt.s32.f32 %v630
        %v639 = vcvt.s32.f32 %v631
        %v640 = vcvt.s32.f32 %v632
        %v641 = vcvt.s32.f32 %v633
        %v642 = vcvt.s32.f32 %v634
        %v643 = vmul.f32 %v635, %v539
        %v644 = vmul.f32 %v636, %v540
        %v645 = vmul.f32 %v637, %v541
        %v646 = vmul.f32 %v638, %v542
        %v647 = vmul.f32 %v639, %v543
        %v648 = vmul.f32 %v640, %v544
        %v649 = vmul.f32 %v641, %v545
        %v650 = vmul.f32 %v642, %v546
        %vm651 = vcmp.eq.s32.totalorder %v547, 3
        %vm652 = vcmp.eq.s32.totalorder %v548, 3
        %vm653 = vcmp.eq.s32.totalorder %v549, 3
        %vm654 = vcmp.eq.s32.totalorder %v550, 3
        %vm655 = vcmp.eq.s32.totalorder %v551, 3
        %vm656 = vcmp.eq.s32.totalorder %v552, 3
        %vm657 = vcmp.eq.s32.totalorder %v553, 3
        %vm658 = vcmp.eq.s32.totalorder %v554, 3
        %v659 = vsel %vm651, 1, 0
        %v660 = vsel %vm652, 1, 0
        %v661 = vsel %vm653, 1, 0
        %v662 = vsel %vm654, 1, 0
        %v663 = vsel %vm655, 1, 0
        %v664 = vsel %vm656, 1, 0
        %v665 = vsel %vm657, 1, 0
        %v666 = vsel %vm658, 1, 0
        %v667 = vcvt.s32.f32 %v659
        %v668 = vcvt.s32.f32 %v660
        %v669 = vcvt.s32.f32 %v661
        %v670 = vcvt.s32.f32 %v662
        %v671 = vcvt.s32.f32 %v663
        %v672 = vcvt.s32.f32 %v664
        %v673 = vcvt.s32.f32 %v665
        %v674 = vcvt.s32.f32 %v666
        %v675 = vmul.f32 %v667, %v539
        %v676 = vmul.f32 %v668, %v540
        %v677 = vmul.f32 %v669, %v541
        %v678 = vmul.f32 %v670, %v542
        %v679 = vmul.f32 %v671, %v543
        %v680 = vmul.f32 %v672, %v544
        %v681 = vmul.f32 %v673, %v545
        %v682 = vmul.f32 %v674, %v546
        %v683 = vld [vmem:[%s4] sm:$0xff]
        %v684 = vld [vmem:[%s4 + $0x8] sm:$0xff]
        %v685 = vld [vmem:[%s4 + $0x10] sm:$0xff]
        %v686 = vld [vmem:[%s4 + $0x18] sm:$0xff]
        %v687 = vld [vmem:[%s5] sm:$0x1]
        %v689 = vlaneseq
        %v690 = vshrl.u32 %v689, 7
        %v691 = vsub.s32 0, %v690
        %v692 = vrot.slane %v687, %v691
        %vm694 = vcmask 261120
        %v696 = vsel %vm694, %v396, 0
        %v699 = vsel %vm694, %v397, 0
        %v702 = vsel %vm694, %v398, 0
        %v705 = vsel %vm694, %v399, 0
        %v708 = vsel %vm694, %v400, 0
        %v711 = vsel %vm694, %v401, 0
        %v714 = vsel %vm694, %v402, 0
        %v717 = vsel %vm694, %v403, 0
        %719 = vmatprep.subr.mxu0 0.0
        %720 = vmatpush1.msra.mxu0 %v683
        %721 = vmatprep.subr.mxu0 0.0
        %722 = vmatpush1.msra.mxu0 %v684
        %723 = vmatprep.subr.mxu0 0.0
        %724 = vmatpush1.msra.mxu0 %v685
        %725 = vmatprep.subr.mxu0 0.0
        %726 = vmatpush1.msra.mxu0 %v686
        %727 = vmatprep.subr.mxu0 0.0
        %728 = vmatpush1.msra.mxu0 0.0
        %729 = vmatprep.subr.mxu0 0.0
        %730 = vmatpush1.msra.mxu0 0.0
        %731 = vmatprep.subr.mxu0 0.0
        %732 = vmatpush1.msra.mxu0 0.0
        %733 = vmatprep.subr.mxu0 0.0
        %734 = vmatpush1.msra.mxu0 0.0
        %735 = vmatprep.subr.mxu0 0.0
        %736 = vmatpush1.msra.mxu0 0.0
        %737 = vmatprep.subr.mxu0 0.0
        %738 = vmatpush1.msra.mxu0 0.0
        %739 = vmatprep.subr.mxu0 0.0
        %740 = vmatpush1.msra.mxu0 0.0
        %741 = vmatprep.subr.mxu0 0.0
        %742 = vmatpush1.msra.mxu0 0.0
        %743 = vmatprep.subr.mxu0 0.0
        %744 = vmatpush1.msra.mxu0 0.0
        %745 = vmatprep.subr.mxu0 0.0
        %746 = vmatpush1.msra.mxu0 0.0
        %747 = vmatprep.subr.mxu0 0.0
        %748 = vmatpush1.msra.mxu0 0.0
        %749 = vmatprep.subr.mxu0 0.0
        %750 = vmatpush1.msra.mxu0 0.0
        %751 = vmatprep.subr.mxu0 0.0
        %752 = vmatpush1.msra.mxu0 0.0
        %753 = vmatprep.subr.mxu0 0.0
        %754 = vmatpush1.msra.mxu0 0.0
        %755 = vmatprep.subr.mxu0 0.0
        %756 = vmatpush1.msra.mxu0 0.0
        %757 = vmatprep.subr.mxu0 0.0
        %758 = vmatpush1.msra.mxu0 0.0
        %759 = vmatprep.subr.mxu0 0.0
        %760 = vmatpush1.msra.mxu0 0.0
        %761 = vmatprep.subr.mxu0 0.0
        %762 = vmatpush1.msra.mxu0 0.0
        %763 = vmatprep.subr.mxu0 0.0
        %764 = vmatpush1.msra.mxu0 0.0
        %765 = vmatprep.subr.mxu0 0.0
        %766 = vmatpush1.msra.mxu0 0.0
        %767 = vmatprep.subr.mxu0 0.0
        %768 = vmatpush1.msra.mxu0 0.0
        %769 = vmatprep.subr.mxu0 0.0
        %770 = vmatpush1.msra.mxu0 0.0
        %771 = vmatprep.subr.mxu0 0.0
        %772 = vmatpush1.msra.mxu0 0.0
        %773 = vmatprep.subr.mxu0 0.0
        %774 = vmatpush1.msra.mxu0 0.0
        %775 = vmatprep.subr.mxu0 0.0
        %776 = vmatpush1.msra.mxu0 0.0
        %777 = vmatprep.subr.mxu0 0.0
        %778 = vmatpush1.msra.mxu0 0.0
        %779 = vmatprep.subr.mxu0 0.0
        %780 = vmatpush1.msra.mxu0 0.0
        %781 = vmatprep.subr.mxu0 0.0
        %782 = vmatpush1.msra.mxu0 0.0
        %783 = vmatprep.mubr.f32.mxu0 0.0
        %784 = vmatmul.mubr.f32.gmra.mrb[0].mxu0 %v696
        %v785 = vpop.f32.mrb[0].mxu0
        %v786 = vadd.f32 %v692, %v785
        %v787 = vpop.f32.mrb[0].mxu0
        %788 = vmatprep.mubr.f32.mxu0 0.0
        %789 = vmatmul.mubr.f32.gmra.mrb[0].mxu0 %v699
        %v790 = vpop.f32.mrb[0].mxu0
        %v791 = vadd.f32 %v692, %v790
        %v792 = vpop.f32.mrb[0].mxu0
        %793 = vmatprep.mubr.f32.mxu0 0.0
        %794 = vmatmul.mubr.f32.gmra.mrb[0].mxu0 %v702
        %v795 = vpop.f32.mrb[0].mxu0
        %v796 = vadd.f32 %v692, %v795
        %v797 = vpop.f32.mrb[0].mxu0
        %798 = vmatprep.mubr.f32.mxu0 0.0
        %799 = vmatmul.mubr.f32.gmra.mrb[0].mxu0 %v705
        %v800 = vpop.f32.mrb[0].mxu0
        %v801 = vadd.f32 %v692, %v800
        %v802 = vpop.f32.mrb[0].mxu0
        %803 = vmatprep.mubr.f32.mxu0 0.0
        %804 = vmatmul.mubr.f32.gmra.mrb[0].mxu0 %v708
        %v805 = vpop.f32.mrb[0].mxu0
        %v806 = vadd.f32 %v692, %v805
        %v807 = vpop.f32.mrb[0].mxu0
        %808 = vmatprep.mubr.f32.mxu0 0.0
        %809 = vmatmul.mubr.f32.gmra.mrb[0].mxu0 %v711
        %v810 = vpop.f32.mrb[0].mxu0
        %v811 = vadd.f32 %v692, %v810
        %v812 = vpop.f32.mrb[0].mxu0
        %813 = vmatprep.mubr.f32.mxu0 0.0
        %814 = vmatmul.mubr.f32.gmra.mrb[0].mxu0 %v714
        %v815 = vpop.f32.mrb[0].mxu0
        %v816 = vadd.f32 %v692, %v815
        %v817 = vpop.f32.mrb[0].mxu0
        %818 = vmatprep.mubr.f32.mxu0 0.0
        %819 = vmatmul.mubr.f32.gmra.mrb[0].mxu0 %v717
        %v820 = vpop.f32.mrb[0].mxu0
        %v821 = vadd.f32 %v692, %v820
        %v822 = vpop.f32.mrb[0].mxu0
        %823 = vdwg.mxu0
        %v824 = vld [vmem:[%s6] sm:$0xff]
        %v825 = vld [vmem:[%s6 + $0x8] sm:$0xff]
        %v826 = vld [vmem:[%s6 + $0x10] sm:$0xff]
        %v827 = vld [vmem:[%s6 + $0x18] sm:$0xff]
        %828 = vmatprep.subr.mxu0 0.0
        %829 = vmatpush1.msra.mxu0 %v824
        %830 = vmatprep.subr.mxu0 0.0
        %831 = vmatpush1.msra.mxu0 %v825
        %832 = vmatprep.subr.mxu0 0.0
        %833 = vmatpush1.msra.mxu0 %v826
        %834 = vmatprep.subr.mxu0 0.0
        %835 = vmatpush1.msra.mxu0 %v827
        %836 = vmatprep.subr.mxu0 0.0
        %837 = vmatpush1.msra.mxu0 0.0
        %838 = vmatprep.subr.mxu0 0.0
        %839 = vmatpush1.msra.mxu0 0.0
        %840 = vmatprep.subr.mxu0 0.0
        %841 = vmatpush1.msra.mxu0 0.0
        %842 = vmatprep.subr.mxu0 0.0
        %843 = vmatpush1.msra.mxu0 0.0
        %844 = vmatprep.subr.mxu0 0.0
        %845 = vmatpush1.msra.mxu0 0.0
        %846 = vmatprep.subr.mxu0 0.0
        %847 = vmatpush1.msra.mxu0 0.0
        %848 = vmatprep.subr.mxu0 0.0
        %849 = vmatpush1.msra.mxu0 0.0
        %850 = vmatprep.subr.mxu0 0.0
        %851 = vmatpush1.msra.mxu0 0.0
        %852 = vmatprep.subr.mxu0 0.0
        %853 = vmatpush1.msra.mxu0 0.0
        %854 = vmatprep.subr.mxu0 0.0
        %855 = vmatpush1.msra.mxu0 0.0
        %856 = vmatprep.subr.mxu0 0.0
        %857 = vmatpush1.msra.mxu0 0.0
        %858 = vmatprep.subr.mxu0 0.0
        %859 = vmatpush1.msra.mxu0 0.0
        %860 = vmatprep.subr.mxu0 0.0
        %861 = vmatpush1.msra.mxu0 0.0
        %862 = vmatprep.subr.mxu0 0.0
        %863 = vmatpush1.msra.mxu0 0.0
        %864 = vmatprep.subr.mxu0 0.0
        %865 = vmatpush1.msra.mxu0 0.0
        %866 = vmatprep.subr.mxu0 0.0
        %867 = vmatpush1.msra.mxu0 0.0
        %868 = vmatprep.subr.mxu0 0.0
        %869 = vmatpush1.msra.mxu0 0.0
        %870 = vmatprep.subr.mxu0 0.0
        %871 = vmatpush1.msra.mxu0 0.0
        %872 = vmatprep.subr.mxu0 0.0
        %873 = vmatpush1.msra.mxu0 0.0
        %874 = vmatprep.subr.mxu0 0.0
        %875 = vmatpush1.msra.mxu0 0.0
        %876 = vmatprep.subr.mxu0 0.0
        %877 = vmatpush1.msra.mxu0 0.0
        %878 = vmatprep.subr.mxu0 0.0
        %879 = vmatpush1.msra.mxu0 0.0
        %880 = vmatprep.subr.mxu0 0.0
        %881 = vmatpush1.msra.mxu0 0.0
        %882 = vmatprep.subr.mxu0 0.0
        %883 = vmatpush1.msra.mxu0 0.0
        %884 = vmatprep.subr.mxu0 0.0
        %885 = vmatpush1.msra.mxu0 0.0
        %886 = vmatprep.subr.mxu0 0.0
        %887 = vmatpush1.msra.mxu0 0.0
        %888 = vmatprep.subr.mxu0 0.0
        %889 = vmatpush1.msra.mxu0 0.0
        %890 = vmatprep.subr.mxu0 0.0
        %891 = vmatpush1.msra.mxu0 0.0
        %892 = vmatprep.mubr.f32.mxu0 0.0
        %893 = vmatmul.mubr.f32.gmra.mrb[0].mxu0 %v696
        %v894 = vpop.f32.mrb[0].mxu0
        %v895 = vadd.f32 0.0, %v894
        %v896 = vpop.f32.mrb[0].mxu0
        %897 = vmatprep.mubr.f32.mxu0 0.0
        %898 = vmatmul.mubr.f32.gmra.mrb[0].mxu0 %v699
        %v899 = vpop.f32.mrb[0].mxu0
        %v900 = vadd.f32 0.0, %v899
        %v901 = vpop.f32.mrb[0].mxu0
        %902 = vmatprep.mubr.f32.mxu0 0.0
        %903 = vmatmul.mubr.f32.gmra.mrb[0].mxu0 %v702
        %v904 = vpop.f32.mrb[0].mxu0
        %v905 = vadd.f32 0.0, %v904
        %v906 = vpop.f32.mrb[0].mxu0
        %907 = vmatprep.mubr.f32.mxu0 0.0
        %908 = vmatmul.mubr.f32.gmra.mrb[0].mxu0 %v705
        %v909 = vpop.f32.mrb[0].mxu0
        %v910 = vadd.f32 0.0, %v909
        %v911 = vpop.f32.mrb[0].mxu0
        %912 = vmatprep.mubr.f32.mxu0 0.0
        %913 = vmatmul.mubr.f32.gmra.mrb[0].mxu0 %v708
        %v914 = vpop.f32.mrb[0].mxu0
        %v915 = vadd.f32 0.0, %v914
        %v916 = vpop.f32.mrb[0].mxu0
        %917 = vmatprep.mubr.f32.mxu0 0.0
        %918 = vmatmul.mubr.f32.gmra.mrb[0].mxu0 %v711
        %v919 = vpop.f32.mrb[0].mxu0
        %v920 = vadd.f32 0.0, %v919
        %v921 = vpop.f32.mrb[0].mxu0
        %922 = vmatprep.mubr.f32.mxu0 0.0
        %923 = vmatmul.mubr.f32.gmra.mrb[0].mxu0 %v714
        %v924 = vpop.f32.mrb[0].mxu0
        %v925 = vadd.f32 0.0, %v924
        %v926 = vpop.f32.mrb[0].mxu0
        %927 = vmatprep.mubr.f32.mxu0 0.0
        %928 = vmatmul.mubr.f32.gmra.mrb[0].mxu0 %v717
        %v929 = vpop.f32.mrb[0].mxu0
        %v930 = vadd.f32 0.0, %v929
        %v931 = vpop.f32.mrb[0].mxu0
        %932 = vdwg.mxu0
        %vm933 = vcmask 64512
        %v935 = vsel %vm933, %v579, 0
        %937 = vmatprep.subr.mxu0 0.0
        %938 = vmatpush1.msra.mxu0 %v895
        %939 = vmatprep.subr.mxu0 0.0
        %940 = vmatpush1.msra.mxu0 0.0
        %941 = vmatprep.subr.mxu0 0.0
        %942 = vmatpush1.msra.mxu0 0.0
        %943 = vmatprep.subr.mxu0 0.0
        %944 = vmatpush1.msra.mxu0 0.0
        %945 = vmatprep.subr.mxu0 0.0
        %946 = vmatpush1.msra.mxu0 0.0
        %947 = vmatprep.subr.mxu0 0.0
        %948 = vmatpush1.msra.mxu0 0.0
        %949 = vmatprep.subr.mxu0 0.0
        %950 = vmatpush1.msra.mxu0 0.0
        %951 = vmatprep.subr.mxu0 0.0
        %952 = vmatpush1.msra.mxu0 0.0
        %953 = vmatprep.subr.mxu0 0.0
        %954 = vmatpush1.msra.mxu0 0.0
        %955 = vmatprep.subr.mxu0 0.0
        %956 = vmatpush1.msra.mxu0 0.0
        %957 = vmatprep.subr.mxu0 0.0
        %958 = vmatpush1.msra.mxu0 0.0
        %959 = vmatprep.subr.mxu0 0.0
        %960 = vmatpush1.msra.mxu0 0.0
        %961 = vmatprep.subr.mxu0 0.0
        %962 = vmatpush1.msra.mxu0 0.0
        %963 = vmatprep.subr.mxu0 0.0
        %964 = vmatpush1.msra.mxu0 0.0
        %965 = vmatprep.subr.mxu0 0.0
        %966 = vmatpush1.msra.mxu0 0.0
        %967 = vmatprep.subr.mxu0 0.0
        %968 = vmatpush1.msra.mxu0 0.0
        %969 = vmatprep.subr.mxu0 0.0
        %970 = vmatpush1.msra.mxu0 0.0
        %971 = vmatprep.subr.mxu0 0.0
        %972 = vmatpush1.msra.mxu0 0.0
        %973 = vmatprep.subr.mxu0 0.0
        %974 = vmatpush1.msra.mxu0 0.0
        %975 = vmatprep.subr.mxu0 0.0
        %976 = vmatpush1.msra.mxu0 0.0
        %977 = vmatprep.subr.mxu0 0.0
        %978 = vmatpush1.msra.mxu0 0.0
        %979 = vmatprep.subr.mxu0 0.0
        %980 = vmatpush1.msra.mxu0 0.0
        %981 = vmatprep.subr.mxu0 0.0
        %982 = vmatpush1.msra.mxu0 0.0
        %983 = vmatprep.subr.mxu0 0.0
        %984 = vmatpush1.msra.mxu0 0.0
        %985 = vmatprep.subr.mxu0 0.0
        %986 = vmatpush1.msra.mxu0 0.0
        %987 = vmatprep.subr.mxu0 0.0
        %988 = vmatpush1.msra.mxu0 0.0
        %989 = vmatprep.subr.mxu0 0.0
        %990 = vmatpush1.msra.mxu0 0.0
        %991 = vmatprep.subr.mxu0 0.0
        %992 = vmatpush1.msra.mxu0 0.0
        %993 = vmatprep.subr.mxu0 0.0
        %994 = vmatpush1.msra.mxu0 0.0
        %995 = vmatprep.subr.mxu0 0.0
        %996 = vmatpush1.msra.mxu0 0.0
        %997 = vmatprep.subr.mxu0 0.0
        %998 = vmatpush1.msra.mxu0 0.0
        %999 = vmatprep.subr.mxu0 0.0
        %1000 = vmatpush1.msra.mxu0 0.0
        %1001 = vmatprep.mubr.f32.mxu0 0.0
        %1002 = vmatmul.mubr.f32.gmra.mrb[0].mxu0 %v935
        %v1003 = vpop.f32.mrb[0].mxu0
        %v1004 = vadd.f32 0.0, %v1003
        %v1005 = vpop.f32.mrb[0].mxu0
        %1006 = vdwg.mxu0
        %v1008 = vsel %vm933, %v580, 0
        %1010 = vmatprep.subr.mxu0 0.0
        %1011 = vmatpush1.msra.mxu0 %v900
        %1012 = vmatprep.subr.mxu0 0.0
        %1013 = vmatpush1.msra.mxu0 0.0
        %1014 = vmatprep.subr.mxu0 0.0
        %1015 = vmatpush1.msra.mxu0 0.0
        %1016 = vmatprep.subr.mxu0 0.0
        %1017 = vmatpush1.msra.mxu0 0.0
        %1018 = vmatprep.subr.mxu0 0.0
        %1019 = vmatpush1.msra.mxu0 0.0
        %1020 = vmatprep.subr.mxu0 0.0
        %1021 = vmatpush1.msra.mxu0 0.0
        %1022 = vmatprep.subr.mxu0 0.0
        %1023 = vmatpush1.msra.mxu0 0.0
        %1024 = vmatprep.subr.mxu0 0.0
        %1025 = vmatpush1.msra.mxu0 0.0
        %1026 = vmatprep.subr.mxu0 0.0
        %1027 = vmatpush1.msra.mxu0 0.0
        %1028 = vmatprep.subr.mxu0 0.0
        %1029 = vmatpush1.msra.mxu0 0.0
        %1030 = vmatprep.subr.mxu0 0.0
        %1031 = vmatpush1.msra.mxu0 0.0
        %1032 = vmatprep.subr.mxu0 0.0
        %1033 = vmatpush1.msra.mxu0 0.0
        %1034 = vmatprep.subr.mxu0 0.0
        %1035 = vmatpush1.msra.mxu0 0.0
        %1036 = vmatprep.subr.mxu0 0.0
        %1037 = vmatpush1.msra.mxu0 0.0
        %1038 = vmatprep.subr.mxu0 0.0
        %1039 = vmatpush1.msra.mxu0 0.0
        %1040 = vmatprep.subr.mxu0 0.0
        %1041 = vmatpush1.msra.mxu0 0.0
        %1042 = vmatprep.subr.mxu0 0.0
        %1043 = vmatpush1.msra.mxu0 0.0
        %1044 = vmatprep.subr.mxu0 0.0
        %1045 = vmatpush1.msra.mxu0 0.0
        %1046 = vmatprep.subr.mxu0 0.0
        %1047 = vmatpush1.msra.mxu0 0.0
        %1048 = vmatprep.subr.mxu0 0.0
        %1049 = vmatpush1.msra.mxu0 0.0
        %1050 = vmatprep.subr.mxu0 0.0
        %1051 = vmatpush1.msra.mxu0 0.0
        %1052 = vmatprep.subr.mxu0 0.0
        %1053 = vmatpush1.msra.mxu0 0.0
        %1054 = vmatprep.subr.mxu0 0.0
        %1055 = vmatpush1.msra.mxu0 0.0
        %1056 = vmatprep.subr.mxu0 0.0
        %1057 = vmatpush1.msra.mxu0 0.0
        %1058 = vmatprep.subr.mxu0 0.0
        %1059 = vmatpush1.msra.mxu0 0.0
        %1060 = vmatprep.subr.mxu0 0.0
        %1061 = vmatpush1.msra.mxu0 0.0
        %1062 = vmatprep.subr.mxu0 0.0
        %1063 = vmatpush1.msra.mxu0 0.0
        %1064 = vmatprep.subr.mxu0 0.0
        %1065 = vmatpush1.msra.mxu0 0.0
        %1066 = vmatprep.subr.mxu0 0.0
        %1067 = vmatpush1.msra.mxu0 0.0
        %1068 = vmatprep.subr.mxu0 0.0
        %1069 = vmatpush1.msra.mxu0 0.0
        %1070 = vmatprep.subr.mxu0 0.0
        %1071 = vmatpush1.msra.mxu0 0.0
        %1072 = vmatprep.subr.mxu0 0.0
        %1073 = vmatpush1.msra.mxu0 0.0
        %1074 = vmatprep.mubr.f32.mxu0 0.0
        %1075 = vmatmul.mubr.f32.gmra.mrb[0].mxu0 %v1008
        %v1076 = vpop.f32.mrb[0].mxu0
        %v1077 = vadd.f32 0.0, %v1076
        %v1078 = vpop.f32.mrb[0].mxu0
        %1079 = vdwg.mxu0
        %v1081 = vsel %vm933, %v581, 0
        %1083 = vmatprep.subr.mxu0 0.0
        %1084 = vmatpush1.msra.mxu0 %v905
        %1085 = vmatprep.subr.mxu0 0.0
        %1086 = vmatpush1.msra.mxu0 0.0
        %1087 = vmatprep.subr.mxu0 0.0
        %1088 = vmatpush1.msra.mxu0 0.0
        %1089 = vmatprep.subr.mxu0 0.0
        %1090 = vmatpush1.msra.mxu0 0.0
        %1091 = vmatprep.subr.mxu0 0.0
        %1092 = vmatpush1.msra.mxu0 0.0
        %1093 = vmatprep.subr.mxu0 0.0
        %1094 = vmatpush1.msra.mxu0 0.0
        %1095 = vmatprep.subr.mxu0 0.0
        %1096 = vmatpush1.msra.mxu0 0.0
        %1097 = vmatprep.subr.mxu0 0.0
        %1098 = vmatpush1.msra.mxu0 0.0
        %1099 = vmatprep.subr.mxu0 0.0
        %1100 = vmatpush1.msra.mxu0 0.0
        %1101 = vmatprep.subr.mxu0 0.0
        %1102 = vmatpush1.msra.mxu0 0.0
        %1103 = vmatprep.subr.mxu0 0.0
        %1104 = vmatpush1.msra.mxu0 0.0
        %1105 = vmatprep.subr.mxu0 0.0
        %1106 = vmatpush1.msra.mxu0 0.0
        %1107 = vmatprep.subr.mxu0 0.0
        %1108 = vmatpush1.msra.mxu0 0.0
        %1109 = vmatprep.subr.mxu0 0.0
        %1110 = vmatpush1.msra.mxu0 0.0
        %1111 = vmatprep.subr.mxu0 0.0
        %1112 = vmatpush1.msra.mxu0 0.0
        %1113 = vmatprep.subr.mxu0 0.0
        %1114 = vmatpush1.msra.mxu0 0.0
        %1115 = vmatprep.subr.mxu0 0.0
        %1116 = vmatpush1.msra.mxu0 0.0
        %1117 = vmatprep.subr.mxu0 0.0
        %1118 = vmatpush1.msra.mxu0 0.0
        %1119 = vmatprep.subr.mxu0 0.0
        %1120 = vmatpush1.msra.mxu0 0.0
        %1121 = vmatprep.subr.mxu0 0.0
        %1122 = vmatpush1.msra.mxu0 0.0
        %1123 = vmatprep.subr.mxu0 0.0
        %1124 = vmatpush1.msra.mxu0 0.0
        %1125 = vmatprep.subr.mxu0 0.0
        %1126 = vmatpush1.msra.mxu0 0.0
        %1127 = vmatprep.subr.mxu0 0.0
        %1128 = vmatpush1.msra.mxu0 0.0
        %1129 = vmatprep.subr.mxu0 0.0
        %1130 = vmatpush1.msra.mxu0 0.0
        %1131 = vmatprep.subr.mxu0 0.0
        %1132 = vmatpush1.msra.mxu0 0.0
        %1133 = vmatprep.subr.mxu0 0.0
        %1134 = vmatpush1.msra.mxu0 0.0
        %1135 = vmatprep.subr.mxu0 0.0
        %1136 = vmatpush1.msra.mxu0 0.0
        %1137 = vmatprep.subr.mxu0 0.0
        %1138 = vmatpush1.msra.mxu0 0.0
        %1139 = vmatprep.subr.mxu0 0.0
        %1140 = vmatpush1.msra.mxu0 0.0
        %1141 = vmatprep.subr.mxu0 0.0
        %1142 = vmatpush1.msra.mxu0 0.0
        %1143 = vmatprep.subr.mxu0 0.0
        %1144 = vmatpush1.msra.mxu0 0.0
        %1145 = vmatprep.subr.mxu0 0.0
        %1146 = vmatpush1.msra.mxu0 0.0
        %1147 = vmatprep.mubr.f32.mxu0 0.0
        %1148 = vmatmul.mubr.f32.gmra.mrb[0].mxu0 %v1081
        %v1149 = vpop.f32.mrb[0].mxu0
        %v1150 = vadd.f32 0.0, %v1149
        %v1151 = vpop.f32.mrb[0].mxu0
        %1152 = vdwg.mxu0
        %v1154 = vsel %vm933, %v582, 0
        %1156 = vmatprep.subr.mxu0 0.0
        %1157 = vmatpush1.msra.mxu0 %v910
        %1158 = vmatprep.subr.mxu0 0.0
        %1159 = vmatpush1.msra.mxu0 0.0
        %1160 = vmatprep.subr.mxu0 0.0
        %1161 = vmatpush1.msra.mxu0 0.0
        %1162 = vmatprep.subr.mxu0 0.0
        %1163 = vmatpush1.msra.mxu0 0.0
        %1164 = vmatprep.subr.mxu0 0.0
        %1165 = vmatpush1.msra.mxu0 0.0
        %1166 = vmatprep.subr.mxu0 0.0
        %1167 = vmatpush1.msra.mxu0 0.0
        %1168 = vmatprep.subr.mxu0 0.0
        %1169 = vmatpush1.msra.mxu0 0.0
        %1170 = vmatprep.subr.mxu0 0.0
        %1171 = vmatpush1.msra.mxu0 0.0
        %1172 = vmatprep.subr.mxu0 0.0
        %1173 = vmatpush1.msra.mxu0 0.0
        %1174 = vmatprep.subr.mxu0 0.0
        %1175 = vmatpush1.msra.mxu0 0.0
        %1176 = vmatprep.subr.mxu0 0.0
        %1177 = vmatpush1.msra.mxu0 0.0
        %1178 = vmatprep.subr.mxu0 0.0
        %1179 = vmatpush1.msra.mxu0 0.0
        %1180 = vmatprep.subr.mxu0 0.0
        %1181 = vmatpush1.msra.mxu0 0.0
        %1182 = vmatprep.subr.mxu0 0.0
        %1183 = vmatpush1.msra.mxu0 0.0
        %1184 = vmatprep.subr.mxu0 0.0
        %1185 = vmatpush1.msra.mxu0 0.0
        %1186 = vmatprep.subr.mxu0 0.0
        %1187 = vmatpush1.msra.mxu0 0.0
        %1188 = vmatprep.subr.mxu0 0.0
        %1189 = vmatpush1.msra.mxu0 0.0
        %1190 = vmatprep.subr.mxu0 0.0
        %1191 = vmatpush1.msra.mxu0 0.0
        %1192 = vmatprep.subr.mxu0 0.0
        %1193 = vmatpush1.msra.mxu0 0.0
        %1194 = vmatprep.subr.mxu0 0.0
        %1195 = vmatpush1.msra.mxu0 0.0
        %1196 = vmatprep.subr.mxu0 0.0
        %1197 = vmatpush1.msra.mxu0 0.0
        %1198 = vmatprep.subr.mxu0 0.0
        %1199 = vmatpush1.msra.mxu0 0.0
        %1200 = vmatprep.subr.mxu0 0.0
        %1201 = vmatpush1.msra.mxu0 0.0
        %1202 = vmatprep.subr.mxu0 0.0
        %1203 = vmatpush1.msra.mxu0 0.0
        %1204 = vmatprep.subr.mxu0 0.0
        %1205 = vmatpush1.msra.mxu0 0.0
        %1206 = vmatprep.subr.mxu0 0.0
        %1207 = vmatpush1.msra.mxu0 0.0
        %1208 = vmatprep.subr.mxu0 0.0
        %1209 = vmatpush1.msra.mxu0 0.0
        %1210 = vmatprep.subr.mxu0 0.0
        %1211 = vmatpush1.msra.mxu0 0.0
        %1212 = vmatprep.subr.mxu0 0.0
        %1213 = vmatpush1.msra.mxu0 0.0
        %1214 = vmatprep.subr.mxu0 0.0
        %1215 = vmatpush1.msra.mxu0 0.0
        %1216 = vmatprep.subr.mxu0 0.0
        %1217 = vmatpush1.msra.mxu0 0.0
        %1218 = vmatprep.subr.mxu0 0.0
        %1219 = vmatpush1.msra.mxu0 0.0
        %1220 = vmatprep.mubr.f32.mxu0 0.0
        %1221 = vmatmul.mubr.f32.gmra.mrb[0].mxu0 %v1154
        %v1222 = vpop.f32.mrb[0].mxu0
        %v1223 = vadd.f32 0.0, %v1222
        %v1224 = vpop.f32.mrb[0].mxu0
        %1225 = vdwg.mxu0
        %v1227 = vsel %vm933, %v583, 0
        %1229 = vmatprep.subr.mxu0 0.0
        %1230 = vmatpush1.msra.mxu0 %v915
        %1231 = vmatprep.subr.mxu0 0.0
        %1232 = vmatpush1.msra.mxu0 0.0
        %1233 = vmatprep.subr.mxu0 0.0
        %1234 = vmatpush1.msra.mxu0 0.0
        %1235 = vmatprep.subr.mxu0 0.0
        %1236 = vmatpush1.msra.mxu0 0.0
        %1237 = vmatprep.subr.mxu0 0.0
        %1238 = vmatpush1.msra.mxu0 0.0
        %1239 = vmatprep.subr.mxu0 0.0
        %1240 = vmatpush1.msra.mxu0 0.0
        %1241 = vmatprep.subr.mxu0 0.0
        %1242 = vmatpush1.msra.mxu0 0.0
        %1243 = vmatprep.subr.mxu0 0.0
        %1244 = vmatpush1.msra.mxu0 0.0
        %1245 = vmatprep.subr.mxu0 0.0
        %1246 = vmatpush1.msra.mxu0 0.0
        %1247 = vmatprep.subr.mxu0 0.0
        %1248 = vmatpush1.msra.mxu0 0.0
        %1249 = vmatprep.subr.mxu0 0.0
        %1250 = vmatpush1.msra.mxu0 0.0
        %1251 = vmatprep.subr.mxu0 0.0
        %1252 = vmatpush1.msra.mxu0 0.0
        %1253 = vmatprep.subr.mxu0 0.0
        %1254 = vmatpush1.msra.mxu0 0.0
        %1255 = vmatprep.subr.mxu0 0.0
        %1256 = vmatpush1.msra.mxu0 0.0
        %1257 = vmatprep.subr.mxu0 0.0
        %1258 = vmatpush1.msra.mxu0 0.0
        %1259 = vmatprep.subr.mxu0 0.0
        %1260 = vmatpush1.msra.mxu0 0.0
        %1261 = vmatprep.subr.mxu0 0.0
        %1262 = vmatpush1.msra.mxu0 0.0
        %1263 = vmatprep.subr.mxu0 0.0
        %1264 = vmatpush1.msra.mxu0 0.0
        %1265 = vmatprep.subr.mxu0 0.0
        %1266 = vmatpush1.msra.mxu0 0.0
        %1267 = vmatprep.subr.mxu0 0.0
        %1268 = vmatpush1.msra.mxu0 0.0
        %1269 = vmatprep.subr.mxu0 0.0
        %1270 = vmatpush1.msra.mxu0 0.0
        %1271 = vmatprep.subr.mxu0 0.0
        %1272 = vmatpush1.msra.mxu0 0.0
        %1273 = vmatprep.subr.mxu0 0.0
        %1274 = vmatpush1.msra.mxu0 0.0
        %1275 = vmatprep.subr.mxu0 0.0
        %1276 = vmatpush1.msra.mxu0 0.0
        %1277 = vmatprep.subr.mxu0 0.0
        %1278 = vmatpush1.msra.mxu0 0.0
        %1279 = vmatprep.subr.mxu0 0.0
        %1280 = vmatpush1.msra.mxu0 0.0
        %1281 = vmatprep.subr.mxu0 0.0
        %1282 = vmatpush1.msra.mxu0 0.0
        %1283 = vmatprep.subr.mxu0 0.0
        %1284 = vmatpush1.msra.mxu0 0.0
        %1285 = vmatprep.subr.mxu0 0.0
        %1286 = vmatpush1.msra.mxu0 0.0
        %1287 = vmatprep.subr.mxu0 0.0
        %1288 = vmatpush1.msra.mxu0 0.0
        %1289 = vmatprep.subr.mxu0 0.0
        %1290 = vmatpush1.msra.mxu0 0.0
        %1291 = vmatprep.subr.mxu0 0.0
        %1292 = vmatpush1.msra.mxu0 0.0
        %1293 = vmatprep.mubr.f32.mxu0 0.0
        %1294 = vmatmul.mubr.f32.gmra.mrb[0].mxu0 %v1227
        %v1295 = vpop.f32.mrb[0].mxu0
        %v1296 = vadd.f32 0.0, %v1295
        %v1297 = vpop.f32.mrb[0].mxu0
        %1298 = vdwg.mxu0
        %v1300 = vsel %vm933, %v584, 0
        %1302 = vmatprep.subr.mxu0 0.0
        %1303 = vmatpush1.msra.mxu0 %v920
        %1304 = vmatprep.subr.mxu0 0.0
        %1305 = vmatpush1.msra.mxu0 0.0
        %1306 = vmatprep.subr.mxu0 0.0
        %1307 = vmatpush1.msra.mxu0 0.0
        %1308 = vmatprep.subr.mxu0 0.0
        %1309 = vmatpush1.msra.mxu0 0.0
        %1310 = vmatprep.subr.mxu0 0.0
        %1311 = vmatpush1.msra.mxu0 0.0
        %1312 = vmatprep.subr.mxu0 0.0
        %1313 = vmatpush1.msra.mxu0 0.0
        %1314 = vmatprep.subr.mxu0 0.0
        %1315 = vmatpush1.msra.mxu0 0.0
        %1316 = vmatprep.subr.mxu0 0.0
        %1317 = vmatpush1.msra.mxu0 0.0
        %1318 = vmatprep.subr.mxu0 0.0
        %1319 = vmatpush1.msra.mxu0 0.0
        %1320 = vmatprep.subr.mxu0 0.0
        %1321 = vmatpush1.msra.mxu0 0.0
        %1322 = vmatprep.subr.mxu0 0.0
        %1323 = vmatpush1.msra.mxu0 0.0
        %1324 = vmatprep.subr.mxu0 0.0
        %1325 = vmatpush1.msra.mxu0 0.0
        %1326 = vmatprep.subr.mxu0 0.0
        %1327 = vmatpush1.msra.mxu0 0.0
        %1328 = vmatprep.subr.mxu0 0.0
        %1329 = vmatpush1.msra.mxu0 0.0
        %1330 = vmatprep.subr.mxu0 0.0
        %1331 = vmatpush1.msra.mxu0 0.0
        %1332 = vmatprep.subr.mxu0 0.0
        %1333 = vmatpush1.msra.mxu0 0.0
        %1334 = vmatprep.subr.mxu0 0.0
        %1335 = vmatpush1.msra.mxu0 0.0
        %1336 = vmatprep.subr.mxu0 0.0
        %1337 = vmatpush1.msra.mxu0 0.0
        %1338 = vmatprep.subr.mxu0 0.0
        %1339 = vmatpush1.msra.mxu0 0.0
        %1340 = vmatprep.subr.mxu0 0.0
        %1341 = vmatpush1.msra.mxu0 0.0
        %1342 = vmatprep.subr.mxu0 0.0
        %1343 = vmatpush1.msra.mxu0 0.0
        %1344 = vmatprep.subr.mxu0 0.0
        %1345 = vmatpush1.msra.mxu0 0.0
        %1346 = vmatprep.subr.mxu0 0.0
        %1347 = vmatpush1.msra.mxu0 0.0
        %1348 = vmatprep.subr.mxu0 0.0
        %1349 = vmatpush1.msra.mxu0 0.0
        %1350 = vmatprep.subr.mxu0 0.0
        %1351 = vmatpush1.msra.mxu0 0.0
        %1352 = vmatprep.subr.mxu0 0.0
        %1353 = vmatpush1.msra.mxu0 0.0
        %1354 = vmatprep.subr.mxu0 0.0
        %1355 = vmatpush1.msra.mxu0 0.0
        %1356 = vmatprep.subr.mxu0 0.0
        %1357 = vmatpush1.msra.mxu0 0.0
        %1358 = vmatprep.subr.mxu0 0.0
        %1359 = vmatpush1.msra.mxu0 0.0
        %1360 = vmatprep.subr.mxu0 0.0
        %1361 = vmatpush1.msra.mxu0 0.0
        %1362 = vmatprep.subr.mxu0 0.0
        %1363 = vmatpush1.msra.mxu0 0.0
        %1364 = vmatprep.subr.mxu0 0.0
        %1365 = vmatpush1.msra.mxu0 0.0
        %1366 = vmatprep.mubr.f32.mxu0 0.0
        %1367 = vmatmul.mubr.f32.gmra.mrb[0].mxu0 %v1300
        %v1368 = vpop.f32.mrb[0].mxu0
        %v1369 = vadd.f32 0.0, %v1368
        %v1370 = vpop.f32.mrb[0].mxu0
        %1371 = vdwg.mxu0
        %v1373 = vsel %vm933, %v585, 0
        %1375 = vmatprep.subr.mxu0 0.0
        %1376 = vmatpush1.msra.mxu0 %v925
        %1377 = vmatprep.subr.mxu0 0.0
        %1378 = vmatpush1.msra.mxu0 0.0
        %1379 = vmatprep.subr.mxu0 0.0
        %1380 = vmatpush1.msra.mxu0 0.0
        %1381 = vmatprep.subr.mxu0 0.0
        %1382 = vmatpush1.msra.mxu0 0.0
        %1383 = vmatprep.subr.mxu0 0.0
        %1384 = vmatpush1.msra.mxu0 0.0
        %1385 = vmatprep.subr.mxu0 0.0
        %1386 = vmatpush1.msra.mxu0 0.0
        %1387 = vmatprep.subr.mxu0 0.0
        %1388 = vmatpush1.msra.mxu0 0.0
        %1389 = vmatprep.subr.mxu0 0.0
        %1390 = vmatpush1.msra.mxu0 0.0
        %1391 = vmatprep.subr.mxu0 0.0
        %1392 = vmatpush1.msra.mxu0 0.0
        %1393 = vmatprep.subr.mxu0 0.0
        %1394 = vmatpush1.msra.mxu0 0.0
        %1395 = vmatprep.subr.mxu0 0.0
        %1396 = vmatpush1.msra.mxu0 0.0
        %1397 = vmatprep.subr.mxu0 0.0
        %1398 = vmatpush1.msra.mxu0 0.0
        %1399 = vmatprep.subr.mxu0 0.0
        %1400 = vmatpush1.msra.mxu0 0.0
        %1401 = vmatprep.subr.mxu0 0.0
        %1402 = vmatpush1.msra.mxu0 0.0
        %1403 = vmatprep.subr.mxu0 0.0
        %1404 = vmatpush1.msra.mxu0 0.0
        %1405 = vmatprep.subr.mxu0 0.0
        %1406 = vmatpush1.msra.mxu0 0.0
        %1407 = vmatprep.subr.mxu0 0.0
        %1408 = vmatpush1.msra.mxu0 0.0
        %1409 = vmatprep.subr.mxu0 0.0
        %1410 = vmatpush1.msra.mxu0 0.0
        %1411 = vmatprep.subr.mxu0 0.0
        %1412 = vmatpush1.msra.mxu0 0.0
        %1413 = vmatprep.subr.mxu0 0.0
        %1414 = vmatpush1.msra.mxu0 0.0
        %1415 = vmatprep.subr.mxu0 0.0
        %1416 = vmatpush1.msra.mxu0 0.0
        %1417 = vmatprep.subr.mxu0 0.0
        %1418 = vmatpush1.msra.mxu0 0.0
        %1419 = vmatprep.subr.mxu0 0.0
        %1420 = vmatpush1.msra.mxu0 0.0
        %1421 = vmatprep.subr.mxu0 0.0
        %1422 = vmatpush1.msra.mxu0 0.0
        %1423 = vmatprep.subr.mxu0 0.0
        %1424 = vmatpush1.msra.mxu0 0.0
        %1425 = vmatprep.subr.mxu0 0.0
        %1426 = vmatpush1.msra.mxu0 0.0
        %1427 = vmatprep.subr.mxu0 0.0
        %1428 = vmatpush1.msra.mxu0 0.0
        %1429 = vmatprep.subr.mxu0 0.0
        %1430 = vmatpush1.msra.mxu0 0.0
        %1431 = vmatprep.subr.mxu0 0.0
        %1432 = vmatpush1.msra.mxu0 0.0
        %1433 = vmatprep.subr.mxu0 0.0
        %1434 = vmatpush1.msra.mxu0 0.0
        %1435 = vmatprep.subr.mxu0 0.0
        %1436 = vmatpush1.msra.mxu0 0.0
        %1437 = vmatprep.subr.mxu0 0.0
        %1438 = vmatpush1.msra.mxu0 0.0
        %1439 = vmatprep.mubr.f32.mxu0 0.0
        %1440 = vmatmul.mubr.f32.gmra.mrb[0].mxu0 %v1373
        %v1441 = vpop.f32.mrb[0].mxu0
        %v1442 = vadd.f32 0.0, %v1441
        %v1443 = vpop.f32.mrb[0].mxu0
        %1444 = vdwg.mxu0
        %v1446 = vsel %vm933, %v586, 0
        %1448 = vmatprep.subr.mxu0 0.0
        %1449 = vmatpush1.msra.mxu0 %v930
        %1450 = vmatprep.subr.mxu0 0.0
        %1451 = vmatpush1.msra.mxu0 0.0
        %1452 = vmatprep.subr.mxu0 0.0
        %1453 = vmatpush1.msra.mxu0 0.0
        %1454 = vmatprep.subr.mxu0 0.0
        %1455 = vmatpush1.msra.mxu0 0.0
        %1456 = vmatprep.subr.mxu0 0.0
        %1457 = vmatpush1.msra.mxu0 0.0
        %1458 = vmatprep.subr.mxu0 0.0
        %1459 = vmatpush1.msra.mxu0 0.0
        %1460 = vmatprep.subr.mxu0 0.0
        %1461 = vmatpush1.msra.mxu0 0.0
        %1462 = vmatprep.subr.mxu0 0.0
        %1463 = vmatpush1.msra.mxu0 0.0
        %1464 = vmatprep.subr.mxu0 0.0
        %1465 = vmatpush1.msra.mxu0 0.0
        %1466 = vmatprep.subr.mxu0 0.0
        %1467 = vmatpush1.msra.mxu0 0.0
        %1468 = vmatprep.subr.mxu0 0.0
        %1469 = vmatpush1.msra.mxu0 0.0
        %1470 = vmatprep.subr.mxu0 0.0
        %1471 = vmatpush1.msra.mxu0 0.0
        %1472 = vmatprep.subr.mxu0 0.0
        %1473 = vmatpush1.msra.mxu0 0.0
        %1474 = vmatprep.subr.mxu0 0.0
        %1475 = vmatpush1.msra.mxu0 0.0
        %1476 = vmatprep.subr.mxu0 0.0
        %1477 = vmatpush1.msra.mxu0 0.0
        %1478 = vmatprep.subr.mxu0 0.0
        %1479 = vmatpush1.msra.mxu0 0.0
        %1480 = vmatprep.subr.mxu0 0.0
        %1481 = vmatpush1.msra.mxu0 0.0
        %1482 = vmatprep.subr.mxu0 0.0
        %1483 = vmatpush1.msra.mxu0 0.0
        %1484 = vmatprep.subr.mxu0 0.0
        %1485 = vmatpush1.msra.mxu0 0.0
        %1486 = vmatprep.subr.mxu0 0.0
        %1487 = vmatpush1.msra.mxu0 0.0
        %1488 = vmatprep.subr.mxu0 0.0
        %1489 = vmatpush1.msra.mxu0 0.0
        %1490 = vmatprep.subr.mxu0 0.0
        %1491 = vmatpush1.msra.mxu0 0.0
        %1492 = vmatprep.subr.mxu0 0.0
        %1493 = vmatpush1.msra.mxu0 0.0
        %1494 = vmatprep.subr.mxu0 0.0
        %1495 = vmatpush1.msra.mxu0 0.0
        %1496 = vmatprep.subr.mxu0 0.0
        %1497 = vmatpush1.msra.mxu0 0.0
        %1498 = vmatprep.subr.mxu0 0.0
        %1499 = vmatpush1.msra.mxu0 0.0
        %1500 = vmatprep.subr.mxu0 0.0
        %1501 = vmatpush1.msra.mxu0 0.0
        %1502 = vmatprep.subr.mxu0 0.0
        %1503 = vmatpush1.msra.mxu0 0.0
        %1504 = vmatprep.subr.mxu0 0.0
        %1505 = vmatpush1.msra.mxu0 0.0
        %1506 = vmatprep.subr.mxu0 0.0
        %1507 = vmatpush1.msra.mxu0 0.0
        %1508 = vmatprep.subr.mxu0 0.0
        %1509 = vmatpush1.msra.mxu0 0.0
        %1510 = vmatprep.subr.mxu0 0.0
        %1511 = vmatpush1.msra.mxu0 0.0
        %1512 = vmatprep.mubr.f32.mxu0 0.0
        %1513 = vmatmul.mubr.f32.gmra.mrb[0].mxu0 %v1446
        %v1514 = vpop.f32.mrb[0].mxu0
        %v1515 = vadd.f32 0.0, %v1514
        %v1516 = vpop.f32.mrb[0].mxu0
        %1517 = vdwg.mxu0
        %v1518 = vadd.f32 %v786, %v1004
        %v1519 = vadd.f32 %v791, %v1077
        %v1520 = vadd.f32 %v796, %v1150
        %v1521 = vadd.f32 %v801, %v1223
        %v1522 = vadd.f32 %v806, %v1296
        %v1523 = vadd.f32 %v811, %v1369
        %v1524 = vadd.f32 %v816, %v1442
        %v1525 = vadd.f32 %v821, %v1515
        %1527 = vrot.lane.b32.xlu0 %v895, 96
        %v1528 = vpop.permute.xlu0 %1527
        %v1531 = vsel %vm933, %v611, 0
        %1533 = vmatprep.subr.mxu0 0.0
        %1534 = vmatpush1.msra.mxu0 %v1528
        %1535 = vmatprep.subr.mxu0 0.0
        %1536 = vmatpush1.msra.mxu0 0.0
        %1537 = vmatprep.subr.mxu0 0.0
        %1538 = vmatpush1.msra.mxu0 0.0
        %1539 = vmatprep.subr.mxu0 0.0
        %1540 = vmatpush1.msra.mxu0 0.0
        %1541 = vmatprep.subr.mxu0 0.0
        %1542 = vmatpush1.msra.mxu0 0.0
        %1543 = vmatprep.subr.mxu0 0.0
        %1544 = vmatpush1.msra.mxu0 0.0
        %1545 = vmatprep.subr.mxu0 0.0
        %1546 = vmatpush1.msra.mxu0 0.0
        %1547 = vmatprep.subr.mxu0 0.0
        %1548 = vmatpush1.msra.mxu0 0.0
        %1549 = vmatprep.subr.mxu0 0.0
        %1550 = vmatpush1.msra.mxu0 0.0
        %1551 = vmatprep.subr.mxu0 0.0
        %1552 = vmatpush1.msra.mxu0 0.0
        %1553 = vmatprep.subr.mxu0 0.0
        %1554 = vmatpush1.msra.mxu0 0.0
        %1555 = vmatprep.subr.mxu0 0.0
        %1556 = vmatpush1.msra.mxu0 0.0
        %1557 = vmatprep.subr.mxu0 0.0
        %1558 = vmatpush1.msra.mxu0 0.0
        %1559 = vmatprep.subr.mxu0 0.0
        %1560 = vmatpush1.msra.mxu0 0.0
        %1561 = vmatprep.subr.mxu0 0.0
        %1562 = vmatpush1.msra.mxu0 0.0
        %1563 = vmatprep.subr.mxu0 0.0
        %1564 = vmatpush1.msra.mxu0 0.0
        %1565 = vmatprep.subr.mxu0 0.0
        %1566 = vmatpush1.msra.mxu0 0.0
        %1567 = vmatprep.subr.mxu0 0.0
        %1568 = vmatpush1.msra.mxu0 0.0
        %1569 = vmatprep.subr.mxu0 0.0
        %1570 = vmatpush1.msra.mxu0 0.0
        %1571 = vmatprep.subr.mxu0 0.0
        %1572 = vmatpush1.msra.mxu0 0.0
        %1573 = vmatprep.subr.mxu0 0.0
        %1574 = vmatpush1.msra.mxu0 0.0
        %1575 = vmatprep.subr.mxu0 0.0
        %1576 = vmatpush1.msra.mxu0 0.0
        %1577 = vmatprep.subr.mxu0 0.0
        %1578 = vmatpush1.msra.mxu0 0.0
        %1579 = vmatprep.subr.mxu0 0.0
        %1580 = vmatpush1.msra.mxu0 0.0
        %1581 = vmatprep.subr.mxu0 0.0
        %1582 = vmatpush1.msra.mxu0 0.0
        %1583 = vmatprep.subr.mxu0 0.0
        %1584 = vmatpush1.msra.mxu0 0.0
        %1585 = vmatprep.subr.mxu0 0.0
        %1586 = vmatpush1.msra.mxu0 0.0
        %1587 = vmatprep.subr.mxu0 0.0
        %1588 = vmatpush1.msra.mxu0 0.0
        %1589 = vmatprep.subr.mxu0 0.0
        %1590 = vmatpush1.msra.mxu0 0.0
        %1591 = vmatprep.subr.mxu0 0.0
        %1592 = vmatpush1.msra.mxu0 0.0
        %1593 = vmatprep.subr.mxu0 0.0
        %1594 = vmatpush1.msra.mxu0 0.0
        %1595 = vmatprep.subr.mxu0 0.0
        %1596 = vmatpush1.msra.mxu0 0.0
        %1597 = vmatprep.mubr.f32.mxu0 0.0
        %1598 = vmatmul.mubr.f32.gmra.mrb[0].mxu0 %v1531
        %v1599 = vpop.f32.mrb[0].mxu0
        %v1600 = vadd.f32 0.0, %v1599
        %v1601 = vpop.f32.mrb[0].mxu0
        %1602 = vdwg.mxu0
        %1604 = vrot.lane.b32.xlu0 %v900, 96
        %v1605 = vpop.permute.xlu0 %1604
        %v1608 = vsel %vm933, %v612, 0
        %1610 = vmatprep.subr.mxu0 0.0
        %1611 = vmatpush1.msra.mxu0 %v1605
        %1612 = vmatprep.subr.mxu0 0.0
        %1613 = vmatpush1.msra.mxu0 0.0
        %1614 = vmatprep.subr.mxu0 0.0
        %1615 = vmatpush1.msra.mxu0 0.0
        %1616 = vmatprep.subr.mxu0 0.0
        %1617 = vmatpush1.msra.mxu0 0.0
        %1618 = vmatprep.subr.mxu0 0.0
        %1619 = vmatpush1.msra.mxu0 0.0
        %1620 = vmatprep.subr.mxu0 0.0
        %1621 = vmatpush1.msra.mxu0 0.0
        %1622 = vmatprep.subr.mxu0 0.0
        %1623 = vmatpush1.msra.mxu0 0.0
        %1624 = vmatprep.subr.mxu0 0.0
        %1625 = vmatpush1.msra.mxu0 0.0
        %1626 = vmatprep.subr.mxu0 0.0
        %1627 = vmatpush1.msra.mxu0 0.0
        %1628 = vmatprep.subr.mxu0 0.0
        %1629 = vmatpush1.msra.mxu0 0.0
        %1630 = vmatprep.subr.mxu0 0.0
        %1631 = vmatpush1.msra.mxu0 0.0
        %1632 = vmatprep.subr.mxu0 0.0
        %1633 = vmatpush1.msra.mxu0 0.0
        %1634 = vmatprep.subr.mxu0 0.0
        %1635 = vmatpush1.msra.mxu0 0.0
        %1636 = vmatprep.subr.mxu0 0.0
        %1637 = vmatpush1.msra.mxu0 0.0
        %1638 = vmatprep.subr.mxu0 0.0
        %1639 = vmatpush1.msra.mxu0 0.0
        %1640 = vmatprep.subr.mxu0 0.0
        %1641 = vmatpush1.msra.mxu0 0.0
        %1642 = vmatprep.subr.mxu0 0.0
        %1643 = vmatpush1.msra.mxu0 0.0
        %1644 = vmatprep.subr.mxu0 0.0
        %1645 = vmatpush1.msra.mxu0 0.0
        %1646 = vmatprep.subr.mxu0 0.0
        %1647 = vmatpush1.msra.mxu0 0.0
        %1648 = vmatprep.subr.mxu0 0.0
        %1649 = vmatpush1.msra.mxu0 0.0
        %1650 = vmatprep.subr.mxu0 0.0
        %1651 = vmatpush1.msra.mxu0 0.0
        %1652 = vmatprep.subr.mxu0 0.0
        %1653 = vmatpush1.msra.mxu0 0.0
        %1654 = vmatprep.subr.mxu0 0.0
        %1655 = vmatpush1.msra.mxu0 0.0
        %1656 = vmatprep.subr.mxu0 0.0
        %1657 = vmatpush1.msra.mxu0 0.0
        %1658 = vmatprep.subr.mxu0 0.0
        %1659 = vmatpush1.msra.mxu0 0.0
        %1660 = vmatprep.subr.mxu0 0.0
        %1661 = vmatpush1.msra.mxu0 0.0
        %1662 = vmatprep.subr.mxu0 0.0
        %1663 = vmatpush1.msra.mxu0 0.0
        %1664 = vmatprep.subr.mxu0 0.0
        %1665 = vmatpush1.msra.mxu0 0.0
        %1666 = vmatprep.subr.mxu0 0.0
        %1667 = vmatpush1.msra.mxu0 0.0
        %1668 = vmatprep.subr.mxu0 0.0
        %1669 = vmatpush1.msra.mxu0 0.0
        %1670 = vmatprep.subr.mxu0 0.0
        %1671 = vmatpush1.msra.mxu0 0.0
        %1672 = vmatprep.subr.mxu0 0.0
        %1673 = vmatpush1.msra.mxu0 0.0
        %1674 = vmatprep.mubr.f32.mxu0 0.0
        %1675 = vmatmul.mubr.f32.gmra.mrb[0].mxu0 %v1608
        %v1676 = vpop.f32.mrb[0].mxu0
        %v1677 = vadd.f32 0.0, %v1676
        %v1678 = vpop.f32.mrb[0].mxu0
        %1679 = vdwg.mxu0
        %1681 = vrot.lane.b32.xlu0 %v905, 96
        %v1682 = vpop.permute.xlu0 %1681
        %v1685 = vsel %vm933, %v613, 0
        %1687 = vmatprep.subr.mxu0 0.0
        %1688 = vmatpush1.msra.mxu0 %v1682
        %1689 = vmatprep.subr.mxu0 0.0
        %1690 = vmatpush1.msra.mxu0 0.0
        %1691 = vmatprep.subr.mxu0 0.0
        %1692 = vmatpush1.msra.mxu0 0.0
        %1693 = vmatprep.subr.mxu0 0.0
        %1694 = vmatpush1.msra.mxu0 0.0
        %1695 = vmatprep.subr.mxu0 0.0
        %1696 = vmatpush1.msra.mxu0 0.0
        %1697 = vmatprep.subr.mxu0 0.0
        %1698 = vmatpush1.msra.mxu0 0.0
        %1699 = vmatprep.subr.mxu0 0.0
        %1700 = vmatpush1.msra.mxu0 0.0
        %1701 = vmatprep.subr.mxu0 0.0
        %1702 = vmatpush1.msra.mxu0 0.0
        %1703 = vmatprep.subr.mxu0 0.0
        %1704 = vmatpush1.msra.mxu0 0.0
        %1705 = vmatprep.subr.mxu0 0.0
        %1706 = vmatpush1.msra.mxu0 0.0
        %1707 = vmatprep.subr.mxu0 0.0
        %1708 = vmatpush1.msra.mxu0 0.0
        %1709 = vmatprep.subr.mxu0 0.0
        %1710 = vmatpush1.msra.mxu0 0.0
        %1711 = vmatprep.subr.mxu0 0.0
        %1712 = vmatpush1.msra.mxu0 0.0
        %1713 = vmatprep.subr.mxu0 0.0
        %1714 = vmatpush1.msra.mxu0 0.0
        %1715 = vmatprep.subr.mxu0 0.0
        %1716 = vmatpush1.msra.mxu0 0.0
        %1717 = vmatprep.subr.mxu0 0.0
        %1718 = vmatpush1.msra.mxu0 0.0
        %1719 = vmatprep.subr.mxu0 0.0
        %1720 = vmatpush1.msra.mxu0 0.0
        %1721 = vmatprep.subr.mxu0 0.0
        %1722 = vmatpush1.msra.mxu0 0.0
        %1723 = vmatprep.subr.mxu0 0.0
        %1724 = vmatpush1.msra.mxu0 0.0
        %1725 = vmatprep.subr.mxu0 0.0
        %1726 = vmatpush1.msra.mxu0 0.0
        %1727 = vmatprep.subr.mxu0 0.0
        %1728 = vmatpush1.msra.mxu0 0.0
        %1729 = vmatprep.subr.mxu0 0.0
        %1730 = vmatpush1.msra.mxu0 0.0
        %1731 = vmatprep.subr.mxu0 0.0
        %1732 = vmatpush1.msra.mxu0 0.0
        %1733 = vmatprep.subr.mxu0 0.0
        %1734 = vmatpush1.msra.mxu0 0.0
        %1735 = vmatprep.subr.mxu0 0.0
        %1736 = vmatpush1.msra.mxu0 0.0
        %1737 = vmatprep.subr.mxu0 0.0
        %1738 = vmatpush1.msra.mxu0 0.0
        %1739 = vmatprep.subr.mxu0 0.0
        %1740 = vmatpush1.msra.mxu0 0.0
        %1741 = vmatprep.subr.mxu0 0.0
        %1742 = vmatpush1.msra.mxu0 0.0
        %1743 = vmatprep.subr.mxu0 0.0
        %1744 = vmatpush1.msra.mxu0 0.0
        %1745 = vmatprep.subr.mxu0 0.0
        %1746 = vmatpush1.msra.mxu0 0.0
        %1747 = vmatprep.subr.mxu0 0.0
        %1748 = vmatpush1.msra.mxu0 0.0
        %1749 = vmatprep.subr.mxu0 0.0
        %1750 = vmatpush1.msra.mxu0 0.0
        %1751 = vmatprep.mubr.f32.mxu0 0.0
        %1752 = vmatmul.mubr.f32.gmra.mrb[0].mxu0 %v1685
        %v1753 = vpop.f32.mrb[0].mxu0
        %v1754 = vadd.f32 0.0, %v1753
        %v1755 = vpop.f32.mrb[0].mxu0
        %1756 = vdwg.mxu0
        %1758 = vrot.lane.b32.xlu0 %v910, 96
        %v1759 = vpop.permute.xlu0 %1758
        %v1762 = vsel %vm933, %v614, 0
        %1764 = vmatprep.subr.mxu0 0.0
        %1765 = vmatpush1.msra.mxu0 %v1759
        %1766 = vmatprep.subr.mxu0 0.0
        %1767 = vmatpush1.msra.mxu0 0.0
        %1768 = vmatprep.subr.mxu0 0.0
        %1769 = vmatpush1.msra.mxu0 0.0
        %1770 = vmatprep.subr.mxu0 0.0
        %1771 = vmatpush1.msra.mxu0 0.0
        %1772 = vmatprep.subr.mxu0 0.0
        %1773 = vmatpush1.msra.mxu0 0.0
        %1774 = vmatprep.subr.mxu0 0.0
        %1775 = vmatpush1.msra.mxu0 0.0
        %1776 = vmatprep.subr.mxu0 0.0
        %1777 = vmatpush1.msra.mxu0 0.0
        %1778 = vmatprep.subr.mxu0 0.0
        %1779 = vmatpush1.msra.mxu0 0.0
        %1780 = vmatprep.subr.mxu0 0.0
        %1781 = vmatpush1.msra.mxu0 0.0
        %1782 = vmatprep.subr.mxu0 0.0
        %1783 = vmatpush1.msra.mxu0 0.0
        %1784 = vmatprep.subr.mxu0 0.0
        %1785 = vmatpush1.msra.mxu0 0.0
        %1786 = vmatprep.subr.mxu0 0.0
        %1787 = vmatpush1.msra.mxu0 0.0
        %1788 = vmatprep.subr.mxu0 0.0
        %1789 = vmatpush1.msra.mxu0 0.0
        %1790 = vmatprep.subr.mxu0 0.0
        %1791 = vmatpush1.msra.mxu0 0.0
        %1792 = vmatprep.subr.mxu0 0.0
        %1793 = vmatpush1.msra.mxu0 0.0
        %1794 = vmatprep.subr.mxu0 0.0
        %1795 = vmatpush1.msra.mxu0 0.0
        %1796 = vmatprep.subr.mxu0 0.0
        %1797 = vmatpush1.msra.mxu0 0.0
        %1798 = vmatprep.subr.mxu0 0.0
        %1799 = vmatpush1.msra.mxu0 0.0
        %1800 = vmatprep.subr.mxu0 0.0
        %1801 = vmatpush1.msra.mxu0 0.0
        %1802 = vmatprep.subr.mxu0 0.0
        %1803 = vmatpush1.msra.mxu0 0.0
        %1804 = vmatprep.subr.mxu0 0.0
        %1805 = vmatpush1.msra.mxu0 0.0
        %1806 = vmatprep.subr.mxu0 0.0
        %1807 = vmatpush1.msra.mxu0 0.0
        %1808 = vmatprep.subr.mxu0 0.0
        %1809 = vmatpush1.msra.mxu0 0.0
        %1810 = vmatprep.subr.mxu0 0.0
        %1811 = vmatpush1.msra.mxu0 0.0
        %1812 = vmatprep.subr.mxu0 0.0
        %1813 = vmatpush1.msra.mxu0 0.0
        %1814 = vmatprep.subr.mxu0 0.0
        %1815 = vmatpush1.msra.mxu0 0.0
        %1816 = vmatprep.subr.mxu0 0.0
        %1817 = vmatpush1.msra.mxu0 0.0
        %1818 = vmatprep.subr.mxu0 0.0
        %1819 = vmatpush1.msra.mxu0 0.0
        %1820 = vmatprep.subr.mxu0 0.0
        %1821 = vmatpush1.msra.mxu0 0.0
        %1822 = vmatprep.subr.mxu0 0.0
        %1823 = vmatpush1.msra.mxu0 0.0
        %1824 = vmatprep.subr.mxu0 0.0
        %1825 = vmatpush1.msra.mxu0 0.0
        %1826 = vmatprep.subr.mxu0 0.0
        %1827 = vmatpush1.msra.mxu0 0.0
        %1828 = vmatprep.mubr.f32.mxu0 0.0
        %1829 = vmatmul.mubr.f32.gmra.mrb[0].mxu0 %v1762
        %v1830 = vpop.f32.mrb[0].mxu0
        %v1831 = vadd.f32 0.0, %v1830
        %v1832 = vpop.f32.mrb[0].mxu0
        %1833 = vdwg.mxu0
        %1835 = vrot.lane.b32.xlu0 %v915, 96
        %v1836 = vpop.permute.xlu0 %1835
        %v1839 = vsel %vm933, %v615, 0
        %1841 = vmatprep.subr.mxu0 0.0
        %1842 = vmatpush1.msra.mxu0 %v1836
        %1843 = vmatprep.subr.mxu0 0.0
        %1844 = vmatpush1.msra.mxu0 0.0
        %1845 = vmatprep.subr.mxu0 0.0
        %1846 = vmatpush1.msra.mxu0 0.0
        %1847 = vmatprep.subr.mxu0 0.0
        %1848 = vmatpush1.msra.mxu0 0.0
        %1849 = vmatprep.subr.mxu0 0.0
        %1850 = vmatpush1.msra.mxu0 0.0
        %1851 = vmatprep.subr.mxu0 0.0
        %1852 = vmatpush1.msra.mxu0 0.0
        %1853 = vmatprep.subr.mxu0 0.0
        %1854 = vmatpush1.msra.mxu0 0.0
        %1855 = vmatprep.subr.mxu0 0.0
        %1856 = vmatpush1.msra.mxu0 0.0
        %1857 = vmatprep.subr.mxu0 0.0
        %1858 = vmatpush1.msra.mxu0 0.0
        %1859 = vmatprep.subr.mxu0 0.0
        %1860 = vmatpush1.msra.mxu0 0.0
        %1861 = vmatprep.subr.mxu0 0.0
        %1862 = vmatpush1.msra.mxu0 0.0
        %1863 = vmatprep.subr.mxu0 0.0
        %1864 = vmatpush1.msra.mxu0 0.0
        %1865 = vmatprep.subr.mxu0 0.0
        %1866 = vmatpush1.msra.mxu0 0.0
        %1867 = vmatprep.subr.mxu0 0.0
        %1868 = vmatpush1.msra.mxu0 0.0
        %1869 = vmatprep.subr.mxu0 0.0
        %1870 = vmatpush1.msra.mxu0 0.0
        %1871 = vmatprep.subr.mxu0 0.0
        %1872 = vmatpush1.msra.mxu0 0.0
        %1873 = vmatprep.subr.mxu0 0.0
        %1874 = vmatpush1.msra.mxu0 0.0
        %1875 = vmatprep.subr.mxu0 0.0
        %1876 = vmatpush1.msra.mxu0 0.0
        %1877 = vmatprep.subr.mxu0 0.0
        %1878 = vmatpush1.msra.mxu0 0.0
        %1879 = vmatprep.subr.mxu0 0.0
        %1880 = vmatpush1.msra.mxu0 0.0
        %1881 = vmatprep.subr.mxu0 0.0
        %1882 = vmatpush1.msra.mxu0 0.0
        %1883 = vmatprep.subr.mxu0 0.0
        %1884 = vmatpush1.msra.mxu0 0.0
        %1885 = vmatprep.subr.mxu0 0.0
        %1886 = vmatpush1.msra.mxu0 0.0
        %1887 = vmatprep.subr.mxu0 0.0
        %1888 = vmatpush1.msra.mxu0 0.0
        %1889 = vmatprep.subr.mxu0 0.0
        %1890 = vmatpush1.msra.mxu0 0.0
        %1891 = vmatprep.subr.mxu0 0.0
        %1892 = vmatpush1.msra.mxu0 0.0
        %1893 = vmatprep.subr.mxu0 0.0
        %1894 = vmatpush1.msra.mxu0 0.0
        %1895 = vmatprep.subr.mxu0 0.0
        %1896 = vmatpush1.msra.mxu0 0.0
        %1897 = vmatprep.subr.mxu0 0.0
        %1898 = vmatpush1.msra.mxu0 0.0
        %1899 = vmatprep.subr.mxu0 0.0
        %1900 = vmatpush1.msra.mxu0 0.0
        %1901 = vmatprep.subr.mxu0 0.0
        %1902 = vmatpush1.msra.mxu0 0.0
        %1903 = vmatprep.subr.mxu0 0.0
        %1904 = vmatpush1.msra.mxu0 0.0
        %1905 = vmatprep.mubr.f32.mxu0 0.0
        %1906 = vmatmul.mubr.f32.gmra.mrb[0].mxu0 %v1839
        %v1907 = vpop.f32.mrb[0].mxu0
        %v1908 = vadd.f32 0.0, %v1907
        %v1909 = vpop.f32.mrb[0].mxu0
        %1910 = vdwg.mxu0
        %1912 = vrot.lane.b32.xlu0 %v920, 96
        %v1913 = vpop.permute.xlu0 %1912
        %v1916 = vsel %vm933, %v616, 0
        %1918 = vmatprep.subr.mxu0 0.0
        %1919 = vmatpush1.msra.mxu0 %v1913
        %1920 = vmatprep.subr.mxu0 0.0
        %1921 = vmatpush1.msra.mxu0 0.0
        %1922 = vmatprep.subr.mxu0 0.0
        %1923 = vmatpush1.msra.mxu0 0.0
        %1924 = vmatprep.subr.mxu0 0.0
        %1925 = vmatpush1.msra.mxu0 0.0
        %1926 = vmatprep.subr.mxu0 0.0
        %1927 = vmatpush1.msra.mxu0 0.0
        %1928 = vmatprep.subr.mxu0 0.0
        %1929 = vmatpush1.msra.mxu0 0.0
        %1930 = vmatprep.subr.mxu0 0.0
        %1931 = vmatpush1.msra.mxu0 0.0
        %1932 = vmatprep.subr.mxu0 0.0
        %1933 = vmatpush1.msra.mxu0 0.0
        %1934 = vmatprep.subr.mxu0 0.0
        %1935 = vmatpush1.msra.mxu0 0.0
        %1936 = vmatprep.subr.mxu0 0.0
        %1937 = vmatpush1.msra.mxu0 0.0
        %1938 = vmatprep.subr.mxu0 0.0
        %1939 = vmatpush1.msra.mxu0 0.0
        %1940 = vmatprep.subr.mxu0 0.0
        %1941 = vmatpush1.msra.mxu0 0.0
        %1942 = vmatprep.subr.mxu0 0.0
        %1943 = vmatpush1.msra.mxu0 0.0
        %1944 = vmatprep.subr.mxu0 0.0
        %1945 = vmatpush1.msra.mxu0 0.0
        %1946 = vmatprep.subr.mxu0 0.0
        %1947 = vmatpush1.msra.mxu0 0.0
        %1948 = vmatprep.subr.mxu0 0.0
        %1949 = vmatpush1.msra.mxu0 0.0
        %1950 = vmatprep.subr.mxu0 0.0
        %1951 = vmatpush1.msra.mxu0 0.0
        %1952 = vmatprep.subr.mxu0 0.0
        %1953 = vmatpush1.msra.mxu0 0.0
        %1954 = vmatprep.subr.mxu0 0.0
        %1955 = vmatpush1.msra.mxu0 0.0
        %1956 = vmatprep.subr.mxu0 0.0
        %1957 = vmatpush1.msra.mxu0 0.0
        %1958 = vmatprep.subr.mxu0 0.0
        %1959 = vmatpush1.msra.mxu0 0.0
        %1960 = vmatprep.subr.mxu0 0.0
        %1961 = vmatpush1.msra.mxu0 0.0
        %1962 = vmatprep.subr.mxu0 0.0
        %1963 = vmatpush1.msra.mxu0 0.0
        %1964 = vmatprep.subr.mxu0 0.0
        %1965 = vmatpush1.msra.mxu0 0.0
        %1966 = vmatprep.subr.mxu0 0.0
        %1967 = vmatpush1.msra.mxu0 0.0
        %1968 = vmatprep.subr.mxu0 0.0
        %1969 = vmatpush1.msra.mxu0 0.0
        %1970 = vmatprep.subr.mxu0 0.0
        %1971 = vmatpush1.msra.mxu0 0.0
        %1972 = vmatprep.subr.mxu0 0.0
        %1973 = vmatpush1.msra.mxu0 0.0
        %1974 = vmatprep.subr.mxu0 0.0
        %1975 = vmatpush1.msra.mxu0 0.0
        %1976 = vmatprep.subr.mxu0 0.0
        %1977 = vmatpush1.msra.mxu0 0.0
        %1978 = vmatprep.subr.mxu0 0.0
        %1979 = vmatpush1.msra.mxu0 0.0
        %1980 = vmatprep.subr.mxu0 0.0
        %1981 = vmatpush1.msra.mxu0 0.0
        %1982 = vmatprep.mubr.f32.mxu0 0.0
        %1983 = vmatmul.mubr.f32.gmra.mrb[0].mxu0 %v1916
        %v1984 = vpop.f32.mrb[0].mxu0
        %v1985 = vadd.f32 0.0, %v1984
        %v1986 = vpop.f32.mrb[0].mxu0
        %1987 = vdwg.mxu0
        %1989 = vrot.lane.b32.xlu0 %v925, 96
        %v1990 = vpop.permute.xlu0 %1989
        %v1993 = vsel %vm933, %v617, 0
        %1995 = vmatprep.subr.mxu0 0.0
        %1996 = vmatpush1.msra.mxu0 %v1990
        %1997 = vmatprep.subr.mxu0 0.0
        %1998 = vmatpush1.msra.mxu0 0.0
        %1999 = vmatprep.subr.mxu0 0.0
        %2000 = vmatpush1.msra.mxu0 0.0
        %2001 = vmatprep.subr.mxu0 0.0
        %2002 = vmatpush1.msra.mxu0 0.0
        %2003 = vmatprep.subr.mxu0 0.0
        %2004 = vmatpush1.msra.mxu0 0.0
        %2005 = vmatprep.subr.mxu0 0.0
        %2006 = vmatpush1.msra.mxu0 0.0
        %2007 = vmatprep.subr.mxu0 0.0
        %2008 = vmatpush1.msra.mxu0 0.0
        %2009 = vmatprep.subr.mxu0 0.0
        %2010 = vmatpush1.msra.mxu0 0.0
        %2011 = vmatprep.subr.mxu0 0.0
        %2012 = vmatpush1.msra.mxu0 0.0
        %2013 = vmatprep.subr.mxu0 0.0
        %2014 = vmatpush1.msra.mxu0 0.0
        %2015 = vmatprep.subr.mxu0 0.0
        %2016 = vmatpush1.msra.mxu0 0.0
        %2017 = vmatprep.subr.mxu0 0.0
        %2018 = vmatpush1.msra.mxu0 0.0
        %2019 = vmatprep.subr.mxu0 0.0
        %2020 = vmatpush1.msra.mxu0 0.0
        %2021 = vmatprep.subr.mxu0 0.0
        %2022 = vmatpush1.msra.mxu0 0.0
        %2023 = vmatprep.subr.mxu0 0.0
        %2024 = vmatpush1.msra.mxu0 0.0
        %2025 = vmatprep.subr.mxu0 0.0
        %2026 = vmatpush1.msra.mxu0 0.0
        %2027 = vmatprep.subr.mxu0 0.0
        %2028 = vmatpush1.msra.mxu0 0.0
        %2029 = vmatprep.subr.mxu0 0.0
        %2030 = vmatpush1.msra.mxu0 0.0
        %2031 = vmatprep.subr.mxu0 0.0
        %2032 = vmatpush1.msra.mxu0 0.0
        %2033 = vmatprep.subr.mxu0 0.0
        %2034 = vmatpush1.msra.mxu0 0.0
        %2035 = vmatprep.subr.mxu0 0.0
        %2036 = vmatpush1.msra.mxu0 0.0
        %2037 = vmatprep.subr.mxu0 0.0
        %2038 = vmatpush1.msra.mxu0 0.0
        %2039 = vmatprep.subr.mxu0 0.0
        %2040 = vmatpush1.msra.mxu0 0.0
        %2041 = vmatprep.subr.mxu0 0.0
        %2042 = vmatpush1.msra.mxu0 0.0
        %2043 = vmatprep.subr.mxu0 0.0
        %2044 = vmatpush1.msra.mxu0 0.0
        %2045 = vmatprep.subr.mxu0 0.0
        %2046 = vmatpush1.msra.mxu0 0.0
        %2047 = vmatprep.subr.mxu0 0.0
        %2048 = vmatpush1.msra.mxu0 0.0
        %2049 = vmatprep.subr.mxu0 0.0
        %2050 = vmatpush1.msra.mxu0 0.0
        %2051 = vmatprep.subr.mxu0 0.0
        %2052 = vmatpush1.msra.mxu0 0.0
        %2053 = vmatprep.subr.mxu0 0.0
        %2054 = vmatpush1.msra.mxu0 0.0
        %2055 = vmatprep.subr.mxu0 0.0
        %2056 = vmatpush1.msra.mxu0 0.0
        %2057 = vmatprep.subr.mxu0 0.0
        %2058 = vmatpush1.msra.mxu0 0.0
        %2059 = vmatprep.mubr.f32.mxu0 0.0
        %2060 = vmatmul.mubr.f32.gmra.mrb[0].mxu0 %v1993
        %v2061 = vpop.f32.mrb[0].mxu0
        %v2062 = vadd.f32 0.0, %v2061
        %v2063 = vpop.f32.mrb[0].mxu0
        %2064 = vdwg.mxu0
        %2066 = vrot.lane.b32.xlu0 %v930, 96
        %v2067 = vpop.permute.xlu0 %2066
        %v2070 = vsel %vm933, %v618, 0
        %2072 = vmatprep.subr.mxu0 0.0
        %2073 = vmatpush1.msra.mxu0 %v2067
        %2074 = vmatprep.subr.mxu0 0.0
        %2075 = vmatpush1.msra.mxu0 0.0
        %2076 = vmatprep.subr.mxu0 0.0
        %2077 = vmatpush1.msra.mxu0 0.0
        %2078 = vmatprep.subr.mxu0 0.0
        %2079 = vmatpush1.msra.mxu0 0.0
        %2080 = vmatprep.subr.mxu0 0.0
        %2081 = vmatpush1.msra.mxu0 0.0
        %2082 = vmatprep.subr.mxu0 0.0
        %2083 = vmatpush1.msra.mxu0 0.0
        %2084 = vmatprep.subr.mxu0 0.0
        %2085 = vmatpush1.msra.mxu0 0.0
        %2086 = vmatprep.subr.mxu0 0.0
        %2087 = vmatpush1.msra.mxu0 0.0
        %2088 = vmatprep.subr.mxu0 0.0
        %2089 = vmatpush1.msra.mxu0 0.0
        %2090 = vmatprep.subr.mxu0 0.0
        %2091 = vmatpush1.msra.mxu0 0.0
        %2092 = vmatprep.subr.mxu0 0.0
        %2093 = vmatpush1.msra.mxu0 0.0
        %2094 = vmatprep.subr.mxu0 0.0
        %2095 = vmatpush1.msra.mxu0 0.0
        %2096 = vmatprep.subr.mxu0 0.0
        %2097 = vmatpush1.msra.mxu0 0.0
        %2098 = vmatprep.subr.mxu0 0.0
        %2099 = vmatpush1.msra.mxu0 0.0
        %2100 = vmatprep.subr.mxu0 0.0
        %2101 = vmatpush1.msra.mxu0 0.0
        %2102 = vmatprep.subr.mxu0 0.0
        %2103 = vmatpush1.msra.mxu0 0.0
        %2104 = vmatprep.subr.mxu0 0.0
        %2105 = vmatpush1.msra.mxu0 0.0
        %2106 = vmatprep.subr.mxu0 0.0
        %2107 = vmatpush1.msra.mxu0 0.0
        %2108 = vmatprep.subr.mxu0 0.0
        %2109 = vmatpush1.msra.mxu0 0.0
        %2110 = vmatprep.subr.mxu0 0.0
        %2111 = vmatpush1.msra.mxu0 0.0
        %2112 = vmatprep.subr.mxu0 0.0
        %2113 = vmatpush1.msra.mxu0 0.0
        %2114 = vmatprep.subr.mxu0 0.0
        %2115 = vmatpush1.msra.mxu0 0.0
        %2116 = vmatprep.subr.mxu0 0.0
        %2117 = vmatpush1.msra.mxu0 0.0
        %2118 = vmatprep.subr.mxu0 0.0
        %2119 = vmatpush1.msra.mxu0 0.0
        %2120 = vmatprep.subr.mxu0 0.0
        %2121 = vmatpush1.msra.mxu0 0.0
        %2122 = vmatprep.subr.mxu0 0.0
        %2123 = vmatpush1.msra.mxu0 0.0
        %2124 = vmatprep.subr.mxu0 0.0
        %2125 = vmatpush1.msra.mxu0 0.0
        %2126 = vmatprep.subr.mxu0 0.0
        %2127 = vmatpush1.msra.mxu0 0.0
        %2128 = vmatprep.subr.mxu0 0.0
        %2129 = vmatpush1.msra.mxu0 0.0
        %2130 = vmatprep.subr.mxu0 0.0
        %2131 = vmatpush1.msra.mxu0 0.0
        %2132 = vmatprep.subr.mxu0 0.0
        %2133 = vmatpush1.msra.mxu0 0.0
        %2134 = vmatprep.subr.mxu0 0.0
        %2135 = vmatpush1.msra.mxu0 0.0
        %2136 = vmatprep.mubr.f32.mxu0 0.0
        %2137 = vmatmul.mubr.f32.gmra.mrb[0].mxu0 %v2070
        %v2138 = vpop.f32.mrb[0].mxu0
        %v2139 = vadd.f32 0.0, %v2138
        %v2140 = vpop.f32.mrb[0].mxu0
        %2141 = vdwg.mxu0
        %v2142 = vadd.f32 %v1518, %v1600
        %v2143 = vadd.f32 %v1519, %v1677
        %v2144 = vadd.f32 %v1520, %v1754
        %v2145 = vadd.f32 %v1521, %v1831
        %v2146 = vadd.f32 %v1522, %v1908
        %v2147 = vadd.f32 %v1523, %v1985
        %v2148 = vadd.f32 %v1524, %v2062
        %v2149 = vadd.f32 %v1525, %v2139
        %2150 = vrot.lane.b32.xlu0 %v895, 64
        %v2151 = vpop.permute.xlu0 %2150
        %v2154 = vsel %vm933, %v643, 0
        %2156 = vmatprep.subr.mxu0 0.0
        %2157 = vmatpush1.msra.mxu0 %v2151
        %2158 = vmatprep.subr.mxu0 0.0
        %2159 = vmatpush1.msra.mxu0 0.0
        %2160 = vmatprep.subr.mxu0 0.0
        %2161 = vmatpush1.msra.mxu0 0.0
        %2162 = vmatprep.subr.mxu0 0.0
        %2163 = vmatpush1.msra.mxu0 0.0
        %2164 = vmatprep.subr.mxu0 0.0
        %2165 = vmatpush1.msra.mxu0 0.0
        %2166 = vmatprep.subr.mxu0 0.0
        %2167 = vmatpush1.msra.mxu0 0.0
        %2168 = vmatprep.subr.mxu0 0.0
        %2169 = vmatpush1.msra.mxu0 0.0
        %2170 = vmatprep.subr.mxu0 0.0
        %2171 = vmatpush1.msra.mxu0 0.0
        %2172 = vmatprep.subr.mxu0 0.0
        %2173 = vmatpush1.msra.mxu0 0.0
        %2174 = vmatprep.subr.mxu0 0.0
        %2175 = vmatpush1.msra.mxu0 0.0
        %2176 = vmatprep.subr.mxu0 0.0
        %2177 = vmatpush1.msra.mxu0 0.0
        %2178 = vmatprep.subr.mxu0 0.0
        %2179 = vmatpush1.msra.mxu0 0.0
        %2180 = vmatprep.subr.mxu0 0.0
        %2181 = vmatpush1.msra.mxu0 0.0
        %2182 = vmatprep.subr.mxu0 0.0
        %2183 = vmatpush1.msra.mxu0 0.0
        %2184 = vmatprep.subr.mxu0 0.0
        %2185 = vmatpush1.msra.mxu0 0.0
        %2186 = vmatprep.subr.mxu0 0.0
        %2187 = vmatpush1.msra.mxu0 0.0
        %2188 = vmatprep.subr.mxu0 0.0
        %2189 = vmatpush1.msra.mxu0 0.0
        %2190 = vmatprep.subr.mxu0 0.0
        %2191 = vmatpush1.msra.mxu0 0.0
        %2192 = vmatprep.subr.mxu0 0.0
        %2193 = vmatpush1.msra.mxu0 0.0
        %2194 = vmatprep.subr.mxu0 0.0
        %2195 = vmatpush1.msra.mxu0 0.0
        %2196 = vmatprep.subr.mxu0 0.0
        %2197 = vmatpush1.msra.mxu0 0.0
        %2198 = vmatprep.subr.mxu0 0.0
        %2199 = vmatpush1.msra.mxu0 0.0
        %2200 = vmatprep.subr.mxu0 0.0
        %2201 = vmatpush1.msra.mxu0 0.0
        %2202 = vmatprep.subr.mxu0 0.0
        %2203 = vmatpush1.msra.mxu0 0.0
        %2204 = vmatprep.subr.mxu0 0.0
        %2205 = vmatpush1.msra.mxu0 0.0
        %2206 = vmatprep.subr.mxu0 0.0
        %2207 = vmatpush1.msra.mxu0 0.0
        %2208 = vmatprep.subr.mxu0 0.0
        %2209 = vmatpush1.msra.mxu0 0.0
        %2210 = vmatprep.subr.mxu0 0.0
        %2211 = vmatpush1.msra.mxu0 0.0
        %2212 = vmatprep.subr.mxu0 0.0
        %2213 = vmatpush1.msra.mxu0 0.0
        %2214 = vmatprep.subr.mxu0 0.0
        %2215 = vmatpush1.msra.mxu0 0.0
        %2216 = vmatprep.subr.mxu0 0.0
        %2217 = vmatpush1.msra.mxu0 0.0
        %2218 = vmatprep.subr.mxu0 0.0
        %2219 = vmatpush1.msra.mxu0 0.0
        %2220 = vmatprep.mubr.f32.mxu0 0.0
        %2221 = vmatmul.mubr.f32.gmra.mrb[0].mxu0 %v2154
        %v2222 = vpop.f32.mrb[0].mxu0
        %v2223 = vadd.f32 0.0, %v2222
        %v2224 = vpop.f32.mrb[0].mxu0
        %2225 = vdwg.mxu0
        %2226 = vrot.lane.b32.xlu0 %v900, 64
        %v2227 = vpop.permute.xlu0 %2226
        %v2230 = vsel %vm933, %v644, 0
        %2232 = vmatprep.subr.mxu0 0.0
        %2233 = vmatpush1.msra.mxu0 %v2227
        %2234 = vmatprep.subr.mxu0 0.0
        %2235 = vmatpush1.msra.mxu0 0.0
        %2236 = vmatprep.subr.mxu0 0.0
        %2237 = vmatpush1.msra.mxu0 0.0
        %2238 = vmatprep.subr.mxu0 0.0
        %2239 = vmatpush1.msra.mxu0 0.0
        %2240 = vmatprep.subr.mxu0 0.0
        %2241 = vmatpush1.msra.mxu0 0.0
        %2242 = vmatprep.subr.mxu0 0.0
        %2243 = vmatpush1.msra.mxu0 0.0
        %2244 = vmatprep.subr.mxu0 0.0
        %2245 = vmatpush1.msra.mxu0 0.0
        %2246 = vmatprep.subr.mxu0 0.0
        %2247 = vmatpush1.msra.mxu0 0.0
        %2248 = vmatprep.subr.mxu0 0.0
        %2249 = vmatpush1.msra.mxu0 0.0
        %2250 = vmatprep.subr.mxu0 0.0
        %2251 = vmatpush1.msra.mxu0 0.0
        %2252 = vmatprep.subr.mxu0 0.0
        %2253 = vmatpush1.msra.mxu0 0.0
        %2254 = vmatprep.subr.mxu0 0.0
        %2255 = vmatpush1.msra.mxu0 0.0
        %2256 = vmatprep.subr.mxu0 0.0
        %2257 = vmatpush1.msra.mxu0 0.0
        %2258 = vmatprep.subr.mxu0 0.0
        %2259 = vmatpush1.msra.mxu0 0.0
        %2260 = vmatprep.subr.mxu0 0.0
        %2261 = vmatpush1.msra.mxu0 0.0
        %2262 = vmatprep.subr.mxu0 0.0
        %2263 = vmatpush1.msra.mxu0 0.0
        %2264 = vmatprep.subr.mxu0 0.0
        %2265 = vmatpush1.msra.mxu0 0.0
        %2266 = vmatprep.subr.mxu0 0.0
        %2267 = vmatpush1.msra.mxu0 0.0
        %2268 = vmatprep.subr.mxu0 0.0
        %2269 = vmatpush1.msra.mxu0 0.0
        %2270 = vmatprep.subr.mxu0 0.0
        %2271 = vmatpush1.msra.mxu0 0.0
        %2272 = vmatprep.subr.mxu0 0.0
        %2273 = vmatpush1.msra.mxu0 0.0
        %2274 = vmatprep.subr.mxu0 0.0
        %2275 = vmatpush1.msra.mxu0 0.0
        %2276 = vmatprep.subr.mxu0 0.0
        %2277 = vmatpush1.msra.mxu0 0.0
        %2278 = vmatprep.subr.mxu0 0.0
        %2279 = vmatpush1.msra.mxu0 0.0
        %2280 = vmatprep.subr.mxu0 0.0
        %2281 = vmatpush1.msra.mxu0 0.0
        %2282 = vmatprep.subr.mxu0 0.0
        %2283 = vmatpush1.msra.mxu0 0.0
        %2284 = vmatprep.subr.mxu0 0.0
        %2285 = vmatpush1.msra.mxu0 0.0
        %2286 = vmatprep.subr.mxu0 0.0
        %2287 = vmatpush1.msra.mxu0 0.0
        %2288 = vmatprep.subr.mxu0 0.0
        %2289 = vmatpush1.msra.mxu0 0.0
        %2290 = vmatprep.subr.mxu0 0.0
        %2291 = vmatpush1.msra.mxu0 0.0
        %2292 = vmatprep.subr.mxu0 0.0
        %2293 = vmatpush1.msra.mxu0 0.0
        %2294 = vmatprep.subr.mxu0 0.0
        %2295 = vmatpush1.msra.mxu0 0.0
        %2296 = vmatprep.mubr.f32.mxu0 0.0
        %2297 = vmatmul.mubr.f32.gmra.mrb[0].mxu0 %v2230
        %v2298 = vpop.f32.mrb[0].mxu0
        %v2299 = vadd.f32 0.0, %v2298
        %v2300 = vpop.f32.mrb[0].mxu0
        %2301 = vdwg.mxu0
        %2302 = vrot.lane.b32.xlu0 %v905, 64
        %v2303 = vpop.permute.xlu0 %2302
        %v2306 = vsel %vm933, %v645, 0
        %2308 = vmatprep.subr.mxu0 0.0
        %2309 = vmatpush1.msra.mxu0 %v2303
        %2310 = vmatprep.subr.mxu0 0.0
        %2311 = vmatpush1.msra.mxu0 0.0
        %2312 = vmatprep.subr.mxu0 0.0
        %2313 = vmatpush1.msra.mxu0 0.0
        %2314 = vmatprep.subr.mxu0 0.0
        %2315 = vmatpush1.msra.mxu0 0.0
        %2316 = vmatprep.subr.mxu0 0.0
        %2317 = vmatpush1.msra.mxu0 0.0
        %2318 = vmatprep.subr.mxu0 0.0
        %2319 = vmatpush1.msra.mxu0 0.0
        %2320 = vmatprep.subr.mxu0 0.0
        %2321 = vmatpush1.msra.mxu0 0.0
        %2322 = vmatprep.subr.mxu0 0.0
        %2323 = vmatpush1.msra.mxu0 0.0
        %2324 = vmatprep.subr.mxu0 0.0
        %2325 = vmatpush1.msra.mxu0 0.0
        %2326 = vmatprep.subr.mxu0 0.0
        %2327 = vmatpush1.msra.mxu0 0.0
        %2328 = vmatprep.subr.mxu0 0.0
        %2329 = vmatpush1.msra.mxu0 0.0
        %2330 = vmatprep.subr.mxu0 0.0
        %2331 = vmatpush1.msra.mxu0 0.0
        %2332 = vmatprep.subr.mxu0 0.0
        %2333 = vmatpush1.msra.mxu0 0.0
        %2334 = vmatprep.subr.mxu0 0.0
        %2335 = vmatpush1.msra.mxu0 0.0
        %2336 = vmatprep.subr.mxu0 0.0
        %2337 = vmatpush1.msra.mxu0 0.0
        %2338 = vmatprep.subr.mxu0 0.0
        %2339 = vmatpush1.msra.mxu0 0.0
        %2340 = vmatprep.subr.mxu0 0.0
        %2341 = vmatpush1.msra.mxu0 0.0
        %2342 = vmatprep.subr.mxu0 0.0
        %2343 = vmatpush1.msra.mxu0 0.0
        %2344 = vmatprep.subr.mxu0 0.0
        %2345 = vmatpush1.msra.mxu0 0.0
        %2346 = vmatprep.subr.mxu0 0.0
        %2347 = vmatpush1.msra.mxu0 0.0
        %2348 = vmatprep.subr.mxu0 0.0
        %2349 = vmatpush1.msra.mxu0 0.0
        %2350 = vmatprep.subr.mxu0 0.0
        %2351 = vmatpush1.msra.mxu0 0.0
        %2352 = vmatprep.subr.mxu0 0.0
        %2353 = vmatpush1.msra.mxu0 0.0
        %2354 = vmatprep.subr.mxu0 0.0
        %2355 = vmatpush1.msra.mxu0 0.0
        %2356 = vmatprep.subr.mxu0 0.0
        %2357 = vmatpush1.msra.mxu0 0.0
        %2358 = vmatprep.subr.mxu0 0.0
        %2359 = vmatpush1.msra.mxu0 0.0
        %2360 = vmatprep.subr.mxu0 0.0
        %2361 = vmatpush1.msra.mxu0 0.0
        %2362 = vmatprep.subr.mxu0 0.0
        %2363 = vmatpush1.msra.mxu0 0.0
        %2364 = vmatprep.subr.mxu0 0.0
        %2365 = vmatpush1.msra.mxu0 0.0
        %2366 = vmatprep.subr.mxu0 0.0
        %2367 = vmatpush1.msra.mxu0 0.0
        %2368 = vmatprep.subr.mxu0 0.0
        %2369 = vmatpush1.msra.mxu0 0.0
        %2370 = vmatprep.subr.mxu0 0.0
        %2371 = vmatpush1.msra.mxu0 0.0
        %2372 = vmatprep.mubr.f32.mxu0 0.0
        %2373 = vmatmul.mubr.f32.gmra.mrb[0].mxu0 %v2306
        %v2374 = vpop.f32.mrb[0].mxu0
        %v2375 = vadd.f32 0.0, %v2374
        %v2376 = vpop.f32.mrb[0].mxu0
        %2377 = vdwg.mxu0
        %2378 = vrot.lane.b32.xlu0 %v910, 64
        %v2379 = vpop.permute.xlu0 %2378
        %v2382 = vsel %vm933, %v646, 0
        %2384 = vmatprep.subr.mxu0 0.0
        %2385 = vmatpush1.msra.mxu0 %v2379
        %2386 = vmatprep.subr.mxu0 0.0
        %2387 = vmatpush1.msra.mxu0 0.0
        %2388 = vmatprep.subr.mxu0 0.0
        %2389 = vmatpush1.msra.mxu0 0.0
        %2390 = vmatprep.subr.mxu0 0.0
        %2391 = vmatpush1.msra.mxu0 0.0
        %2392 = vmatprep.subr.mxu0 0.0
        %2393 = vmatpush1.msra.mxu0 0.0
        %2394 = vmatprep.subr.mxu0 0.0
        %2395 = vmatpush1.msra.mxu0 0.0
        %2396 = vmatprep.subr.mxu0 0.0
        %2397 = vmatpush1.msra.mxu0 0.0
        %2398 = vmatprep.subr.mxu0 0.0
        %2399 = vmatpush1.msra.mxu0 0.0
        %2400 = vmatprep.subr.mxu0 0.0
        %2401 = vmatpush1.msra.mxu0 0.0
        %2402 = vmatprep.subr.mxu0 0.0
        %2403 = vmatpush1.msra.mxu0 0.0
        %2404 = vmatprep.subr.mxu0 0.0
        %2405 = vmatpush1.msra.mxu0 0.0
        %2406 = vmatprep.subr.mxu0 0.0
        %2407 = vmatpush1.msra.mxu0 0.0
        %2408 = vmatprep.subr.mxu0 0.0
        %2409 = vmatpush1.msra.mxu0 0.0
        %2410 = vmatprep.subr.mxu0 0.0
        %2411 = vmatpush1.msra.mxu0 0.0
        %2412 = vmatprep.subr.mxu0 0.0
        %2413 = vmatpush1.msra.mxu0 0.0
        %2414 = vmatprep.subr.mxu0 0.0
        %2415 = vmatpush1.msra.mxu0 0.0
        %2416 = vmatprep.subr.mxu0 0.0
        %2417 = vmatpush1.msra.mxu0 0.0
        %2418 = vmatprep.subr.mxu0 0.0
        %2419 = vmatpush1.msra.mxu0 0.0
        %2420 = vmatprep.subr.mxu0 0.0
        %2421 = vmatpush1.msra.mxu0 0.0
        %2422 = vmatprep.subr.mxu0 0.0
        %2423 = vmatpush1.msra.mxu0 0.0
        %2424 = vmatprep.subr.mxu0 0.0
        %2425 = vmatpush1.msra.mxu0 0.0
        %2426 = vmatprep.subr.mxu0 0.0
        %2427 = vmatpush1.msra.mxu0 0.0
        %2428 = vmatprep.subr.mxu0 0.0
        %2429 = vmatpush1.msra.mxu0 0.0
        %2430 = vmatprep.subr.mxu0 0.0
        %2431 = vmatpush1.msra.mxu0 0.0
        %2432 = vmatprep.subr.mxu0 0.0
        %2433 = vmatpush1.msra.mxu0 0.0
        %2434 = vmatprep.subr.mxu0 0.0
        %2435 = vmatpush1.msra.mxu0 0.0
        %2436 = vmatprep.subr.mxu0 0.0
        %2437 = vmatpush1.msra.mxu0 0.0
        %2438 = vmatprep.subr.mxu0 0.0
        %2439 = vmatpush1.msra.mxu0 0.0
        %2440 = vmatprep.subr.mxu0 0.0
        %2441 = vmatpush1.msra.mxu0 0.0
        %2442 = vmatprep.subr.mxu0 0.0
        %2443 = vmatpush1.msra.mxu0 0.0
        %2444 = vmatprep.subr.mxu0 0.0
        %2445 = vmatpush1.msra.mxu0 0.0
        %2446 = vmatprep.subr.mxu0 0.0
        %2447 = vmatpush1.msra.mxu0 0.0
        %2448 = vmatprep.mubr.f32.mxu0 0.0
        %2449 = vmatmul.mubr.f32.gmra.mrb[0].mxu0 %v2382
        %v2450 = vpop.f32.mrb[0].mxu0
        %v2451 = vadd.f32 0.0, %v2450
        %v2452 = vpop.f32.mrb[0].mxu0
        %2453 = vdwg.mxu0
        %2454 = vrot.lane.b32.xlu0 %v915, 64
        %v2455 = vpop.permute.xlu0 %2454
        %v2458 = vsel %vm933, %v647, 0
        %2460 = vmatprep.subr.mxu0 0.0
        %2461 = vmatpush1.msra.mxu0 %v2455
        %2462 = vmatprep.subr.mxu0 0.0
        %2463 = vmatpush1.msra.mxu0 0.0
        %2464 = vmatprep.subr.mxu0 0.0
        %2465 = vmatpush1.msra.mxu0 0.0
        %2466 = vmatprep.subr.mxu0 0.0
        %2467 = vmatpush1.msra.mxu0 0.0
        %2468 = vmatprep.subr.mxu0 0.0
        %2469 = vmatpush1.msra.mxu0 0.0
        %2470 = vmatprep.subr.mxu0 0.0
        %2471 = vmatpush1.msra.mxu0 0.0
        %2472 = vmatprep.subr.mxu0 0.0
        %2473 = vmatpush1.msra.mxu0 0.0
        %2474 = vmatprep.subr.mxu0 0.0
        %2475 = vmatpush1.msra.mxu0 0.0
        %2476 = vmatprep.subr.mxu0 0.0
        %2477 = vmatpush1.msra.mxu0 0.0
        %2478 = vmatprep.subr.mxu0 0.0
        %2479 = vmatpush1.msra.mxu0 0.0
        %2480 = vmatprep.subr.mxu0 0.0
        %2481 = vmatpush1.msra.mxu0 0.0
        %2482 = vmatprep.subr.mxu0 0.0
        %2483 = vmatpush1.msra.mxu0 0.0
        %2484 = vmatprep.subr.mxu0 0.0
        %2485 = vmatpush1.msra.mxu0 0.0
        %2486 = vmatprep.subr.mxu0 0.0
        %2487 = vmatpush1.msra.mxu0 0.0
        %2488 = vmatprep.subr.mxu0 0.0
        %2489 = vmatpush1.msra.mxu0 0.0
        %2490 = vmatprep.subr.mxu0 0.0
        %2491 = vmatpush1.msra.mxu0 0.0
        %2492 = vmatprep.subr.mxu0 0.0
        %2493 = vmatpush1.msra.mxu0 0.0
        %2494 = vmatprep.subr.mxu0 0.0
        %2495 = vmatpush1.msra.mxu0 0.0
        %2496 = vmatprep.subr.mxu0 0.0
        %2497 = vmatpush1.msra.mxu0 0.0
        %2498 = vmatprep.subr.mxu0 0.0
        %2499 = vmatpush1.msra.mxu0 0.0
        %2500 = vmatprep.subr.mxu0 0.0
        %2501 = vmatpush1.msra.mxu0 0.0
        %2502 = vmatprep.subr.mxu0 0.0
        %2503 = vmatpush1.msra.mxu0 0.0
        %2504 = vmatprep.subr.mxu0 0.0
        %2505 = vmatpush1.msra.mxu0 0.0
        %2506 = vmatprep.subr.mxu0 0.0
        %2507 = vmatpush1.msra.mxu0 0.0
        %2508 = vmatprep.subr.mxu0 0.0
        %2509 = vmatpush1.msra.mxu0 0.0
        %2510 = vmatprep.subr.mxu0 0.0
        %2511 = vmatpush1.msra.mxu0 0.0
        %2512 = vmatprep.subr.mxu0 0.0
        %2513 = vmatpush1.msra.mxu0 0.0
        %2514 = vmatprep.subr.mxu0 0.0
        %2515 = vmatpush1.msra.mxu0 0.0
        %2516 = vmatprep.subr.mxu0 0.0
        %2517 = vmatpush1.msra.mxu0 0.0
        %2518 = vmatprep.subr.mxu0 0.0
        %2519 = vmatpush1.msra.mxu0 0.0
        %2520 = vmatprep.subr.mxu0 0.0
        %2521 = vmatpush1.msra.mxu0 0.0
        %2522 = vmatprep.subr.mxu0 0.0
        %2523 = vmatpush1.msra.mxu0 0.0
        %2524 = vmatprep.mubr.f32.mxu0 0.0
        %2525 = vmatmul.mubr.f32.gmra.mrb[0].mxu0 %v2458
        %v2526 = vpop.f32.mrb[0].mxu0
        %v2527 = vadd.f32 0.0, %v2526
        %v2528 = vpop.f32.mrb[0].mxu0
        %2529 = vdwg.mxu0
        %2530 = vrot.lane.b32.xlu0 %v920, 64
        %v2531 = vpop.permute.xlu0 %2530
        %v2534 = vsel %vm933, %v648, 0
        %2536 = vmatprep.subr.mxu0 0.0
        %2537 = vmatpush1.msra.mxu0 %v2531
        %2538 = vmatprep.subr.mxu0 0.0
        %2539 = vmatpush1.msra.mxu0 0.0
        %2540 = vmatprep.subr.mxu0 0.0
        %2541 = vmatpush1.msra.mxu0 0.0
        %2542 = vmatprep.subr.mxu0 0.0
        %2543 = vmatpush1.msra.mxu0 0.0
        %2544 = vmatprep.subr.mxu0 0.0
        %2545 = vmatpush1.msra.mxu0 0.0
        %2546 = vmatprep.subr.mxu0 0.0
        %2547 = vmatpush1.msra.mxu0 0.0
        %2548 = vmatprep.subr.mxu0 0.0
        %2549 = vmatpush1.msra.mxu0 0.0
        %2550 = vmatprep.subr.mxu0 0.0
        %2551 = vmatpush1.msra.mxu0 0.0
        %2552 = vmatprep.subr.mxu0 0.0
        %2553 = vmatpush1.msra.mxu0 0.0
        %2554 = vmatprep.subr.mxu0 0.0
        %2555 = vmatpush1.msra.mxu0 0.0
        %2556 = vmatprep.subr.mxu0 0.0
        %2557 = vmatpush1.msra.mxu0 0.0
        %2558 = vmatprep.subr.mxu0 0.0
        %2559 = vmatpush1.msra.mxu0 0.0
        %2560 = vmatprep.subr.mxu0 0.0
        %2561 = vmatpush1.msra.mxu0 0.0
        %2562 = vmatprep.subr.mxu0 0.0
        %2563 = vmatpush1.msra.mxu0 0.0
        %2564 = vmatprep.subr.mxu0 0.0
        %2565 = vmatpush1.msra.mxu0 0.0
        %2566 = vmatprep.subr.mxu0 0.0
        %2567 = vmatpush1.msra.mxu0 0.0
        %2568 = vmatprep.subr.mxu0 0.0
        %2569 = vmatpush1.msra.mxu0 0.0
        %2570 = vmatprep.subr.mxu0 0.0
        %2571 = vmatpush1.msra.mxu0 0.0
        %2572 = vmatprep.subr.mxu0 0.0
        %2573 = vmatpush1.msra.mxu0 0.0
        %2574 = vmatprep.subr.mxu0 0.0
        %2575 = vmatpush1.msra.mxu0 0.0
        %2576 = vmatprep.subr.mxu0 0.0
        %2577 = vmatpush1.msra.mxu0 0.0
        %2578 = vmatprep.subr.mxu0 0.0
        %2579 = vmatpush1.msra.mxu0 0.0
        %2580 = vmatprep.subr.mxu0 0.0
        %2581 = vmatpush1.msra.mxu0 0.0
        %2582 = vmatprep.subr.mxu0 0.0
        %2583 = vmatpush1.msra.mxu0 0.0
        %2584 = vmatprep.subr.mxu0 0.0
        %2585 = vmatpush1.msra.mxu0 0.0
        %2586 = vmatprep.subr.mxu0 0.0
        %2587 = vmatpush1.msra.mxu0 0.0
        %2588 = vmatprep.subr.mxu0 0.0
        %2589 = vmatpush1.msra.mxu0 0.0
        %2590 = vmatprep.subr.mxu0 0.0
        %2591 = vmatpush1.msra.mxu0 0.0
        %2592 = vmatprep.subr.mxu0 0.0
        %2593 = vmatpush1.msra.mxu0 0.0
        %2594 = vmatprep.subr.mxu0 0.0
        %2595 = vmatpush1.msra.mxu0 0.0
        %2596 = vmatprep.subr.mxu0 0.0
        %2597 = vmatpush1.msra.mxu0 0.0
        %2598 = vmatprep.subr.mxu0 0.0
        %2599 = vmatpush1.msra.mxu0 0.0
        %2600 = vmatprep.mubr.f32.mxu0 0.0
        %2601 = vmatmul.mubr.f32.gmra.mrb[0].mxu0 %v2534
        %v2602 = vpop.f32.mrb[0].mxu0
        %v2603 = vadd.f32 0.0, %v2602
        %v2604 = vpop.f32.mrb[0].mxu0
        %2605 = vdwg.mxu0
        %2606 = vrot.lane.b32.xlu0 %v925, 64
        %v2607 = vpop.permute.xlu0 %2606
        %v2610 = vsel %vm933, %v649, 0
        %2612 = vmatprep.subr.mxu0 0.0
        %2613 = vmatpush1.msra.mxu0 %v2607
        %2614 = vmatprep.subr.mxu0 0.0
        %2615 = vmatpush1.msra.mxu0 0.0
        %2616 = vmatprep.subr.mxu0 0.0
        %2617 = vmatpush1.msra.mxu0 0.0
        %2618 = vmatprep.subr.mxu0 0.0
        %2619 = vmatpush1.msra.mxu0 0.0
        %2620 = vmatprep.subr.mxu0 0.0
        %2621 = vmatpush1.msra.mxu0 0.0
        %2622 = vmatprep.subr.mxu0 0.0
        %2623 = vmatpush1.msra.mxu0 0.0
        %2624 = vmatprep.subr.mxu0 0.0
        %2625 = vmatpush1.msra.mxu0 0.0
        %2626 = vmatprep.subr.mxu0 0.0
        %2627 = vmatpush1.msra.mxu0 0.0
        %2628 = vmatprep.subr.mxu0 0.0
        %2629 = vmatpush1.msra.mxu0 0.0
        %2630 = vmatprep.subr.mxu0 0.0
        %2631 = vmatpush1.msra.mxu0 0.0
        %2632 = vmatprep.subr.mxu0 0.0
        %2633 = vmatpush1.msra.mxu0 0.0
        %2634 = vmatprep.subr.mxu0 0.0
        %2635 = vmatpush1.msra.mxu0 0.0
        %2636 = vmatprep.subr.mxu0 0.0
        %2637 = vmatpush1.msra.mxu0 0.0
        %2638 = vmatprep.subr.mxu0 0.0
        %2639 = vmatpush1.msra.mxu0 0.0
        %2640 = vmatprep.subr.mxu0 0.0
        %2641 = vmatpush1.msra.mxu0 0.0
        %2642 = vmatprep.subr.mxu0 0.0
        %2643 = vmatpush1.msra.mxu0 0.0
        %2644 = vmatprep.subr.mxu0 0.0
        %2645 = vmatpush1.msra.mxu0 0.0
        %2646 = vmatprep.subr.mxu0 0.0
        %2647 = vmatpush1.msra.mxu0 0.0
        %2648 = vmatprep.subr.mxu0 0.0
        %2649 = vmatpush1.msra.mxu0 0.0
        %2650 = vmatprep.subr.mxu0 0.0
        %2651 = vmatpush1.msra.mxu0 0.0
        %2652 = vmatprep.subr.mxu0 0.0
        %2653 = vmatpush1.msra.mxu0 0.0
        %2654 = vmatprep.subr.mxu0 0.0
        %2655 = vmatpush1.msra.mxu0 0.0
        %2656 = vmatprep.subr.mxu0 0.0
        %2657 = vmatpush1.msra.mxu0 0.0
        %2658 = vmatprep.subr.mxu0 0.0
        %2659 = vmatpush1.msra.mxu0 0.0
        %2660 = vmatprep.subr.mxu0 0.0
        %2661 = vmatpush1.msra.mxu0 0.0
        %2662 = vmatprep.subr.mxu0 0.0
        %2663 = vmatpush1.msra.mxu0 0.0
        %2664 = vmatprep.subr.mxu0 0.0
        %2665 = vmatpush1.msra.mxu0 0.0
        %2666 = vmatprep.subr.mxu0 0.0
        %2667 = vmatpush1.msra.mxu0 0.0
        %2668 = vmatprep.subr.mxu0 0.0
        %2669 = vmatpush1.msra.mxu0 0.0
        %2670 = vmatprep.subr.mxu0 0.0
        %2671 = vmatpush1.msra.mxu0 0.0
        %2672 = vmatprep.subr.mxu0 0.0
        %2673 = vmatpush1.msra.mxu0 0.0
        %2674 = vmatprep.subr.mxu0 0.0
        %2675 = vmatpush1.msra.mxu0 0.0
        %2676 = vmatprep.mubr.f32.mxu0 0.0
        %2677 = vmatmul.mubr.f32.gmra.mrb[0].mxu0 %v2610
        %v2678 = vpop.f32.mrb[0].mxu0
        %v2679 = vadd.f32 0.0, %v2678
        %v2680 = vpop.f32.mrb[0].mxu0
        %2681 = vdwg.mxu0
        %2682 = vrot.lane.b32.xlu0 %v930, 64
        %v2683 = vpop.permute.xlu0 %2682
        %v2686 = vsel %vm933, %v650, 0
        %2688 = vmatprep.subr.mxu0 0.0
        %2689 = vmatpush1.msra.mxu0 %v2683
        %2690 = vmatprep.subr.mxu0 0.0
        %2691 = vmatpush1.msra.mxu0 0.0
        %2692 = vmatprep.subr.mxu0 0.0
        %2693 = vmatpush1.msra.mxu0 0.0
        %2694 = vmatprep.subr.mxu0 0.0
        %2695 = vmatpush1.msra.mxu0 0.0
        %2696 = vmatprep.subr.mxu0 0.0
        %2697 = vmatpush1.msra.mxu0 0.0
        %2698 = vmatprep.subr.mxu0 0.0
        %2699 = vmatpush1.msra.mxu0 0.0
        %2700 = vmatprep.subr.mxu0 0.0
        %2701 = vmatpush1.msra.mxu0 0.0
        %2702 = vmatprep.subr.mxu0 0.0
        %2703 = vmatpush1.msra.mxu0 0.0
        %2704 = vmatprep.subr.mxu0 0.0
        %2705 = vmatpush1.msra.mxu0 0.0
        %2706 = vmatprep.subr.mxu0 0.0
        %2707 = vmatpush1.msra.mxu0 0.0
        %2708 = vmatprep.subr.mxu0 0.0
        %2709 = vmatpush1.msra.mxu0 0.0
        %2710 = vmatprep.subr.mxu0 0.0
        %2711 = vmatpush1.msra.mxu0 0.0
        %2712 = vmatprep.subr.mxu0 0.0
        %2713 = vmatpush1.msra.mxu0 0.0
        %2714 = vmatprep.subr.mxu0 0.0
        %2715 = vmatpush1.msra.mxu0 0.0
        %2716 = vmatprep.subr.mxu0 0.0
        %2717 = vmatpush1.msra.mxu0 0.0
        %2718 = vmatprep.subr.mxu0 0.0
        %2719 = vmatpush1.msra.mxu0 0.0
        %2720 = vmatprep.subr.mxu0 0.0
        %2721 = vmatpush1.msra.mxu0 0.0
        %2722 = vmatprep.subr.mxu0 0.0
        %2723 = vmatpush1.msra.mxu0 0.0
        %2724 = vmatprep.subr.mxu0 0.0
        %2725 = vmatpush1.msra.mxu0 0.0
        %2726 = vmatprep.subr.mxu0 0.0
        %2727 = vmatpush1.msra.mxu0 0.0
        %2728 = vmatprep.subr.mxu0 0.0
        %2729 = vmatpush1.msra.mxu0 0.0
        %2730 = vmatprep.subr.mxu0 0.0
        %2731 = vmatpush1.msra.mxu0 0.0
        %2732 = vmatprep.subr.mxu0 0.0
        %2733 = vmatpush1.msra.mxu0 0.0
        %2734 = vmatprep.subr.mxu0 0.0
        %2735 = vmatpush1.msra.mxu0 0.0
        %2736 = vmatprep.subr.mxu0 0.0
        %2737 = vmatpush1.msra.mxu0 0.0
        %2738 = vmatprep.subr.mxu0 0.0
        %2739 = vmatpush1.msra.mxu0 0.0
        %2740 = vmatprep.subr.mxu0 0.0
        %2741 = vmatpush1.msra.mxu0 0.0
        %2742 = vmatprep.subr.mxu0 0.0
        %2743 = vmatpush1.msra.mxu0 0.0
        %2744 = vmatprep.subr.mxu0 0.0
        %2745 = vmatpush1.msra.mxu0 0.0
        %2746 = vmatprep.subr.mxu0 0.0
        %2747 = vmatpush1.msra.mxu0 0.0
        %2748 = vmatprep.subr.mxu0 0.0
        %2749 = vmatpush1.msra.mxu0 0.0
        %2750 = vmatprep.subr.mxu0 0.0
        %2751 = vmatpush1.msra.mxu0 0.0
        %2752 = vmatprep.mubr.f32.mxu0 0.0
        %2753 = vmatmul.mubr.f32.gmra.mrb[0].mxu0 %v2686
        %v2754 = vpop.f32.mrb[0].mxu0
        %v2755 = vadd.f32 0.0, %v2754
        %v2756 = vpop.f32.mrb[0].mxu0
        %2757 = vdwg.mxu0
        %v2758 = vadd.f32 %v2142, %v2223
        %v2759 = vadd.f32 %v2143, %v2299
        %v2760 = vadd.f32 %v2144, %v2375
        %v2761 = vadd.f32 %v2145, %v2451
        %v2762 = vadd.f32 %v2146, %v2527
        %v2763 = vadd.f32 %v2147, %v2603
        %v2764 = vadd.f32 %v2148, %v2679
        %v2765 = vadd.f32 %v2149, %v2755
        %2766 = vrot.lane.b32.xlu0 %v895, 32
        %v2767 = vpop.permute.xlu0 %2766
        %v2770 = vsel %vm933, %v675, 0
        %2772 = vmatprep.subr.mxu0 0.0
        %2773 = vmatpush1.msra.mxu0 %v2767
        %2774 = vmatprep.subr.mxu0 0.0
        %2775 = vmatpush1.msra.mxu0 0.0
        %2776 = vmatprep.subr.mxu0 0.0
        %2777 = vmatpush1.msra.mxu0 0.0
        %2778 = vmatprep.subr.mxu0 0.0
        %2779 = vmatpush1.msra.mxu0 0.0
        %2780 = vmatprep.subr.mxu0 0.0
        %2781 = vmatpush1.msra.mxu0 0.0
        %2782 = vmatprep.subr.mxu0 0.0
        %2783 = vmatpush1.msra.mxu0 0.0
        %2784 = vmatprep.subr.mxu0 0.0
        %2785 = vmatpush1.msra.mxu0 0.0
        %2786 = vmatprep.subr.mxu0 0.0
        %2787 = vmatpush1.msra.mxu0 0.0
        %2788 = vmatprep.subr.mxu0 0.0
        %2789 = vmatpush1.msra.mxu0 0.0
        %2790 = vmatprep.subr.mxu0 0.0
        %2791 = vmatpush1.msra.mxu0 0.0
        %2792 = vmatprep.subr.mxu0 0.0
        %2793 = vmatpush1.msra.mxu0 0.0
        %2794 = vmatprep.subr.mxu0 0.0
        %2795 = vmatpush1.msra.mxu0 0.0
        %2796 = vmatprep.subr.mxu0 0.0
        %2797 = vmatpush1.msra.mxu0 0.0
        %2798 = vmatprep.subr.mxu0 0.0
        %2799 = vmatpush1.msra.mxu0 0.0
        %2800 = vmatprep.subr.mxu0 0.0
        %2801 = vmatpush1.msra.mxu0 0.0
        %2802 = vmatprep.subr.mxu0 0.0
        %2803 = vmatpush1.msra.mxu0 0.0
        %2804 = vmatprep.subr.mxu0 0.0
        %2805 = vmatpush1.msra.mxu0 0.0
        %2806 = vmatprep.subr.mxu0 0.0
        %2807 = vmatpush1.msra.mxu0 0.0
        %2808 = vmatprep.subr.mxu0 0.0
        %2809 = vmatpush1.msra.mxu0 0.0
        %2810 = vmatprep.subr.mxu0 0.0
        %2811 = vmatpush1.msra.mxu0 0.0
        %2812 = vmatprep.subr.mxu0 0.0
        %2813 = vmatpush1.msra.mxu0 0.0
        %2814 = vmatprep.subr.mxu0 0.0
        %2815 = vmatpush1.msra.mxu0 0.0
        %2816 = vmatprep.subr.mxu0 0.0
        %2817 = vmatpush1.msra.mxu0 0.0
        %2818 = vmatprep.subr.mxu0 0.0
        %2819 = vmatpush1.msra.mxu0 0.0
        %2820 = vmatprep.subr.mxu0 0.0
        %2821 = vmatpush1.msra.mxu0 0.0
        %2822 = vmatprep.subr.mxu0 0.0
        %2823 = vmatpush1.msra.mxu0 0.0
        %2824 = vmatprep.subr.mxu0 0.0
        %2825 = vmatpush1.msra.mxu0 0.0
        %2826 = vmatprep.subr.mxu0 0.0
        %2827 = vmatpush1.msra.mxu0 0.0
        %2828 = vmatprep.subr.mxu0 0.0
        %2829 = vmatpush1.msra.mxu0 0.0
        %2830 = vmatprep.subr.mxu0 0.0
        %2831 = vmatpush1.msra.mxu0 0.0
        %2832 = vmatprep.subr.mxu0 0.0
        %2833 = vmatpush1.msra.mxu0 0.0
        %2834 = vmatprep.subr.mxu0 0.0
        %2835 = vmatpush1.msra.mxu0 0.0
        %2836 = vmatprep.mubr.f32.mxu0 0.0
        %2837 = vmatmul.mubr.f32.gmra.mrb[0].mxu0 %v2770
        %v2838 = vpop.f32.mrb[0].mxu0
        %v2839 = vadd.f32 0.0, %v2838
        %v2840 = vpop.f32.mrb[0].mxu0
        %2841 = vdwg.mxu0
        %2842 = vrot.lane.b32.xlu0 %v900, 32
        %v2843 = vpop.permute.xlu0 %2842
        %v2846 = vsel %vm933, %v676, 0
        %2848 = vmatprep.subr.mxu0 0.0
        %2849 = vmatpush1.msra.mxu0 %v2843
        %2850 = vmatprep.subr.mxu0 0.0
        %2851 = vmatpush1.msra.mxu0 0.0
        %2852 = vmatprep.subr.mxu0 0.0
        %2853 = vmatpush1.msra.mxu0 0.0
        %2854 = vmatprep.subr.mxu0 0.0
        %2855 = vmatpush1.msra.mxu0 0.0
        %2856 = vmatprep.subr.mxu0 0.0
        %2857 = vmatpush1.msra.mxu0 0.0
        %2858 = vmatprep.subr.mxu0 0.0
        %2859 = vmatpush1.msra.mxu0 0.0
        %2860 = vmatprep.subr.mxu0 0.0
        %2861 = vmatpush1.msra.mxu0 0.0
        %2862 = vmatprep.subr.mxu0 0.0
        %2863 = vmatpush1.msra.mxu0 0.0
        %2864 = vmatprep.subr.mxu0 0.0
        %2865 = vmatpush1.msra.mxu0 0.0
        %2866 = vmatprep.subr.mxu0 0.0
        %2867 = vmatpush1.msra.mxu0 0.0
        %2868 = vmatprep.subr.mxu0 0.0
        %2869 = vmatpush1.msra.mxu0 0.0
        %2870 = vmatprep.subr.mxu0 0.0
        %2871 = vmatpush1.msra.mxu0 0.0
        %2872 = vmatprep.subr.mxu0 0.0
        %2873 = vmatpush1.msra.mxu0 0.0
        %2874 = vmatprep.subr.mxu0 0.0
        %2875 = vmatpush1.msra.mxu0 0.0
        %2876 = vmatprep.subr.mxu0 0.0
        %2877 = vmatpush1.msra.mxu0 0.0
        %2878 = vmatprep.subr.mxu0 0.0
        %2879 = vmatpush1.msra.mxu0 0.0
        %2880 = vmatprep.subr.mxu0 0.0
        %2881 = vmatpush1.msra.mxu0 0.0
        %2882 = vmatprep.subr.mxu0 0.0
        %2883 = vmatpush1.msra.mxu0 0.0
        %2884 = vmatprep.subr.mxu0 0.0
        %2885 = vmatpush1.msra.mxu0 0.0
        %2886 = vmatprep.subr.mxu0 0.0
        %2887 = vmatpush1.msra.mxu0 0.0
        %2888 = vmatprep.subr.mxu0 0.0
        %2889 = vmatpush1.msra.mxu0 0.0
        %2890 = vmatprep.subr.mxu0 0.0
        %2891 = vmatpush1.msra.mxu0 0.0
        %2892 = vmatprep.subr.mxu0 0.0
        %2893 = vmatpush1.msra.mxu0 0.0
        %2894 = vmatprep.subr.mxu0 0.0
        %2895 = vmatpush1.msra.mxu0 0.0
        %2896 = vmatprep.subr.mxu0 0.0
        %2897 = vmatpush1.msra.mxu0 0.0
        %2898 = vmatprep.subr.mxu0 0.0
        %2899 = vmatpush1.msra.mxu0 0.0
        %2900 = vmatprep.subr.mxu0 0.0
        %2901 = vmatpush1.msra.mxu0 0.0
        %2902 = vmatprep.subr.mxu0 0.0
        %2903 = vmatpush1.msra.mxu0 0.0
        %2904 = vmatprep.subr.mxu0 0.0
        %2905 = vmatpush1.msra.mxu0 0.0
        %2906 = vmatprep.subr.mxu0 0.0
        %2907 = vmatpush1.msra.mxu0 0.0
        %2908 = vmatprep.subr.mxu0 0.0
        %2909 = vmatpush1.msra.mxu0 0.0
        %2910 = vmatprep.subr.mxu0 0.0
        %2911 = vmatpush1.msra.mxu0 0.0
        %2912 = vmatprep.mubr.f32.mxu0 0.0
        %2913 = vmatmul.mubr.f32.gmra.mrb[0].mxu0 %v2846
        %v2914 = vpop.f32.mrb[0].mxu0
        %v2915 = vadd.f32 0.0, %v2914
        %v2916 = vpop.f32.mrb[0].mxu0
        %2917 = vdwg.mxu0
        %2918 = vrot.lane.b32.xlu0 %v905, 32
        %v2919 = vpop.permute.xlu0 %2918
        %v2922 = vsel %vm933, %v677, 0
        %2924 = vmatprep.subr.mxu0 0.0
        %2925 = vmatpush1.msra.mxu0 %v2919
        %2926 = vmatprep.subr.mxu0 0.0
        %2927 = vmatpush1.msra.mxu0 0.0
        %2928 = vmatprep.subr.mxu0 0.0
        %2929 = vmatpush1.msra.mxu0 0.0
        %2930 = vmatprep.subr.mxu0 0.0
        %2931 = vmatpush1.msra.mxu0 0.0
        %2932 = vmatprep.subr.mxu0 0.0
        %2933 = vmatpush1.msra.mxu0 0.0
        %2934 = vmatprep.subr.mxu0 0.0
        %2935 = vmatpush1.msra.mxu0 0.0
        %2936 = vmatprep.subr.mxu0 0.0
        %2937 = vmatpush1.msra.mxu0 0.0
        %2938 = vmatprep.subr.mxu0 0.0
        %2939 = vmatpush1.msra.mxu0 0.0
        %2940 = vmatprep.subr.mxu0 0.0
        %2941 = vmatpush1.msra.mxu0 0.0
        %2942 = vmatprep.subr.mxu0 0.0
        %2943 = vmatpush1.msra.mxu0 0.0
        %2944 = vmatprep.subr.mxu0 0.0
        %2945 = vmatpush1.msra.mxu0 0.0
        %2946 = vmatprep.subr.mxu0 0.0
        %2947 = vmatpush1.msra.mxu0 0.0
        %2948 = vmatprep.subr.mxu0 0.0
        %2949 = vmatpush1.msra.mxu0 0.0
        %2950 = vmatprep.subr.mxu0 0.0
        %2951 = vmatpush1.msra.mxu0 0.0
        %2952 = vmatprep.subr.mxu0 0.0
        %2953 = vmatpush1.msra.mxu0 0.0
        %2954 = vmatprep.subr.mxu0 0.0
        %2955 = vmatpush1.msra.mxu0 0.0
        %2956 = vmatprep.subr.mxu0 0.0
        %2957 = vmatpush1.msra.mxu0 0.0
        %2958 = vmatprep.subr.mxu0 0.0
        %2959 = vmatpush1.msra.mxu0 0.0
        %2960 = vmatprep.subr.mxu0 0.0
        %2961 = vmatpush1.msra.mxu0 0.0
        %2962 = vmatprep.subr.mxu0 0.0
        %2963 = vmatpush1.msra.mxu0 0.0
        %2964 = vmatprep.subr.mxu0 0.0
        %2965 = vmatpush1.msra.mxu0 0.0
        %2966 = vmatprep.subr.mxu0 0.0
        %2967 = vmatpush1.msra.mxu0 0.0
        %2968 = vmatprep.subr.mxu0 0.0
        %2969 = vmatpush1.msra.mxu0 0.0
        %2970 = vmatprep.subr.mxu0 0.0
        %2971 = vmatpush1.msra.mxu0 0.0
        %2972 = vmatprep.subr.mxu0 0.0
        %2973 = vmatpush1.msra.mxu0 0.0
        %2974 = vmatprep.subr.mxu0 0.0
        %2975 = vmatpush1.msra.mxu0 0.0
        %2976 = vmatprep.subr.mxu0 0.0
        %2977 = vmatpush1.msra.mxu0 0.0
        %2978 = vmatprep.subr.mxu0 0.0
        %2979 = vmatpush1.msra.mxu0 0.0
        %2980 = vmatprep.subr.mxu0 0.0
        %2981 = vmatpush1.msra.mxu0 0.0
        %2982 = vmatprep.subr.mxu0 0.0
        %2983 = vmatpush1.msra.mxu0 0.0
        %2984 = vmatprep.subr.mxu0 0.0
        %2985 = vmatpush1.msra.mxu0 0.0
        %2986 = vmatprep.subr.mxu0 0.0
        %2987 = vmatpush1.msra.mxu0 0.0
        %2988 = vmatprep.mubr.f32.mxu0 0.0
        %2989 = vmatmul.mubr.f32.gmra.mrb[0].mxu0 %v2922
        %v2990 = vpop.f32.mrb[0].mxu0
        %v2991 = vadd.f32 0.0, %v2990
        %v2992 = vpop.f32.mrb[0].mxu0
        %2993 = vdwg.mxu0
        %2994 = vrot.lane.b32.xlu0 %v910, 32
        %v2995 = vpop.permute.xlu0 %2994
        %v2998 = vsel %vm933, %v678, 0
        %3000 = vmatprep.subr.mxu0 0.0
        %3001 = vmatpush1.msra.mxu0 %v2995
        %3002 = vmatprep.subr.mxu0 0.0
        %3003 = vmatpush1.msra.mxu0 0.0
        %3004 = vmatprep.subr.mxu0 0.0
        %3005 = vmatpush1.msra.mxu0 0.0
        %3006 = vmatprep.subr.mxu0 0.0
        %3007 = vmatpush1.msra.mxu0 0.0
        %3008 = vmatprep.subr.mxu0 0.0
        %3009 = vmatpush1.msra.mxu0 0.0
        %3010 = vmatprep.subr.mxu0 0.0
        %3011 = vmatpush1.msra.mxu0 0.0
        %3012 = vmatprep.subr.mxu0 0.0
        %3013 = vmatpush1.msra.mxu0 0.0
        %3014 = vmatprep.subr.mxu0 0.0
        %3015 = vmatpush1.msra.mxu0 0.0
        %3016 = vmatprep.subr.mxu0 0.0
        %3017 = vmatpush1.msra.mxu0 0.0
        %3018 = vmatprep.subr.mxu0 0.0
        %3019 = vmatpush1.msra.mxu0 0.0
        %3020 = vmatprep.subr.mxu0 0.0
        %3021 = vmatpush1.msra.mxu0 0.0
        %3022 = vmatprep.subr.mxu0 0.0
        %3023 = vmatpush1.msra.mxu0 0.0
        %3024 = vmatprep.subr.mxu0 0.0
        %3025 = vmatpush1.msra.mxu0 0.0
        %3026 = vmatprep.subr.mxu0 0.0
        %3027 = vmatpush1.msra.mxu0 0.0
        %3028 = vmatprep.subr.mxu0 0.0
        %3029 = vmatpush1.msra.mxu0 0.0
        %3030 = vmatprep.subr.mxu0 0.0
        %3031 = vmatpush1.msra.mxu0 0.0
        %3032 = vmatprep.subr.mxu0 0.0
        %3033 = vmatpush1.msra.mxu0 0.0
        %3034 = vmatprep.subr.mxu0 0.0
        %3035 = vmatpush1.msra.mxu0 0.0
        %3036 = vmatprep.subr.mxu0 0.0
        %3037 = vmatpush1.msra.mxu0 0.0
        %3038 = vmatprep.subr.mxu0 0.0
        %3039 = vmatpush1.msra.mxu0 0.0
        %3040 = vmatprep.subr.mxu0 0.0
        %3041 = vmatpush1.msra.mxu0 0.0
        %3042 = vmatprep.subr.mxu0 0.0
        %3043 = vmatpush1.msra.mxu0 0.0
        %3044 = vmatprep.subr.mxu0 0.0
        %3045 = vmatpush1.msra.mxu0 0.0
        %3046 = vmatprep.subr.mxu0 0.0
        %3047 = vmatpush1.msra.mxu0 0.0
        %3048 = vmatprep.subr.mxu0 0.0
        %3049 = vmatpush1.msra.mxu0 0.0
        %3050 = vmatprep.subr.mxu0 0.0
        %3051 = vmatpush1.msra.mxu0 0.0
        %3052 = vmatprep.subr.mxu0 0.0
        %3053 = vmatpush1.msra.mxu0 0.0
        %3054 = vmatprep.subr.mxu0 0.0
        %3055 = vmatpush1.msra.mxu0 0.0
        %3056 = vmatprep.subr.mxu0 0.0
        %3057 = vmatpush1.msra.mxu0 0.0
        %3058 = vmatprep.subr.mxu0 0.0
        %3059 = vmatpush1.msra.mxu0 0.0
        %3060 = vmatprep.subr.mxu0 0.0
        %3061 = vmatpush1.msra.mxu0 0.0
        %3062 = vmatprep.subr.mxu0 0.0
        %3063 = vmatpush1.msra.mxu0 0.0
        %3064 = vmatprep.mubr.f32.mxu0 0.0
        %3065 = vmatmul.mubr.f32.gmra.mrb[0].mxu0 %v2998
        %v3066 = vpop.f32.mrb[0].mxu0
        %v3067 = vadd.f32 0.0, %v3066
        %v3068 = vpop.f32.mrb[0].mxu0
        %3069 = vdwg.mxu0
        %3070 = vrot.lane.b32.xlu0 %v915, 32
        %v3071 = vpop.permute.xlu0 %3070
        %v3074 = vsel %vm933, %v679, 0
        %3076 = vmatprep.subr.mxu0 0.0
        %3077 = vmatpush1.msra.mxu0 %v3071
        %3078 = vmatprep.subr.mxu0 0.0
        %3079 = vmatpush1.msra.mxu0 0.0
        %3080 = vmatprep.subr.mxu0 0.0
        %3081 = vmatpush1.msra.mxu0 0.0
        %3082 = vmatprep.subr.mxu0 0.0
        %3083 = vmatpush1.msra.mxu0 0.0
        %3084 = vmatprep.subr.mxu0 0.0
        %3085 = vmatpush1.msra.mxu0 0.0
        %3086 = vmatprep.subr.mxu0 0.0
        %3087 = vmatpush1.msra.mxu0 0.0
        %3088 = vmatprep.subr.mxu0 0.0
        %3089 = vmatpush1.msra.mxu0 0.0
        %3090 = vmatprep.subr.mxu0 0.0
        %3091 = vmatpush1.msra.mxu0 0.0
        %3092 = vmatprep.subr.mxu0 0.0
        %3093 = vmatpush1.msra.mxu0 0.0
        %3094 = vmatprep.subr.mxu0 0.0
        %3095 = vmatpush1.msra.mxu0 0.0
        %3096 = vmatprep.subr.mxu0 0.0
        %3097 = vmatpush1.msra.mxu0 0.0
        %3098 = vmatprep.subr.mxu0 0.0
        %3099 = vmatpush1.msra.mxu0 0.0
        %3100 = vmatprep.subr.mxu0 0.0
        %3101 = vmatpush1.msra.mxu0 0.0
        %3102 = vmatprep.subr.mxu0 0.0
        %3103 = vmatpush1.msra.mxu0 0.0
        %3104 = vmatprep.subr.mxu0 0.0
        %3105 = vmatpush1.msra.mxu0 0.0
        %3106 = vmatprep.subr.mxu0 0.0
        %3107 = vmatpush1.msra.mxu0 0.0
        %3108 = vmatprep.subr.mxu0 0.0
        %3109 = vmatpush1.msra.mxu0 0.0
        %3110 = vmatprep.subr.mxu0 0.0
        %3111 = vmatpush1.msra.mxu0 0.0
        %3112 = vmatprep.subr.mxu0 0.0
        %3113 = vmatpush1.msra.mxu0 0.0
        %3114 = vmatprep.subr.mxu0 0.0
        %3115 = vmatpush1.msra.mxu0 0.0
        %3116 = vmatprep.subr.mxu0 0.0
        %3117 = vmatpush1.msra.mxu0 0.0
        %3118 = vmatprep.subr.mxu0 0.0
        %3119 = vmatpush1.msra.mxu0 0.0
        %3120 = vmatprep.subr.mxu0 0.0
        %3121 = vmatpush1.msra.mxu0 0.0
        %3122 = vmatprep.subr.mxu0 0.0
        %3123 = vmatpush1.msra.mxu0 0.0
        %3124 = vmatprep.subr.mxu0 0.0
        %3125 = vmatpush1.msra.mxu0 0.0
        %3126 = vmatprep.subr.mxu0 0.0
        %3127 = vmatpush1.msra.mxu0 0.0
        %3128 = vmatprep.subr.mxu0 0.0
        %3129 = vmatpush1.msra.mxu0 0.0
        %3130 = vmatprep.subr.mxu0 0.0
        %3131 = vmatpush1.msra.mxu0 0.0
        %3132 = vmatprep.subr.mxu0 0.0
        %3133 = vmatpush1.msra.mxu0 0.0
        %3134 = vmatprep.subr.mxu0 0.0
        %3135 = vmatpush1.msra.mxu0 0.0
        %3136 = vmatprep.subr.mxu0 0.0
        %3137 = vmatpush1.msra.mxu0 0.0
        %3138 = vmatprep.subr.mxu0 0.0
        %3139 = vmatpush1.msra.mxu0 0.0
        %3140 = vmatprep.mubr.f32.mxu0 0.0
        %3141 = vmatmul.mubr.f32.gmra.mrb[0].mxu0 %v3074
        %v3142 = vpop.f32.mrb[0].mxu0
        %v3143 = vadd.f32 0.0, %v3142
        %v3144 = vpop.f32.mrb[0].mxu0
        %3145 = vdwg.mxu0
        %3146 = vrot.lane.b32.xlu0 %v920, 32
        %v3147 = vpop.permute.xlu0 %3146
        %v3150 = vsel %vm933, %v680, 0
        %3152 = vmatprep.subr.mxu0 0.0
        %3153 = vmatpush1.msra.mxu0 %v3147
        %3154 = vmatprep.subr.mxu0 0.0
        %3155 = vmatpush1.msra.mxu0 0.0
        %3156 = vmatprep.subr.mxu0 0.0
        %3157 = vmatpush1.msra.mxu0 0.0
        %3158 = vmatprep.subr.mxu0 0.0
        %3159 = vmatpush1.msra.mxu0 0.0
        %3160 = vmatprep.subr.mxu0 0.0
        %3161 = vmatpush1.msra.mxu0 0.0
        %3162 = vmatprep.subr.mxu0 0.0
        %3163 = vmatpush1.msra.mxu0 0.0
        %3164 = vmatprep.subr.mxu0 0.0
        %3165 = vmatpush1.msra.mxu0 0.0
        %3166 = vmatprep.subr.mxu0 0.0
        %3167 = vmatpush1.msra.mxu0 0.0
        %3168 = vmatprep.subr.mxu0 0.0
        %3169 = vmatpush1.msra.mxu0 0.0
        %3170 = vmatprep.subr.mxu0 0.0
        %3171 = vmatpush1.msra.mxu0 0.0
        %3172 = vmatprep.subr.mxu0 0.0
        %3173 = vmatpush1.msra.mxu0 0.0
        %3174 = vmatprep.subr.mxu0 0.0
        %3175 = vmatpush1.msra.mxu0 0.0
        %3176 = vmatprep.subr.mxu0 0.0
        %3177 = vmatpush1.msra.mxu0 0.0
        %3178 = vmatprep.subr.mxu0 0.0
        %3179 = vmatpush1.msra.mxu0 0.0
        %3180 = vmatprep.subr.mxu0 0.0
        %3181 = vmatpush1.msra.mxu0 0.0
        %3182 = vmatprep.subr.mxu0 0.0
        %3183 = vmatpush1.msra.mxu0 0.0
        %3184 = vmatprep.subr.mxu0 0.0
        %3185 = vmatpush1.msra.mxu0 0.0
        %3186 = vmatprep.subr.mxu0 0.0
        %3187 = vmatpush1.msra.mxu0 0.0
        %3188 = vmatprep.subr.mxu0 0.0
        %3189 = vmatpush1.msra.mxu0 0.0
        %3190 = vmatprep.subr.mxu0 0.0
        %3191 = vmatpush1.msra.mxu0 0.0
        %3192 = vmatprep.subr.mxu0 0.0
        %3193 = vmatpush1.msra.mxu0 0.0
        %3194 = vmatprep.subr.mxu0 0.0
        %3195 = vmatpush1.msra.mxu0 0.0
        %3196 = vmatprep.subr.mxu0 0.0
        %3197 = vmatpush1.msra.mxu0 0.0
        %3198 = vmatprep.subr.mxu0 0.0
        %3199 = vmatpush1.msra.mxu0 0.0
        %3200 = vmatprep.subr.mxu0 0.0
        %3201 = vmatpush1.msra.mxu0 0.0
        %3202 = vmatprep.subr.mxu0 0.0
        %3203 = vmatpush1.msra.mxu0 0.0
        %3204 = vmatprep.subr.mxu0 0.0
        %3205 = vmatpush1.msra.mxu0 0.0
        %3206 = vmatprep.subr.mxu0 0.0
        %3207 = vmatpush1.msra.mxu0 0.0
        %3208 = vmatprep.subr.mxu0 0.0
        %3209 = vmatpush1.msra.mxu0 0.0
        %3210 = vmatprep.subr.mxu0 0.0
        %3211 = vmatpush1.msra.mxu0 0.0
        %3212 = vmatprep.subr.mxu0 0.0
        %3213 = vmatpush1.msra.mxu0 0.0
        %3214 = vmatprep.subr.mxu0 0.0
        %3215 = vmatpush1.msra.mxu0 0.0
        %3216 = vmatprep.mubr.f32.mxu0 0.0
        %3217 = vmatmul.mubr.f32.gmra.mrb[0].mxu0 %v3150
        %v3218 = vpop.f32.mrb[0].mxu0
        %v3219 = vadd.f32 0.0, %v3218
        %v3220 = vpop.f32.mrb[0].mxu0
        %3221 = vdwg.mxu0
        %3222 = vrot.lane.b32.xlu0 %v925, 32
        %v3223 = vpop.permute.xlu0 %3222
        %v3226 = vsel %vm933, %v681, 0
        %3228 = vmatprep.subr.mxu0 0.0
        %3229 = vmatpush1.msra.mxu0 %v3223
        %3230 = vmatprep.subr.mxu0 0.0
        %3231 = vmatpush1.msra.mxu0 0.0
        %3232 = vmatprep.subr.mxu0 0.0
        %3233 = vmatpush1.msra.mxu0 0.0
        %3234 = vmatprep.subr.mxu0 0.0
        %3235 = vmatpush1.msra.mxu0 0.0
        %3236 = vmatprep.subr.mxu0 0.0
        %3237 = vmatpush1.msra.mxu0 0.0
        %3238 = vmatprep.subr.mxu0 0.0
        %3239 = vmatpush1.msra.mxu0 0.0
        %3240 = vmatprep.subr.mxu0 0.0
        %3241 = vmatpush1.msra.mxu0 0.0
        %3242 = vmatprep.subr.mxu0 0.0
        %3243 = vmatpush1.msra.mxu0 0.0
        %3244 = vmatprep.subr.mxu0 0.0
        %3245 = vmatpush1.msra.mxu0 0.0
        %3246 = vmatprep.subr.mxu0 0.0
        %3247 = vmatpush1.msra.mxu0 0.0
        %3248 = vmatprep.subr.mxu0 0.0
        %3249 = vmatpush1.msra.mxu0 0.0
        %3250 = vmatprep.subr.mxu0 0.0
        %3251 = vmatpush1.msra.mxu0 0.0
        %3252 = vmatprep.subr.mxu0 0.0
        %3253 = vmatpush1.msra.mxu0 0.0
        %3254 = vmatprep.subr.mxu0 0.0
        %3255 = vmatpush1.msra.mxu0 0.0
        %3256 = vmatprep.subr.mxu0 0.0
        %3257 = vmatpush1.msra.mxu0 0.0
        %3258 = vmatprep.subr.mxu0 0.0
        %3259 = vmatpush1.msra.mxu0 0.0
        %3260 = vmatprep.subr.mxu0 0.0
        %3261 = vmatpush1.msra.mxu0 0.0
        %3262 = vmatprep.subr.mxu0 0.0
        %3263 = vmatpush1.msra.mxu0 0.0
        %3264 = vmatprep.subr.mxu0 0.0
        %3265 = vmatpush1.msra.mxu0 0.0
        %3266 = vmatprep.subr.mxu0 0.0
        %3267 = vmatpush1.msra.mxu0 0.0
        %3268 = vmatprep.subr.mxu0 0.0
        %3269 = vmatpush1.msra.mxu0 0.0
        %3270 = vmatprep.subr.mxu0 0.0
        %3271 = vmatpush1.msra.mxu0 0.0
        %3272 = vmatprep.subr.mxu0 0.0
        %3273 = vmatpush1.msra.mxu0 0.0
        %3274 = vmatprep.subr.mxu0 0.0
        %3275 = vmatpush1.msra.mxu0 0.0
        %3276 = vmatprep.subr.mxu0 0.0
        %3277 = vmatpush1.msra.mxu0 0.0
        %3278 = vmatprep.subr.mxu0 0.0
        %3279 = vmatpush1.msra.mxu0 0.0
        %3280 = vmatprep.subr.mxu0 0.0
        %3281 = vmatpush1.msra.mxu0 0.0
        %3282 = vmatprep.subr.mxu0 0.0
        %3283 = vmatpush1.msra.mxu0 0.0
        %3284 = vmatprep.subr.mxu0 0.0
        %3285 = vmatpush1.msra.mxu0 0.0
        %3286 = vmatprep.subr.mxu0 0.0
        %3287 = vmatpush1.msra.mxu0 0.0
        %3288 = vmatprep.subr.mxu0 0.0
        %3289 = vmatpush1.msra.mxu0 0.0
        %3290 = vmatprep.subr.mxu0 0.0
        %3291 = vmatpush1.msra.mxu0 0.0
        %3292 = vmatprep.mubr.f32.mxu0 0.0
        %3293 = vmatmul.mubr.f32.gmra.mrb[0].mxu0 %v3226
        %v3294 = vpop.f32.mrb[0].mxu0
        %v3295 = vadd.f32 0.0, %v3294
        %v3296 = vpop.f32.mrb[0].mxu0
        %3297 = vdwg.mxu0
        %3298 = vrot.lane.b32.xlu0 %v930, 32
        %v3299 = vpop.permute.xlu0 %3298
        %v3302 = vsel %vm933, %v682, 0
        %3304 = vmatprep.subr.mxu0 0.0
        %3305 = vmatpush1.msra.mxu0 %v3299
        %3306 = vmatprep.subr.mxu0 0.0
        %3307 = vmatpush1.msra.mxu0 0.0
        %3308 = vmatprep.subr.mxu0 0.0
        %3309 = vmatpush1.msra.mxu0 0.0
        %3310 = vmatprep.subr.mxu0 0.0
        %3311 = vmatpush1.msra.mxu0 0.0
        %3312 = vmatprep.subr.mxu0 0.0
        %3313 = vmatpush1.msra.mxu0 0.0
        %3314 = vmatprep.subr.mxu0 0.0
        %3315 = vmatpush1.msra.mxu0 0.0
        %3316 = vmatprep.subr.mxu0 0.0
        %3317 = vmatpush1.msra.mxu0 0.0
        %3318 = vmatprep.subr.mxu0 0.0
        %3319 = vmatpush1.msra.mxu0 0.0
        %3320 = vmatprep.subr.mxu0 0.0
        %3321 = vmatpush1.msra.mxu0 0.0
        %3322 = vmatprep.subr.mxu0 0.0
        %3323 = vmatpush1.msra.mxu0 0.0
        %3324 = vmatprep.subr.mxu0 0.0
        %3325 = vmatpush1.msra.mxu0 0.0
        %3326 = vmatprep.subr.mxu0 0.0
        %3327 = vmatpush1.msra.mxu0 0.0
        %3328 = vmatprep.subr.mxu0 0.0
        %3329 = vmatpush1.msra.mxu0 0.0
        %3330 = vmatprep.subr.mxu0 0.0
        %3331 = vmatpush1.msra.mxu0 0.0
        %3332 = vmatprep.subr.mxu0 0.0
        %3333 = vmatpush1.msra.mxu0 0.0
        %3334 = vmatprep.subr.mxu0 0.0
        %3335 = vmatpush1.msra.mxu0 0.0
        %3336 = vmatprep.subr.mxu0 0.0
        %3337 = vmatpush1.msra.mxu0 0.0
        %3338 = vmatprep.subr.mxu0 0.0
        %3339 = vmatpush1.msra.mxu0 0.0
        %3340 = vmatprep.subr.mxu0 0.0
        %3341 = vmatpush1.msra.mxu0 0.0
        %3342 = vmatprep.subr.mxu0 0.0
        %3343 = vmatpush1.msra.mxu0 0.0
        %3344 = vmatprep.subr.mxu0 0.0
        %3345 = vmatpush1.msra.mxu0 0.0
        %3346 = vmatprep.subr.mxu0 0.0
        %3347 = vmatpush1.msra.mxu0 0.0
        %3348 = vmatprep.subr.mxu0 0.0
        %3349 = vmatpush1.msra.mxu0 0.0
        %3350 = vmatprep.subr.mxu0 0.0
        %3351 = vmatpush1.msra.mxu0 0.0
        %3352 = vmatprep.subr.mxu0 0.0
        %3353 = vmatpush1.msra.mxu0 0.0
        %3354 = vmatprep.subr.mxu0 0.0
        %3355 = vmatpush1.msra.mxu0 0.0
        %3356 = vmatprep.subr.mxu0 0.0
        %3357 = vmatpush1.msra.mxu0 0.0
        %3358 = vmatprep.subr.mxu0 0.0
        %3359 = vmatpush1.msra.mxu0 0.0
        %3360 = vmatprep.subr.mxu0 0.0
        %3361 = vmatpush1.msra.mxu0 0.0
        %3362 = vmatprep.subr.mxu0 0.0
        %3363 = vmatpush1.msra.mxu0 0.0
        %3364 = vmatprep.subr.mxu0 0.0
        %3365 = vmatpush1.msra.mxu0 0.0
        %3366 = vmatprep.subr.mxu0 0.0
        %3367 = vmatpush1.msra.mxu0 0.0
        %3368 = vmatprep.mubr.f32.mxu0 0.0
        %3369 = vmatmul.mubr.f32.gmra.mrb[0].mxu0 %v3302
        %v3370 = vpop.f32.mrb[0].mxu0
        %v3371 = vadd.f32 0.0, %v3370
        %v3372 = vpop.f32.mrb[0].mxu0
        %3373 = vdwg.mxu0
        %v3374 = vadd.f32 %v2758, %v2839
        %v3375 = vadd.f32 %v2759, %v2915
        %v3376 = vadd.f32 %v2760, %v2991
        %v3377 = vadd.f32 %v2761, %v3067
        %v3378 = vadd.f32 %v2762, %v3143
        %v3379 = vadd.f32 %v2763, %v3219
        %v3380 = vadd.f32 %v2764, %v3295
        %v3381 = vadd.f32 %v2765, %v3371
        %v3382 = vmax.f32 %v3374, 0.0
        %v3383 = vmax.f32 %v3375, 0.0
        %v3384 = vmax.f32 %v3376, 0.0
        %v3385 = vmax.f32 %v3377, 0.0
        %v3386 = vmax.f32 %v3378, 0.0
        %v3387 = vmax.f32 %v3379, 0.0
        %v3388 = vmax.f32 %v3380, 0.0
        %v3389 = vmax.f32 %v3381, 0.0
        %v3390 = vmul.f32 %v3382, %v430
        %v3391 = vmul.f32 %v3383, %v435
        %v3392 = vmul.f32 %v3384, %v440
        %v3393 = vmul.f32 %v3385, %v445
        %v3394 = vmul.f32 %v3386, %v450
        %v3395 = vmul.f32 %v3387, %v455
        %v3396 = vmul.f32 %v3388, %v460
        %v3397 = vmul.f32 %v3389, %v465
        %s3398 = scalar_lea.vmem %s4, 32
        %v3399 = vld [vmem:[%s3398] sm:$0xff]
        %v3400 = vld [vmem:[%s3398 + $0x8] sm:$0xff]
        %v3401 = vld [vmem:[%s3398 + $0x10] sm:$0xff]
        %v3402 = vld [vmem:[%s3398 + $0x18] sm:$0xff]
        %s3403 = scalar_lea.vmem %s5, 1
        %v3404 = vld [vmem:[%s3403] sm:$0x1]
        %v3406 = vlaneseq
        %v3407 = vshrl.u32 %v3406, 7
        %v3408 = vsub.s32 0, %v3407
        %v3409 = vrot.slane %v3404, %v3408
        %v3412 = vsel %vm694, %v3390, 0
        %v3415 = vsel %vm694, %v3391, 0
        %v3418 = vsel %vm694, %v3392, 0
        %v3421 = vsel %vm694, %v3393, 0
        %v3424 = vsel %vm694, %v3394, 0
        %v3427 = vsel %vm694, %v3395, 0
        %v3430 = vsel %vm694, %v3396, 0
        %v3433 = vsel %vm694, %v3397, 0
        %3435 = vmatprep.subr.mxu0 0.0
        %3436 = vmatpush1.msra.mxu0 %v3399
        %3437 = vmatprep.subr.mxu0 0.0
        %3438 = vmatpush1.msra.mxu0 %v3400
        %3439 = vmatprep.subr.mxu0 0.0
        %3440 = vmatpush1.msra.mxu0 %v3401
        %3441 = vmatprep.subr.mxu0 0.0
        %3442 = vmatpush1.msra.mxu0 %v3402
        %3443 = vmatprep.subr.mxu0 0.0
        %3444 = vmatpush1.msra.mxu0 0.0
        %3445 = vmatprep.subr.mxu0 0.0
        %3446 = vmatpush1.msra.mxu0 0.0
        %3447 = vmatprep.subr.mxu0 0.0
        %3448 = vmatpush1.msra.mxu0 0.0
        %3449 = vmatprep.subr.mxu0 0.0
        %3450 = vmatpush1.msra.mxu0 0.0
        %3451 = vmatprep.subr.mxu0 0.0
        %3452 = vmatpush1.msra.mxu0 0.0
        %3453 = vmatprep.subr.mxu0 0.0
        %3454 = vmatpush1.msra.mxu0 0.0
        %3455 = vmatprep.subr.mxu0 0.0
        %3456 = vmatpush1.msra.mxu0 0.0
        %3457 = vmatprep.subr.mxu0 0.0
        %3458 = vmatpush1.msra.mxu0 0.0
        %3459 = vmatprep.subr.mxu0 0.0
        %3460 = vmatpush1.msra.mxu0 0.0
        %3461 = vmatprep.subr.mxu0 0.0
        %3462 = vmatpush1.msra.mxu0 0.0
        %3463 = vmatprep.subr.mxu0 0.0
        %3464 = vmatpush1.msra.mxu0 0.0
        %3465 = vmatprep.subr.mxu0 0.0
        %3466 = vmatpush1.msra.mxu0 0.0
        %3467 = vmatprep.subr.mxu0 0.0
        %3468 = vmatpush1.msra.mxu0 0.0
        %3469 = vmatprep.subr.mxu0 0.0
        %3470 = vmatpush1.msra.mxu0 0.0
        %3471 = vmatprep.subr.mxu0 0.0
        %3472 = vmatpush1.msra.mxu0 0.0
        %3473 = vmatprep.subr.mxu0 0.0
        %3474 = vmatpush1.msra.mxu0 0.0
        %3475 = vmatprep.subr.mxu0 0.0
        %3476 = vmatpush1.msra.mxu0 0.0
        %3477 = vmatprep.subr.mxu0 0.0
        %3478 = vmatpush1.msra.mxu0 0.0
        %3479 = vmatprep.subr.mxu0 0.0
        %3480 = vmatpush1.msra.mxu0 0.0
        %3481 = vmatprep.subr.mxu0 0.0
        %3482 = vmatpush1.msra.mxu0 0.0
        %3483 = vmatprep.subr.mxu0 0.0
        %3484 = vmatpush1.msra.mxu0 0.0
        %3485 = vmatprep.subr.mxu0 0.0
        %3486 = vmatpush1.msra.mxu0 0.0
        %3487 = vmatprep.subr.mxu0 0.0
        %3488 = vmatpush1.msra.mxu0 0.0
        %3489 = vmatprep.subr.mxu0 0.0
        %3490 = vmatpush1.msra.mxu0 0.0
        %3491 = vmatprep.subr.mxu0 0.0
        %3492 = vmatpush1.msra.mxu0 0.0
        %3493 = vmatprep.subr.mxu0 0.0
        %3494 = vmatpush1.msra.mxu0 0.0
        %3495 = vmatprep.subr.mxu0 0.0
        %3496 = vmatpush1.msra.mxu0 0.0
        %3497 = vmatprep.subr.mxu0 0.0
        %3498 = vmatpush1.msra.mxu0 0.0
        %3499 = vmatprep.mubr.f32.mxu0 0.0
        %3500 = vmatmul.mubr.f32.gmra.mrb[0].mxu0 %v3412
        %v3501 = vpop.f32.mrb[0].mxu0
        %v3502 = vadd.f32 %v3409, %v3501
        %v3503 = vpop.f32.mrb[0].mxu0
        %3504 = vmatprep.mubr.f32.mxu0 0.0
        %3505 = vmatmul.mubr.f32.gmra.mrb[0].mxu0 %v3415
        %v3506 = vpop.f32.mrb[0].mxu0
        %v3507 = vadd.f32 %v3409, %v3506
        %v3508 = vpop.f32.mrb[0].mxu0
        %3509 = vmatprep.mubr.f32.mxu0 0.0
        %3510 = vmatmul.mubr.f32.gmra.mrb[0].mxu0 %v3418
        %v3511 = vpop.f32.mrb[0].mxu0
        %v3512 = vadd.f32 %v3409, %v3511
        %v3513 = vpop.f32.mrb[0].mxu0
        %3514 = vmatprep.mubr.f32.mxu0 0.0
        %3515 = vmatmul.mubr.f32.gmra.mrb[0].mxu0 %v3421
        %v3516 = vpop.f32.mrb[0].mxu0
        %v3517 = vadd.f32 %v3409, %v3516
        %v3518 = vpop.f32.mrb[0].mxu0
        %3519 = vmatprep.mubr.f32.mxu0 0.0
        %3520 = vmatmul.mubr.f32.gmra.mrb[0].mxu0 %v3424
        %v3521 = vpop.f32.mrb[0].mxu0
        %v3522 = vadd.f32 %v3409, %v3521
        %v3523 = vpop.f32.mrb[0].mxu0
        %3524 = vmatprep.mubr.f32.mxu0 0.0
        %3525 = vmatmul.mubr.f32.gmra.mrb[0].mxu0 %v3427
        %v3526 = vpop.f32.mrb[0].mxu0
        %v3527 = vadd.f32 %v3409, %v3526
        %v3528 = vpop.f32.mrb[0].mxu0
        %3529 = vmatprep.mubr.f32.mxu0 0.0
        %3530 = vmatmul.mubr.f32.gmra.mrb[0].mxu0 %v3430
        %v3531 = vpop.f32.mrb[0].mxu0
        %v3532 = vadd.f32 %v3409, %v3531
        %v3533 = vpop.f32.mrb[0].mxu0
        %3534 = vmatprep.mubr.f32.mxu0 0.0
        %3535 = vmatmul.mubr.f32.gmra.mrb[0].mxu0 %v3433
        %v3536 = vpop.f32.mrb[0].mxu0
        %v3537 = vadd.f32 %v3409, %v3536
        %v3538 = vpop.f32.mrb[0].mxu0
        %3539 = vdwg.mxu0
        %s3540 = scalar_lea.vmem %s6, 32
        %v3541 = vld [vmem:[%s3540] sm:$0xff]
        %v3542 = vld [vmem:[%s3540 + $0x8] sm:$0xff]
        %v3543 = vld [vmem:[%s3540 + $0x10] sm:$0xff]
        %v3544 = vld [vmem:[%s3540 + $0x18] sm:$0xff]
        %3545 = vmatprep.subr.mxu0 0.0
        %3546 = vmatpush1.msra.mxu0 %v3541
        %3547 = vmatprep.subr.mxu0 0.0
        %3548 = vmatpush1.msra.mxu0 %v3542
        %3549 = vmatprep.subr.mxu0 0.0
        %3550 = vmatpush1.msra.mxu0 %v3543
        %3551 = vmatprep.subr.mxu0 0.0
        %3552 = vmatpush1.msra.mxu0 %v3544
        %3553 = vmatprep.subr.mxu0 0.0
        %3554 = vmatpush1.msra.mxu0 0.0
        %3555 = vmatprep.subr.mxu0 0.0
        %3556 = vmatpush1.msra.mxu0 0.0
        %3557 = vmatprep.subr.mxu0 0.0
        %3558 = vmatpush1.msra.mxu0 0.0
        %3559 = vmatprep.subr.mxu0 0.0
        %3560 = vmatpush1.msra.mxu0 0.0
        %3561 = vmatprep.subr.mxu0 0.0
        %3562 = vmatpush1.msra.mxu0 0.0
        %3563 = vmatprep.subr.mxu0 0.0
        %3564 = vmatpush1.msra.mxu0 0.0
        %3565 = vmatprep.subr.mxu0 0.0
        %3566 = vmatpush1.msra.mxu0 0.0
        %3567 = vmatprep.subr.mxu0 0.0
        %3568 = vmatpush1.msra.mxu0 0.0
        %3569 = vmatprep.subr.mxu0 0.0
        %3570 = vmatpush1.msra.mxu0 0.0
        %3571 = vmatprep.subr.mxu0 0.0
        %3572 = vmatpush1.msra.mxu0 0.0
        %3573 = vmatprep.subr.mxu0 0.0
        %3574 = vmatpush1.msra.mxu0 0.0
        %3575 = vmatprep.subr.mxu0 0.0
        %3576 = vmatpush1.msra.mxu0 0.0
        %3577 = vmatprep.subr.mxu0 0.0
        %3578 = vmatpush1.msra.mxu0 0.0
        %3579 = vmatprep.subr.mxu0 0.0
        %3580 = vmatpush1.msra.mxu0 0.0
        %3581 = vmatprep.subr.mxu0 0.0
        %3582 = vmatpush1.msra.mxu0 0.0
        %3583 = vmatprep.subr.mxu0 0.0
        %3584 = vmatpush1.msra.mxu0 0.0
        %3585 = vmatprep.subr.mxu0 0.0
        %3586 = vmatpush1.msra.mxu0 0.0
        %3587 = vmatprep.subr.mxu0 0.0
        %3588 = vmatpush1.msra.mxu0 0.0
        %3589 = vmatprep.subr.mxu0 0.0
        %3590 = vmatpush1.msra.mxu0 0.0
        %3591 = vmatprep.subr.mxu0 0.0
        %3592 = vmatpush1.msra.mxu0 0.0
        %3593 = vmatprep.subr.mxu0 0.0
        %3594 = vmatpush1.msra.mxu0 0.0
        %3595 = vmatprep.subr.mxu0 0.0
        %3596 = vmatpush1.msra.mxu0 0.0
        %3597 = vmatprep.subr.mxu0 0.0
        %3598 = vmatpush1.msra.mxu0 0.0
        %3599 = vmatprep.subr.mxu0 0.0
        %3600 = vmatpush1.msra.mxu0 0.0
        %3601 = vmatprep.subr.mxu0 0.0
        %3602 = vmatpush1.msra.mxu0 0.0
        %3603 = vmatprep.subr.mxu0 0.0
        %3604 = vmatpush1.msra.mxu0 0.0
        %3605 = vmatprep.subr.mxu0 0.0
        %3606 = vmatpush1.msra.mxu0 0.0
        %3607 = vmatprep.subr.mxu0 0.0
        %3608 = vmatpush1.msra.mxu0 0.0
        %3609 = vmatprep.mubr.f32.mxu0 0.0
        %3610 = vmatmul.mubr.f32.gmra.mrb[0].mxu0 %v3412
        %v3611 = vpop.f32.mrb[0].mxu0
        %v3612 = vadd.f32 0.0, %v3611
        %v3613 = vpop.f32.mrb[0].mxu0
        %3614 = vmatprep.mubr.f32.mxu0 0.0
        %3615 = vmatmul.mubr.f32.gmra.mrb[0].mxu0 %v3415
        %v3616 = vpop.f32.mrb[0].mxu0
        %v3617 = vadd.f32 0.0, %v3616
        %v3618 = vpop.f32.mrb[0].mxu0
        %3619 = vmatprep.mubr.f32.mxu0 0.0
        %3620 = vmatmul.mubr.f32.gmra.mrb[0].mxu0 %v3418
        %v3621 = vpop.f32.mrb[0].mxu0
        %v3622 = vadd.f32 0.0, %v3621
        %v3623 = vpop.f32.mrb[0].mxu0
        %3624 = vmatprep.mubr.f32.mxu0 0.0
        %3625 = vmatmul.mubr.f32.gmra.mrb[0].mxu0 %v3421
        %v3626 = vpop.f32.mrb[0].mxu0
        %v3627 = vadd.f32 0.0, %v3626
        %v3628 = vpop.f32.mrb[0].mxu0
        %3629 = vmatprep.mubr.f32.mxu0 0.0
        %3630 = vmatmul.mubr.f32.gmra.mrb[0].mxu0 %v3424
        %v3631 = vpop.f32.mrb[0].mxu0
        %v3632 = vadd.f32 0.0, %v3631
        %v3633 = vpop.f32.mrb[0].mxu0
        %3634 = vmatprep.mubr.f32.mxu0 0.0
        %3635 = vmatmul.mubr.f32.gmra.mrb[0].mxu0 %v3427
        %v3636 = vpop.f32.mrb[0].mxu0
        %v3637 = vadd.f32 0.0, %v3636
        %v3638 = vpop.f32.mrb[0].mxu0
        %3639 = vmatprep.mubr.f32.mxu0 0.0
        %3640 = vmatmul.mubr.f32.gmra.mrb[0].mxu0 %v3430
        %v3641 = vpop.f32.mrb[0].mxu0
        %v3642 = vadd.f32 0.0, %v3641
        %v3643 = vpop.f32.mrb[0].mxu0
        %3644 = vmatprep.mubr.f32.mxu0 0.0
        %3645 = vmatmul.mubr.f32.gmra.mrb[0].mxu0 %v3433
        %v3646 = vpop.f32.mrb[0].mxu0
        %v3647 = vadd.f32 0.0, %v3646
        %v3648 = vpop.f32.mrb[0].mxu0
        %3649 = vdwg.mxu0
        %3650 = vmatprep.subr.mxu0 0.0
        %3651 = vmatpush1.msra.mxu0 %v3612
        %3652 = vmatprep.subr.mxu0 0.0
        %3653 = vmatpush1.msra.mxu0 0.0
        %3654 = vmatprep.subr.mxu0 0.0
        %3655 = vmatpush1.msra.mxu0 0.0
        %3656 = vmatprep.subr.mxu0 0.0
        %3657 = vmatpush1.msra.mxu0 0.0
        %3658 = vmatprep.subr.mxu0 0.0
        %3659 = vmatpush1.msra.mxu0 0.0
        %3660 = vmatprep.subr.mxu0 0.0
        %3661 = vmatpush1.msra.mxu0 0.0
        %3662 = vmatprep.subr.mxu0 0.0
        %3663 = vmatpush1.msra.mxu0 0.0
        %3664 = vmatprep.subr.mxu0 0.0
        %3665 = vmatpush1.msra.mxu0 0.0
        %3666 = vmatprep.subr.mxu0 0.0
        %3667 = vmatpush1.msra.mxu0 0.0
        %3668 = vmatprep.subr.mxu0 0.0
        %3669 = vmatpush1.msra.mxu0 0.0
        %3670 = vmatprep.subr.mxu0 0.0
        %3671 = vmatpush1.msra.mxu0 0.0
        %3672 = vmatprep.subr.mxu0 0.0
        %3673 = vmatpush1.msra.mxu0 0.0
        %3674 = vmatprep.subr.mxu0 0.0
        %3675 = vmatpush1.msra.mxu0 0.0
        %3676 = vmatprep.subr.mxu0 0.0
        %3677 = vmatpush1.msra.mxu0 0.0
        %3678 = vmatprep.subr.mxu0 0.0
        %3679 = vmatpush1.msra.mxu0 0.0
        %3680 = vmatprep.subr.mxu0 0.0
        %3681 = vmatpush1.msra.mxu0 0.0
        %3682 = vmatprep.subr.mxu0 0.0
        %3683 = vmatpush1.msra.mxu0 0.0
        %3684 = vmatprep.subr.mxu0 0.0
        %3685 = vmatpush1.msra.mxu0 0.0
        %3686 = vmatprep.subr.mxu0 0.0
        %3687 = vmatpush1.msra.mxu0 0.0
        %3688 = vmatprep.subr.mxu0 0.0
        %3689 = vmatpush1.msra.mxu0 0.0
        %3690 = vmatprep.subr.mxu0 0.0
        %3691 = vmatpush1.msra.mxu0 0.0
        %3692 = vmatprep.subr.mxu0 0.0
        %3693 = vmatpush1.msra.mxu0 0.0
        %3694 = vmatprep.subr.mxu0 0.0
        %3695 = vmatpush1.msra.mxu0 0.0
        %3696 = vmatprep.subr.mxu0 0.0
        %3697 = vmatpush1.msra.mxu0 0.0
        %3698 = vmatprep.subr.mxu0 0.0
        %3699 = vmatpush1.msra.mxu0 0.0
        %3700 = vmatprep.subr.mxu0 0.0
        %3701 = vmatpush1.msra.mxu0 0.0
        %3702 = vmatprep.subr.mxu0 0.0
        %3703 = vmatpush1.msra.mxu0 0.0
        %3704 = vmatprep.subr.mxu0 0.0
        %3705 = vmatpush1.msra.mxu0 0.0
        %3706 = vmatprep.subr.mxu0 0.0
        %3707 = vmatpush1.msra.mxu0 0.0
        %3708 = vmatprep.subr.mxu0 0.0
        %3709 = vmatpush1.msra.mxu0 0.0
        %3710 = vmatprep.subr.mxu0 0.0
        %3711 = vmatpush1.msra.mxu0 0.0
        %3712 = vmatprep.subr.mxu0 0.0
        %3713 = vmatpush1.msra.mxu0 0.0
        %3714 = vmatprep.mubr.f32.mxu0 0.0
        %3715 = vmatmul.mubr.f32.gmra.mrb[0].mxu0 %v935
        %v3716 = vpop.f32.mrb[0].mxu0
        %v3717 = vadd.f32 0.0, %v3716
        %v3718 = vpop.f32.mrb[0].mxu0
        %3719 = vdwg.mxu0
        %3720 = vmatprep.subr.mxu0 0.0
        %3721 = vmatpush1.msra.mxu0 %v3617
        %3722 = vmatprep.subr.mxu0 0.0
        %3723 = vmatpush1.msra.mxu0 0.0
        %3724 = vmatprep.subr.mxu0 0.0
        %3725 = vmatpush1.msra.mxu0 0.0
        %3726 = vmatprep.subr.mxu0 0.0
        %3727 = vmatpush1.msra.mxu0 0.0
        %3728 = vmatprep.subr.mxu0 0.0
        %3729 = vmatpush1.msra.mxu0 0.0
        %3730 = vmatprep.subr.mxu0 0.0
        %3731 = vmatpush1.msra.mxu0 0.0
        %3732 = vmatprep.subr.mxu0 0.0
        %3733 = vmatpush1.msra.mxu0 0.0
        %3734 = vmatprep.subr.mxu0 0.0
        %3735 = vmatpush1.msra.mxu0 0.0
        %3736 = vmatprep.subr.mxu0 0.0
        %3737 = vmatpush1.msra.mxu0 0.0
        %3738 = vmatprep.subr.mxu0 0.0
        %3739 = vmatpush1.msra.mxu0 0.0
        %3740 = vmatprep.subr.mxu0 0.0
        %3741 = vmatpush1.msra.mxu0 0.0
        %3742 = vmatprep.subr.mxu0 0.0
        %3743 = vmatpush1.msra.mxu0 0.0
        %3744 = vmatprep.subr.mxu0 0.0
        %3745 = vmatpush1.msra.mxu0 0.0
        %3746 = vmatprep.subr.mxu0 0.0
        %3747 = vmatpush1.msra.mxu0 0.0
        %3748 = vmatprep.subr.mxu0 0.0
        %3749 = vmatpush1.msra.mxu0 0.0
        %3750 = vmatprep.subr.mxu0 0.0
        %3751 = vmatpush1.msra.mxu0 0.0
        %3752 = vmatprep.subr.mxu0 0.0
        %3753 = vmatpush1.msra.mxu0 0.0
        %3754 = vmatprep.subr.mxu0 0.0
        %3755 = vmatpush1.msra.mxu0 0.0
        %3756 = vmatprep.subr.mxu0 0.0
        %3757 = vmatpush1.msra.mxu0 0.0
        %3758 = vmatprep.subr.mxu0 0.0
        %3759 = vmatpush1.msra.mxu0 0.0
        %3760 = vmatprep.subr.mxu0 0.0
        %3761 = vmatpush1.msra.mxu0 0.0
        %3762 = vmatprep.subr.mxu0 0.0
        %3763 = vmatpush1.msra.mxu0 0.0
        %3764 = vmatprep.subr.mxu0 0.0
        %3765 = vmatpush1.msra.mxu0 0.0
        %3766 = vmatprep.subr.mxu0 0.0
        %3767 = vmatpush1.msra.mxu0 0.0
        %3768 = vmatprep.subr.mxu0 0.0
        %3769 = vmatpush1.msra.mxu0 0.0
        %3770 = vmatprep.subr.mxu0 0.0
        %3771 = vmatpush1.msra.mxu0 0.0
        %3772 = vmatprep.subr.mxu0 0.0
        %3773 = vmatpush1.msra.mxu0 0.0
        %3774 = vmatprep.subr.mxu0 0.0
        %3775 = vmatpush1.msra.mxu0 0.0
        %3776 = vmatprep.subr.mxu0 0.0
        %3777 = vmatpush1.msra.mxu0 0.0
        %3778 = vmatprep.subr.mxu0 0.0
        %3779 = vmatpush1.msra.mxu0 0.0
        %3780 = vmatprep.subr.mxu0 0.0
        %3781 = vmatpush1.msra.mxu0 0.0
        %3782 = vmatprep.subr.mxu0 0.0
        %3783 = vmatpush1.msra.mxu0 0.0
        %3784 = vmatprep.mubr.f32.mxu0 0.0
        %3785 = vmatmul.mubr.f32.gmra.mrb[0].mxu0 %v1008
        %v3786 = vpop.f32.mrb[0].mxu0
        %v3787 = vadd.f32 0.0, %v3786
        %v3788 = vpop.f32.mrb[0].mxu0
        %3789 = vdwg.mxu0
        %3790 = vmatprep.subr.mxu0 0.0
        %3791 = vmatpush1.msra.mxu0 %v3622
        %3792 = vmatprep.subr.mxu0 0.0
        %3793 = vmatpush1.msra.mxu0 0.0
        %3794 = vmatprep.subr.mxu0 0.0
        %3795 = vmatpush1.msra.mxu0 0.0
        %3796 = vmatprep.subr.mxu0 0.0
        %3797 = vmatpush1.msra.mxu0 0.0
        %3798 = vmatprep.subr.mxu0 0.0
        %3799 = vmatpush1.msra.mxu0 0.0
        %3800 = vmatprep.subr.mxu0 0.0
        %3801 = vmatpush1.msra.mxu0 0.0
        %3802 = vmatprep.subr.mxu0 0.0
        %3803 = vmatpush1.msra.mxu0 0.0
        %3804 = vmatprep.subr.mxu0 0.0
        %3805 = vmatpush1.msra.mxu0 0.0
        %3806 = vmatprep.subr.mxu0 0.0
        %3807 = vmatpush1.msra.mxu0 0.0
        %3808 = vmatprep.subr.mxu0 0.0
        %3809 = vmatpush1.msra.mxu0 0.0
        %3810 = vmatprep.subr.mxu0 0.0
        %3811 = vmatpush1.msra.mxu0 0.0
        %3812 = vmatprep.subr.mxu0 0.0
        %3813 = vmatpush1.msra.mxu0 0.0
        %3814 = vmatprep.subr.mxu0 0.0
        %3815 = vmatpush1.msra.mxu0 0.0
        %3816 = vmatprep.subr.mxu0 0.0
        %3817 = vmatpush1.msra.mxu0 0.0
        %3818 = vmatprep.subr.mxu0 0.0
        %3819 = vmatpush1.msra.mxu0 0.0
        %3820 = vmatprep.subr.mxu0 0.0
        %3821 = vmatpush1.msra.mxu0 0.0
        %3822 = vmatprep.subr.mxu0 0.0
        %3823 = vmatpush1.msra.mxu0 0.0
        %3824 = vmatprep.subr.mxu0 0.0
        %3825 = vmatpush1.msra.mxu0 0.0
        %3826 = vmatprep.subr.mxu0 0.0
        %3827 = vmatpush1.msra.mxu0 0.0
        %3828 = vmatprep.subr.mxu0 0.0
        %3829 = vmatpush1.msra.mxu0 0.0
        %3830 = vmatprep.subr.mxu0 0.0
        %3831 = vmatpush1.msra.mxu0 0.0
        %3832 = vmatprep.subr.mxu0 0.0
        %3833 = vmatpush1.msra.mxu0 0.0
        %3834 = vmatprep.subr.mxu0 0.0
        %3835 = vmatpush1.msra.mxu0 0.0
        %3836 = vmatprep.subr.mxu0 0.0
        %3837 = vmatpush1.msra.mxu0 0.0
        %3838 = vmatprep.subr.mxu0 0.0
        %3839 = vmatpush1.msra.mxu0 0.0
        %3840 = vmatprep.subr.mxu0 0.0
        %3841 = vmatpush1.msra.mxu0 0.0
        %3842 = vmatprep.subr.mxu0 0.0
        %3843 = vmatpush1.msra.mxu0 0.0
        %3844 = vmatprep.subr.mxu0 0.0
        %3845 = vmatpush1.msra.mxu0 0.0
        %3846 = vmatprep.subr.mxu0 0.0
        %3847 = vmatpush1.msra.mxu0 0.0
        %3848 = vmatprep.subr.mxu0 0.0
        %3849 = vmatpush1.msra.mxu0 0.0
        %3850 = vmatprep.subr.mxu0 0.0
        %3851 = vmatpush1.msra.mxu0 0.0
        %3852 = vmatprep.subr.mxu0 0.0
        %3853 = vmatpush1.msra.mxu0 0.0
        %3854 = vmatprep.mubr.f32.mxu0 0.0
        %3855 = vmatmul.mubr.f32.gmra.mrb[0].mxu0 %v1081
        %v3856 = vpop.f32.mrb[0].mxu0
        %v3857 = vadd.f32 0.0, %v3856
        %v3858 = vpop.f32.mrb[0].mxu0
        %3859 = vdwg.mxu0
        %3860 = vmatprep.subr.mxu0 0.0
        %3861 = vmatpush1.msra.mxu0 %v3627
        %3862 = vmatprep.subr.mxu0 0.0
        %3863 = vmatpush1.msra.mxu0 0.0
        %3864 = vmatprep.subr.mxu0 0.0
        %3865 = vmatpush1.msra.mxu0 0.0
        %3866 = vmatprep.subr.mxu0 0.0
        %3867 = vmatpush1.msra.mxu0 0.0
        %3868 = vmatprep.subr.mxu0 0.0
        %3869 = vmatpush1.msra.mxu0 0.0
        %3870 = vmatprep.subr.mxu0 0.0
        %3871 = vmatpush1.msra.mxu0 0.0
        %3872 = vmatprep.subr.mxu0 0.0
        %3873 = vmatpush1.msra.mxu0 0.0
        %3874 = vmatprep.subr.mxu0 0.0
        %3875 = vmatpush1.msra.mxu0 0.0
        %3876 = vmatprep.subr.mxu0 0.0
        %3877 = vmatpush1.msra.mxu0 0.0
        %3878 = vmatprep.subr.mxu0 0.0
        %3879 = vmatpush1.msra.mxu0 0.0
        %3880 = vmatprep.subr.mxu0 0.0
        %3881 = vmatpush1.msra.mxu0 0.0
        %3882 = vmatprep.subr.mxu0 0.0
        %3883 = vmatpush1.msra.mxu0 0.0
        %3884 = vmatprep.subr.mxu0 0.0
        %3885 = vmatpush1.msra.mxu0 0.0
        %3886 = vmatprep.subr.mxu0 0.0
        %3887 = vmatpush1.msra.mxu0 0.0
        %3888 = vmatprep.subr.mxu0 0.0
        %3889 = vmatpush1.msra.mxu0 0.0
        %3890 = vmatprep.subr.mxu0 0.0
        %3891 = vmatpush1.msra.mxu0 0.0
        %3892 = vmatprep.subr.mxu0 0.0
        %3893 = vmatpush1.msra.mxu0 0.0
        %3894 = vmatprep.subr.mxu0 0.0
        %3895 = vmatpush1.msra.mxu0 0.0
        %3896 = vmatprep.subr.mxu0 0.0
        %3897 = vmatpush1.msra.mxu0 0.0
        %3898 = vmatprep.subr.mxu0 0.0
        %3899 = vmatpush1.msra.mxu0 0.0
        %3900 = vmatprep.subr.mxu0 0.0
        %3901 = vmatpush1.msra.mxu0 0.0
        %3902 = vmatprep.subr.mxu0 0.0
        %3903 = vmatpush1.msra.mxu0 0.0
        %3904 = vmatprep.subr.mxu0 0.0
        %3905 = vmatpush1.msra.mxu0 0.0
        %3906 = vmatprep.subr.mxu0 0.0
        %3907 = vmatpush1.msra.mxu0 0.0
        %3908 = vmatprep.subr.mxu0 0.0
        %3909 = vmatpush1.msra.mxu0 0.0
        %3910 = vmatprep.subr.mxu0 0.0
        %3911 = vmatpush1.msra.mxu0 0.0
        %3912 = vmatprep.subr.mxu0 0.0
        %3913 = vmatpush1.msra.mxu0 0.0
        %3914 = vmatprep.subr.mxu0 0.0
        %3915 = vmatpush1.msra.mxu0 0.0
        %3916 = vmatprep.subr.mxu0 0.0
        %3917 = vmatpush1.msra.mxu0 0.0
        %3918 = vmatprep.subr.mxu0 0.0
        %3919 = vmatpush1.msra.mxu0 0.0
        %3920 = vmatprep.subr.mxu0 0.0
        %3921 = vmatpush1.msra.mxu0 0.0
        %3922 = vmatprep.subr.mxu0 0.0
        %3923 = vmatpush1.msra.mxu0 0.0
        %3924 = vmatprep.mubr.f32.mxu0 0.0
        %3925 = vmatmul.mubr.f32.gmra.mrb[0].mxu0 %v1154
        %v3926 = vpop.f32.mrb[0].mxu0
        %v3927 = vadd.f32 0.0, %v3926
        %v3928 = vpop.f32.mrb[0].mxu0
        %3929 = vdwg.mxu0
        %3930 = vmatprep.subr.mxu0 0.0
        %3931 = vmatpush1.msra.mxu0 %v3632
        %3932 = vmatprep.subr.mxu0 0.0
        %3933 = vmatpush1.msra.mxu0 0.0
        %3934 = vmatprep.subr.mxu0 0.0
        %3935 = vmatpush1.msra.mxu0 0.0
        %3936 = vmatprep.subr.mxu0 0.0
        %3937 = vmatpush1.msra.mxu0 0.0
        %3938 = vmatprep.subr.mxu0 0.0
        %3939 = vmatpush1.msra.mxu0 0.0
        %3940 = vmatprep.subr.mxu0 0.0
        %3941 = vmatpush1.msra.mxu0 0.0
        %3942 = vmatprep.subr.mxu0 0.0
        %3943 = vmatpush1.msra.mxu0 0.0
        %3944 = vmatprep.subr.mxu0 0.0
        %3945 = vmatpush1.msra.mxu0 0.0
        %3946 = vmatprep.subr.mxu0 0.0
        %3947 = vmatpush1.msra.mxu0 0.0
        %3948 = vmatprep.subr.mxu0 0.0
        %3949 = vmatpush1.msra.mxu0 0.0
        %3950 = vmatprep.subr.mxu0 0.0
        %3951 = vmatpush1.msra.mxu0 0.0
        %3952 = vmatprep.subr.mxu0 0.0
        %3953 = vmatpush1.msra.mxu0 0.0
        %3954 = vmatprep.subr.mxu0 0.0
        %3955 = vmatpush1.msra.mxu0 0.0
        %3956 = vmatprep.subr.mxu0 0.0
        %3957 = vmatpush1.msra.mxu0 0.0
        %3958 = vmatprep.subr.mxu0 0.0
        %3959 = vmatpush1.msra.mxu0 0.0
        %3960 = vmatprep.subr.mxu0 0.0
        %3961 = vmatpush1.msra.mxu0 0.0
        %3962 = vmatprep.subr.mxu0 0.0
        %3963 = vmatpush1.msra.mxu0 0.0
        %3964 = vmatprep.subr.mxu0 0.0
        %3965 = vmatpush1.msra.mxu0 0.0
        %3966 = vmatprep.subr.mxu0 0.0
        %3967 = vmatpush1.msra.mxu0 0.0
        %3968 = vmatprep.subr.mxu0 0.0
        %3969 = vmatpush1.msra.mxu0 0.0
        %3970 = vmatprep.subr.mxu0 0.0
        %3971 = vmatpush1.msra.mxu0 0.0
        %3972 = vmatprep.subr.mxu0 0.0
        %3973 = vmatpush1.msra.mxu0 0.0
        %3974 = vmatprep.subr.mxu0 0.0
        %3975 = vmatpush1.msra.mxu0 0.0
        %3976 = vmatprep.subr.mxu0 0.0
        %3977 = vmatpush1.msra.mxu0 0.0
        %3978 = vmatprep.subr.mxu0 0.0
        %3979 = vmatpush1.msra.mxu0 0.0
        %3980 = vmatprep.subr.mxu0 0.0
        %3981 = vmatpush1.msra.mxu0 0.0
        %3982 = vmatprep.subr.mxu0 0.0
        %3983 = vmatpush1.msra.mxu0 0.0
        %3984 = vmatprep.subr.mxu0 0.0
        %3985 = vmatpush1.msra.mxu0 0.0
        %3986 = vmatprep.subr.mxu0 0.0
        %3987 = vmatpush1.msra.mxu0 0.0
        %3988 = vmatprep.subr.mxu0 0.0
        %3989 = vmatpush1.msra.mxu0 0.0
        %3990 = vmatprep.subr.mxu0 0.0
        %3991 = vmatpush1.msra.mxu0 0.0
        %3992 = vmatprep.subr.mxu0 0.0
        %3993 = vmatpush1.msra.mxu0 0.0
        %3994 = vmatprep.mubr.f32.mxu0 0.0
        %3995 = vmatmul.mubr.f32.gmra.mrb[0].mxu0 %v1227
        %v3996 = vpop.f32.mrb[0].mxu0
        %v3997 = vadd.f32 0.0, %v3996
        %v3998 = vpop.f32.mrb[0].mxu0
        %3999 = vdwg.mxu0
        %4000 = vmatprep.subr.mxu0 0.0
        %4001 = vmatpush1.msra.mxu0 %v3637
        %4002 = vmatprep.subr.mxu0 0.0
        %4003 = vmatpush1.msra.mxu0 0.0
        %4004 = vmatprep.subr.mxu0 0.0
        %4005 = vmatpush1.msra.mxu0 0.0
        %4006 = vmatprep.subr.mxu0 0.0
        %4007 = vmatpush1.msra.mxu0 0.0
        %4008 = vmatprep.subr.mxu0 0.0
        %4009 = vmatpush1.msra.mxu0 0.0
        %4010 = vmatprep.subr.mxu0 0.0
        %4011 = vmatpush1.msra.mxu0 0.0
        %4012 = vmatprep.subr.mxu0 0.0
        %4013 = vmatpush1.msra.mxu0 0.0
        %4014 = vmatprep.subr.mxu0 0.0
        %4015 = vmatpush1.msra.mxu0 0.0
        %4016 = vmatprep.subr.mxu0 0.0
        %4017 = vmatpush1.msra.mxu0 0.0
        %4018 = vmatprep.subr.mxu0 0.0
        %4019 = vmatpush1.msra.mxu0 0.0
        %4020 = vmatprep.subr.mxu0 0.0
        %4021 = vmatpush1.msra.mxu0 0.0
        %4022 = vmatprep.subr.mxu0 0.0
        %4023 = vmatpush1.msra.mxu0 0.0
        %4024 = vmatprep.subr.mxu0 0.0
        %4025 = vmatpush1.msra.mxu0 0.0
        %4026 = vmatprep.subr.mxu0 0.0
        %4027 = vmatpush1.msra.mxu0 0.0
        %4028 = vmatprep.subr.mxu0 0.0
        %4029 = vmatpush1.msra.mxu0 0.0
        %4030 = vmatprep.subr.mxu0 0.0
        %4031 = vmatpush1.msra.mxu0 0.0
        %4032 = vmatprep.subr.mxu0 0.0
        %4033 = vmatpush1.msra.mxu0 0.0
        %4034 = vmatprep.subr.mxu0 0.0
        %4035 = vmatpush1.msra.mxu0 0.0
        %4036 = vmatprep.subr.mxu0 0.0
        %4037 = vmatpush1.msra.mxu0 0.0
        %4038 = vmatprep.subr.mxu0 0.0
        %4039 = vmatpush1.msra.mxu0 0.0
        %4040 = vmatprep.subr.mxu0 0.0
        %4041 = vmatpush1.msra.mxu0 0.0
        %4042 = vmatprep.subr.mxu0 0.0
        %4043 = vmatpush1.msra.mxu0 0.0
        %4044 = vmatprep.subr.mxu0 0.0
        %4045 = vmatpush1.msra.mxu0 0.0
        %4046 = vmatprep.subr.mxu0 0.0
        %4047 = vmatpush1.msra.mxu0 0.0
        %4048 = vmatprep.subr.mxu0 0.0
        %4049 = vmatpush1.msra.mxu0 0.0
        %4050 = vmatprep.subr.mxu0 0.0
        %4051 = vmatpush1.msra.mxu0 0.0
        %4052 = vmatprep.subr.mxu0 0.0
        %4053 = vmatpush1.msra.mxu0 0.0
        %4054 = vmatprep.subr.mxu0 0.0
        %4055 = vmatpush1.msra.mxu0 0.0
        %4056 = vmatprep.subr.mxu0 0.0
        %4057 = vmatpush1.msra.mxu0 0.0
        %4058 = vmatprep.subr.mxu0 0.0
        %4059 = vmatpush1.msra.mxu0 0.0
        %4060 = vmatprep.subr.mxu0 0.0
        %4061 = vmatpush1.msra.mxu0 0.0
        %4062 = vmatprep.subr.mxu0 0.0
        %4063 = vmatpush1.msra.mxu0 0.0
        %4064 = vmatprep.mubr.f32.mxu0 0.0
        %4065 = vmatmul.mubr.f32.gmra.mrb[0].mxu0 %v1300
        %v4066 = vpop.f32.mrb[0].mxu0
        %v4067 = vadd.f32 0.0, %v4066
        %v4068 = vpop.f32.mrb[0].mxu0
        %4069 = vdwg.mxu0
        %4070 = vmatprep.subr.mxu0 0.0
        %4071 = vmatpush1.msra.mxu0 %v3642
        %4072 = vmatprep.subr.mxu0 0.0
        %4073 = vmatpush1.msra.mxu0 0.0
        %4074 = vmatprep.subr.mxu0 0.0
        %4075 = vmatpush1.msra.mxu0 0.0
        %4076 = vmatprep.subr.mxu0 0.0
        %4077 = vmatpush1.msra.mxu0 0.0
        %4078 = vmatprep.subr.mxu0 0.0
        %4079 = vmatpush1.msra.mxu0 0.0
        %4080 = vmatprep.subr.mxu0 0.0
        %4081 = vmatpush1.msra.mxu0 0.0
        %4082 = vmatprep.subr.mxu0 0.0
        %4083 = vmatpush1.msra.mxu0 0.0
        %4084 = vmatprep.subr.mxu0 0.0
        %4085 = vmatpush1.msra.mxu0 0.0
        %4086 = vmatprep.subr.mxu0 0.0
        %4087 = vmatpush1.msra.mxu0 0.0
        %4088 = vmatprep.subr.mxu0 0.0
        %4089 = vmatpush1.msra.mxu0 0.0
        %4090 = vmatprep.subr.mxu0 0.0
        %4091 = vmatpush1.msra.mxu0 0.0
        %4092 = vmatprep.subr.mxu0 0.0
        %4093 = vmatpush1.msra.mxu0 0.0
        %4094 = vmatprep.subr.mxu0 0.0
        %4095 = vmatpush1.msra.mxu0 0.0
        %4096 = vmatprep.subr.mxu0 0.0
        %4097 = vmatpush1.msra.mxu0 0.0
        %4098 = vmatprep.subr.mxu0 0.0
        %4099 = vmatpush1.msra.mxu0 0.0
        %4100 = vmatprep.subr.mxu0 0.0
        %4101 = vmatpush1.msra.mxu0 0.0
        %4102 = vmatprep.subr.mxu0 0.0
        %4103 = vmatpush1.msra.mxu0 0.0
        %4104 = vmatprep.subr.mxu0 0.0
        %4105 = vmatpush1.msra.mxu0 0.0
        %4106 = vmatprep.subr.mxu0 0.0
        %4107 = vmatpush1.msra.mxu0 0.0
        %4108 = vmatprep.subr.mxu0 0.0
        %4109 = vmatpush1.msra.mxu0 0.0
        %4110 = vmatprep.subr.mxu0 0.0
        %4111 = vmatpush1.msra.mxu0 0.0
        %4112 = vmatprep.subr.mxu0 0.0
        %4113 = vmatpush1.msra.mxu0 0.0
        %4114 = vmatprep.subr.mxu0 0.0
        %4115 = vmatpush1.msra.mxu0 0.0
        %4116 = vmatprep.subr.mxu0 0.0
        %4117 = vmatpush1.msra.mxu0 0.0
        %4118 = vmatprep.subr.mxu0 0.0
        %4119 = vmatpush1.msra.mxu0 0.0
        %4120 = vmatprep.subr.mxu0 0.0
        %4121 = vmatpush1.msra.mxu0 0.0
        %4122 = vmatprep.subr.mxu0 0.0
        %4123 = vmatpush1.msra.mxu0 0.0
        %4124 = vmatprep.subr.mxu0 0.0
        %4125 = vmatpush1.msra.mxu0 0.0
        %4126 = vmatprep.subr.mxu0 0.0
        %4127 = vmatpush1.msra.mxu0 0.0
        %4128 = vmatprep.subr.mxu0 0.0
        %4129 = vmatpush1.msra.mxu0 0.0
        %4130 = vmatprep.subr.mxu0 0.0
        %4131 = vmatpush1.msra.mxu0 0.0
        %4132 = vmatprep.subr.mxu0 0.0
        %4133 = vmatpush1.msra.mxu0 0.0
        %4134 = vmatprep.mubr.f32.mxu0 0.0
        %4135 = vmatmul.mubr.f32.gmra.mrb[0].mxu0 %v1373
        %v4136 = vpop.f32.mrb[0].mxu0
        %v4137 = vadd.f32 0.0, %v4136
        %v4138 = vpop.f32.mrb[0].mxu0
        %4139 = vdwg.mxu0
        %4140 = vmatprep.subr.mxu0 0.0
        %4141 = vmatpush1.msra.mxu0 %v3647
        %4142 = vmatprep.subr.mxu0 0.0
        %4143 = vmatpush1.msra.mxu0 0.0
        %4144 = vmatprep.subr.mxu0 0.0
        %4145 = vmatpush1.msra.mxu0 0.0
        %4146 = vmatprep.subr.mxu0 0.0
        %4147 = vmatpush1.msra.mxu0 0.0
        %4148 = vmatprep.subr.mxu0 0.0
        %4149 = vmatpush1.msra.mxu0 0.0
        %4150 = vmatprep.subr.mxu0 0.0
        %4151 = vmatpush1.msra.mxu0 0.0
        %4152 = vmatprep.subr.mxu0 0.0
        %4153 = vmatpush1.msra.mxu0 0.0
        %4154 = vmatprep.subr.mxu0 0.0
        %4155 = vmatpush1.msra.mxu0 0.0
        %4156 = vmatprep.subr.mxu0 0.0
        %4157 = vmatpush1.msra.mxu0 0.0
        %4158 = vmatprep.subr.mxu0 0.0
        %4159 = vmatpush1.msra.mxu0 0.0
        %4160 = vmatprep.subr.mxu0 0.0
        %4161 = vmatpush1.msra.mxu0 0.0
        %4162 = vmatprep.subr.mxu0 0.0
        %4163 = vmatpush1.msra.mxu0 0.0
        %4164 = vmatprep.subr.mxu0 0.0
        %4165 = vmatpush1.msra.mxu0 0.0
        %4166 = vmatprep.subr.mxu0 0.0
        %4167 = vmatpush1.msra.mxu0 0.0
        %4168 = vmatprep.subr.mxu0 0.0
        %4169 = vmatpush1.msra.mxu0 0.0
        %4170 = vmatprep.subr.mxu0 0.0
        %4171 = vmatpush1.msra.mxu0 0.0
        %4172 = vmatprep.subr.mxu0 0.0
        %4173 = vmatpush1.msra.mxu0 0.0
        %4174 = vmatprep.subr.mxu0 0.0
        %4175 = vmatpush1.msra.mxu0 0.0
        %4176 = vmatprep.subr.mxu0 0.0
        %4177 = vmatpush1.msra.mxu0 0.0
        %4178 = vmatprep.subr.mxu0 0.0
        %4179 = vmatpush1.msra.mxu0 0.0
        %4180 = vmatprep.subr.mxu0 0.0
        %4181 = vmatpush1.msra.mxu0 0.0
        %4182 = vmatprep.subr.mxu0 0.0
        %4183 = vmatpush1.msra.mxu0 0.0
        %4184 = vmatprep.subr.mxu0 0.0
        %4185 = vmatpush1.msra.mxu0 0.0
        %4186 = vmatprep.subr.mxu0 0.0
        %4187 = vmatpush1.msra.mxu0 0.0
        %4188 = vmatprep.subr.mxu0 0.0
        %4189 = vmatpush1.msra.mxu0 0.0
        %4190 = vmatprep.subr.mxu0 0.0
        %4191 = vmatpush1.msra.mxu0 0.0
        %4192 = vmatprep.subr.mxu0 0.0
        %4193 = vmatpush1.msra.mxu0 0.0
        %4194 = vmatprep.subr.mxu0 0.0
        %4195 = vmatpush1.msra.mxu0 0.0
        %4196 = vmatprep.subr.mxu0 0.0
        %4197 = vmatpush1.msra.mxu0 0.0
        %4198 = vmatprep.subr.mxu0 0.0
        %4199 = vmatpush1.msra.mxu0 0.0
        %4200 = vmatprep.subr.mxu0 0.0
        %4201 = vmatpush1.msra.mxu0 0.0
        %4202 = vmatprep.subr.mxu0 0.0
        %4203 = vmatpush1.msra.mxu0 0.0
        %4204 = vmatprep.mubr.f32.mxu0 0.0
        %4205 = vmatmul.mubr.f32.gmra.mrb[0].mxu0 %v1446
        %v4206 = vpop.f32.mrb[0].mxu0
        %v4207 = vadd.f32 0.0, %v4206
        %v4208 = vpop.f32.mrb[0].mxu0
        %4209 = vdwg.mxu0
        %v4210 = vadd.f32 %v3502, %v3717
        %v4211 = vadd.f32 %v3507, %v3787
        %v4212 = vadd.f32 %v3512, %v3857
        %v4213 = vadd.f32 %v3517, %v3927
        %v4214 = vadd.f32 %v3522, %v3997
        %v4215 = vadd.f32 %v3527, %v4067
        %v4216 = vadd.f32 %v3532, %v4137
        %v4217 = vadd.f32 %v3537, %v4207
        %4219 = vrot.lane.b32.xlu0 %v3612, 96
        %v4220 = vpop.permute.xlu0 %4219
        %4222 = vmatprep.subr.mxu0 0.0
        %4223 = vmatpush1.msra.mxu0 %v4220
        %4224 = vmatprep.subr.mxu0 0.0
        %4225 = vmatpush1.msra.mxu0 0.0
        %4226 = vmatprep.subr.mxu0 0.0
        %4227 = vmatpush1.msra.mxu0 0.0
        %4228 = vmatprep.subr.mxu0 0.0
        %4229 = vmatpush1.msra.mxu0 0.0
        %4230 = vmatprep.subr.mxu0 0.0
        %4231 = vmatpush1.msra.mxu0 0.0
        %4232 = vmatprep.subr.mxu0 0.0
        %4233 = vmatpush1.msra.mxu0 0.0
        %4234 = vmatprep.subr.mxu0 0.0
        %4235 = vmatpush1.msra.mxu0 0.0
        %4236 = vmatprep.subr.mxu0 0.0
        %4237 = vmatpush1.msra.mxu0 0.0
        %4238 = vmatprep.subr.mxu0 0.0
        %4239 = vmatpush1.msra.mxu0 0.0
        %4240 = vmatprep.subr.mxu0 0.0
        %4241 = vmatpush1.msra.mxu0 0.0
        %4242 = vmatprep.subr.mxu0 0.0
        %4243 = vmatpush1.msra.mxu0 0.0
        %4244 = vmatprep.subr.mxu0 0.0
        %4245 = vmatpush1.msra.mxu0 0.0
        %4246 = vmatprep.subr.mxu0 0.0
        %4247 = vmatpush1.msra.mxu0 0.0
        %4248 = vmatprep.subr.mxu0 0.0
        %4249 = vmatpush1.msra.mxu0 0.0
        %4250 = vmatprep.subr.mxu0 0.0
        %4251 = vmatpush1.msra.mxu0 0.0
        %4252 = vmatprep.subr.mxu0 0.0
        %4253 = vmatpush1.msra.mxu0 0.0
        %4254 = vmatprep.subr.mxu0 0.0
        %4255 = vmatpush1.msra.mxu0 0.0
        %4256 = vmatprep.subr.mxu0 0.0
        %4257 = vmatpush1.msra.mxu0 0.0
        %4258 = vmatprep.subr.mxu0 0.0
        %4259 = vmatpush1.msra.mxu0 0.0
        %4260 = vmatprep.subr.mxu0 0.0
        %4261 = vmatpush1.msra.mxu0 0.0
        %4262 = vmatprep.subr.mxu0 0.0
        %4263 = vmatpush1.msra.mxu0 0.0
        %4264 = vmatprep.subr.mxu0 0.0
        %4265 = vmatpush1.msra.mxu0 0.0
        %4266 = vmatprep.subr.mxu0 0.0
        %4267 = vmatpush1.msra.mxu0 0.0
        %4268 = vmatprep.subr.mxu0 0.0
        %4269 = vmatpush1.msra.mxu0 0.0
        %4270 = vmatprep.subr.mxu0 0.0
        %4271 = vmatpush1.msra.mxu0 0.0
        %4272 = vmatprep.subr.mxu0 0.0
        %4273 = vmatpush1.msra.mxu0 0.0
        %4274 = vmatprep.subr.mxu0 0.0
        %4275 = vmatpush1.msra.mxu0 0.0
        %4276 = vmatprep.subr.mxu0 0.0
        %4277 = vmatpush1.msra.mxu0 0.0
        %4278 = vmatprep.subr.mxu0 0.0
        %4279 = vmatpush1.msra.mxu0 0.0
        %4280 = vmatprep.subr.mxu0 0.0
        %4281 = vmatpush1.msra.mxu0 0.0
        %4282 = vmatprep.subr.mxu0 0.0
        %4283 = vmatpush1.msra.mxu0 0.0
        %4284 = vmatprep.subr.mxu0 0.0
        %4285 = vmatpush1.msra.mxu0 0.0
        %4286 = vmatprep.mubr.f32.mxu0 0.0
        %4287 = vmatmul.mubr.f32.gmra.mrb[0].mxu0 %v1531
        %v4288 = vpop.f32.mrb[0].mxu0
        %v4289 = vadd.f32 0.0, %v4288
        %v4290 = vpop.f32.mrb[0].mxu0
        %4291 = vdwg.mxu0
        %4293 = vrot.lane.b32.xlu0 %v3617, 96
        %v4294 = vpop.permute.xlu0 %4293
        %4296 = vmatprep.subr.mxu0 0.0
        %4297 = vmatpush1.msra.mxu0 %v4294
        %4298 = vmatprep.subr.mxu0 0.0
        %4299 = vmatpush1.msra.mxu0 0.0
        %4300 = vmatprep.subr.mxu0 0.0
        %4301 = vmatpush1.msra.mxu0 0.0
        %4302 = vmatprep.subr.mxu0 0.0
        %4303 = vmatpush1.msra.mxu0 0.0
        %4304 = vmatprep.subr.mxu0 0.0
        %4305 = vmatpush1.msra.mxu0 0.0
        %4306 = vmatprep.subr.mxu0 0.0
        %4307 = vmatpush1.msra.mxu0 0.0
        %4308 = vmatprep.subr.mxu0 0.0
        %4309 = vmatpush1.msra.mxu0 0.0
        %4310 = vmatprep.subr.mxu0 0.0
        %4311 = vmatpush1.msra.mxu0 0.0
        %4312 = vmatprep.subr.mxu0 0.0
        %4313 = vmatpush1.msra.mxu0 0.0
        %4314 = vmatprep.subr.mxu0 0.0
        %4315 = vmatpush1.msra.mxu0 0.0
        %4316 = vmatprep.subr.mxu0 0.0
        %4317 = vmatpush1.msra.mxu0 0.0
        %4318 = vmatprep.subr.mxu0 0.0
        %4319 = vmatpush1.msra.mxu0 0.0
        %4320 = vmatprep.subr.mxu0 0.0
        %4321 = vmatpush1.msra.mxu0 0.0
        %4322 = vmatprep.subr.mxu0 0.0
        %4323 = vmatpush1.msra.mxu0 0.0
        %4324 = vmatprep.subr.mxu0 0.0
        %4325 = vmatpush1.msra.mxu0 0.0
        %4326 = vmatprep.subr.mxu0 0.0
        %4327 = vmatpush1.msra.mxu0 0.0
        %4328 = vmatprep.subr.mxu0 0.0
        %4329 = vmatpush1.msra.mxu0 0.0
        %4330 = vmatprep.subr.mxu0 0.0
        %4331 = vmatpush1.msra.mxu0 0.0
        %4332 = vmatprep.subr.mxu0 0.0
        %4333 = vmatpush1.msra.mxu0 0.0
        %4334 = vmatprep.subr.mxu0 0.0
        %4335 = vmatpush1.msra.mxu0 0.0
        %4336 = vmatprep.subr.mxu0 0.0
        %4337 = vmatpush1.msra.mxu0 0.0
        %4338 = vmatprep.subr.mxu0 0.0
        %4339 = vmatpush1.msra.mxu0 0.0
        %4340 = vmatprep.subr.mxu0 0.0
        %4341 = vmatpush1.msra.mxu0 0.0
        %4342 = vmatprep.subr.mxu0 0.0
        %4343 = vmatpush1.msra.mxu0 0.0
        %4344 = vmatprep.subr.mxu0 0.0
        %4345 = vmatpush1.msra.mxu0 0.0
        %4346 = vmatprep.subr.mxu0 0.0
        %4347 = vmatpush1.msra.mxu0 0.0
        %4348 = vmatprep.subr.mxu0 0.0
        %4349 = vmatpush1.msra.mxu0 0.0
        %4350 = vmatprep.subr.mxu0 0.0
        %4351 = vmatpush1.msra.mxu0 0.0
        %4352 = vmatprep.subr.mxu0 0.0
        %4353 = vmatpush1.msra.mxu0 0.0
        %4354 = vmatprep.subr.mxu0 0.0
        %4355 = vmatpush1.msra.mxu0 0.0
        %4356 = vmatprep.subr.mxu0 0.0
        %4357 = vmatpush1.msra.mxu0 0.0
        %4358 = vmatprep.subr.mxu0 0.0
        %4359 = vmatpush1.msra.mxu0 0.0
        %4360 = vmatprep.mubr.f32.mxu0 0.0
        %4361 = vmatmul.mubr.f32.gmra.mrb[0].mxu0 %v1608
        %v4362 = vpop.f32.mrb[0].mxu0
        %v4363 = vadd.f32 0.0, %v4362
        %v4364 = vpop.f32.mrb[0].mxu0
        %4365 = vdwg.mxu0
        %4367 = vrot.lane.b32.xlu0 %v3622, 96
        %v4368 = vpop.permute.xlu0 %4367
        %4370 = vmatprep.subr.mxu0 0.0
        %4371 = vmatpush1.msra.mxu0 %v4368
        %4372 = vmatprep.subr.mxu0 0.0
        %4373 = vmatpush1.msra.mxu0 0.0
        %4374 = vmatprep.subr.mxu0 0.0
        %4375 = vmatpush1.msra.mxu0 0.0
        %4376 = vmatprep.subr.mxu0 0.0
        %4377 = vmatpush1.msra.mxu0 0.0
        %4378 = vmatprep.subr.mxu0 0.0
        %4379 = vmatpush1.msra.mxu0 0.0
        %4380 = vmatprep.subr.mxu0 0.0
        %4381 = vmatpush1.msra.mxu0 0.0
        %4382 = vmatprep.subr.mxu0 0.0
        %4383 = vmatpush1.msra.mxu0 0.0
        %4384 = vmatprep.subr.mxu0 0.0
        %4385 = vmatpush1.msra.mxu0 0.0
        %4386 = vmatprep.subr.mxu0 0.0
        %4387 = vmatpush1.msra.mxu0 0.0
        %4388 = vmatprep.subr.mxu0 0.0
        %4389 = vmatpush1.msra.mxu0 0.0
        %4390 = vmatprep.subr.mxu0 0.0
        %4391 = vmatpush1.msra.mxu0 0.0
        %4392 = vmatprep.subr.mxu0 0.0
        %4393 = vmatpush1.msra.mxu0 0.0
        %4394 = vmatprep.subr.mxu0 0.0
        %4395 = vmatpush1.msra.mxu0 0.0
        %4396 = vmatprep.subr.mxu0 0.0
        %4397 = vmatpush1.msra.mxu0 0.0
        %4398 = vmatprep.subr.mxu0 0.0
        %4399 = vmatpush1.msra.mxu0 0.0
        %4400 = vmatprep.subr.mxu0 0.0
        %4401 = vmatpush1.msra.mxu0 0.0
        %4402 = vmatprep.subr.mxu0 0.0
        %4403 = vmatpush1.msra.mxu0 0.0
        %4404 = vmatprep.subr.mxu0 0.0
        %4405 = vmatpush1.msra.mxu0 0.0
        %4406 = vmatprep.subr.mxu0 0.0
        %4407 = vmatpush1.msra.mxu0 0.0
        %4408 = vmatprep.subr.mxu0 0.0
        %4409 = vmatpush1.msra.mxu0 0.0
        %4410 = vmatprep.subr.mxu0 0.0
        %4411 = vmatpush1.msra.mxu0 0.0
        %4412 = vmatprep.subr.mxu0 0.0
        %4413 = vmatpush1.msra.mxu0 0.0
        %4414 = vmatprep.subr.mxu0 0.0
        %4415 = vmatpush1.msra.mxu0 0.0
        %4416 = vmatprep.subr.mxu0 0.0
        %4417 = vmatpush1.msra.mxu0 0.0
        %4418 = vmatprep.subr.mxu0 0.0
        %4419 = vmatpush1.msra.mxu0 0.0
        %4420 = vmatprep.subr.mxu0 0.0
        %4421 = vmatpush1.msra.mxu0 0.0
        %4422 = vmatprep.subr.mxu0 0.0
        %4423 = vmatpush1.msra.mxu0 0.0
        %4424 = vmatprep.subr.mxu0 0.0
        %4425 = vmatpush1.msra.mxu0 0.0
        %4426 = vmatprep.subr.mxu0 0.0
        %4427 = vmatpush1.msra.mxu0 0.0
        %4428 = vmatprep.subr.mxu0 0.0
        %4429 = vmatpush1.msra.mxu0 0.0
        %4430 = vmatprep.subr.mxu0 0.0
        %4431 = vmatpush1.msra.mxu0 0.0
        %4432 = vmatprep.subr.mxu0 0.0
        %4433 = vmatpush1.msra.mxu0 0.0
        %4434 = vmatprep.mubr.f32.mxu0 0.0
        %4435 = vmatmul.mubr.f32.gmra.mrb[0].mxu0 %v1685
        %v4436 = vpop.f32.mrb[0].mxu0
        %v4437 = vadd.f32 0.0, %v4436
        %v4438 = vpop.f32.mrb[0].mxu0
        %4439 = vdwg.mxu0
        %4441 = vrot.lane.b32.xlu0 %v3627, 96
        %v4442 = vpop.permute.xlu0 %4441
        %4444 = vmatprep.subr.mxu0 0.0
        %4445 = vmatpush1.msra.mxu0 %v4442
        %4446 = vmatprep.subr.mxu0 0.0
        %4447 = vmatpush1.msra.mxu0 0.0
        %4448 = vmatprep.subr.mxu0 0.0
        %4449 = vmatpush1.msra.mxu0 0.0
        %4450 = vmatprep.subr.mxu0 0.0
        %4451 = vmatpush1.msra.mxu0 0.0
        %4452 = vmatprep.subr.mxu0 0.0
        %4453 = vmatpush1.msra.mxu0 0.0
        %4454 = vmatprep.subr.mxu0 0.0
        %4455 = vmatpush1.msra.mxu0 0.0
        %4456 = vmatprep.subr.mxu0 0.0
        %4457 = vmatpush1.msra.mxu0 0.0
        %4458 = vmatprep.subr.mxu0 0.0
        %4459 = vmatpush1.msra.mxu0 0.0
        %4460 = vmatprep.subr.mxu0 0.0
        %4461 = vmatpush1.msra.mxu0 0.0
        %4462 = vmatprep.subr.mxu0 0.0
        %4463 = vmatpush1.msra.mxu0 0.0
        %4464 = vmatprep.subr.mxu0 0.0
        %4465 = vmatpush1.msra.mxu0 0.0
        %4466 = vmatprep.subr.mxu0 0.0
        %4467 = vmatpush1.msra.mxu0 0.0
        %4468 = vmatprep.subr.mxu0 0.0
        %4469 = vmatpush1.msra.mxu0 0.0
        %4470 = vmatprep.subr.mxu0 0.0
        %4471 = vmatpush1.msra.mxu0 0.0
        %4472 = vmatprep.subr.mxu0 0.0
        %4473 = vmatpush1.msra.mxu0 0.0
        %4474 = vmatprep.subr.mxu0 0.0
        %4475 = vmatpush1.msra.mxu0 0.0
        %4476 = vmatprep.subr.mxu0 0.0
        %4477 = vmatpush1.msra.mxu0 0.0
        %4478 = vmatprep.subr.mxu0 0.0
        %4479 = vmatpush1.msra.mxu0 0.0
        %4480 = vmatprep.subr.mxu0 0.0
        %4481 = vmatpush1.msra.mxu0 0.0
        %4482 = vmatprep.subr.mxu0 0.0
        %4483 = vmatpush1.msra.mxu0 0.0
        %4484 = vmatprep.subr.mxu0 0.0
        %4485 = vmatpush1.msra.mxu0 0.0
        %4486 = vmatprep.subr.mxu0 0.0
        %4487 = vmatpush1.msra.mxu0 0.0
        %4488 = vmatprep.subr.mxu0 0.0
        %4489 = vmatpush1.msra.mxu0 0.0
        %4490 = vmatprep.subr.mxu0 0.0
        %4491 = vmatpush1.msra.mxu0 0.0
        %4492 = vmatprep.subr.mxu0 0.0
        %4493 = vmatpush1.msra.mxu0 0.0
        %4494 = vmatprep.subr.mxu0 0.0
        %4495 = vmatpush1.msra.mxu0 0.0
        %4496 = vmatprep.subr.mxu0 0.0
        %4497 = vmatpush1.msra.mxu0 0.0
        %4498 = vmatprep.subr.mxu0 0.0
        %4499 = vmatpush1.msra.mxu0 0.0
        %4500 = vmatprep.subr.mxu0 0.0
        %4501 = vmatpush1.msra.mxu0 0.0
        %4502 = vmatprep.subr.mxu0 0.0
        %4503 = vmatpush1.msra.mxu0 0.0
        %4504 = vmatprep.subr.mxu0 0.0
        %4505 = vmatpush1.msra.mxu0 0.0
        %4506 = vmatprep.subr.mxu0 0.0
        %4507 = vmatpush1.msra.mxu0 0.0
        %4508 = vmatprep.mubr.f32.mxu0 0.0
        %4509 = vmatmul.mubr.f32.gmra.mrb[0].mxu0 %v1762
        %v4510 = vpop.f32.mrb[0].mxu0
        %v4511 = vadd.f32 0.0, %v4510
        %v4512 = vpop.f32.mrb[0].mxu0
        %4513 = vdwg.mxu0
        %4515 = vrot.lane.b32.xlu0 %v3632, 96
        %v4516 = vpop.permute.xlu0 %4515
        %4518 = vmatprep.subr.mxu0 0.0
        %4519 = vmatpush1.msra.mxu0 %v4516
        %4520 = vmatprep.subr.mxu0 0.0
        %4521 = vmatpush1.msra.mxu0 0.0
        %4522 = vmatprep.subr.mxu0 0.0
        %4523 = vmatpush1.msra.mxu0 0.0
        %4524 = vmatprep.subr.mxu0 0.0
        %4525 = vmatpush1.msra.mxu0 0.0
        %4526 = vmatprep.subr.mxu0 0.0
        %4527 = vmatpush1.msra.mxu0 0.0
        %4528 = vmatprep.subr.mxu0 0.0
        %4529 = vmatpush1.msra.mxu0 0.0
        %4530 = vmatprep.subr.mxu0 0.0
        %4531 = vmatpush1.msra.mxu0 0.0
        %4532 = vmatprep.subr.mxu0 0.0
        %4533 = vmatpush1.msra.mxu0 0.0
        %4534 = vmatprep.subr.mxu0 0.0
        %4535 = vmatpush1.msra.mxu0 0.0
        %4536 = vmatprep.subr.mxu0 0.0
        %4537 = vmatpush1.msra.mxu0 0.0
        %4538 = vmatprep.subr.mxu0 0.0
        %4539 = vmatpush1.msra.mxu0 0.0
        %4540 = vmatprep.subr.mxu0 0.0
        %4541 = vmatpush1.msra.mxu0 0.0
        %4542 = vmatprep.subr.mxu0 0.0
        %4543 = vmatpush1.msra.mxu0 0.0
        %4544 = vmatprep.subr.mxu0 0.0
        %4545 = vmatpush1.msra.mxu0 0.0
        %4546 = vmatprep.subr.mxu0 0.0
        %4547 = vmatpush1.msra.mxu0 0.0
        %4548 = vmatprep.subr.mxu0 0.0
        %4549 = vmatpush1.msra.mxu0 0.0
        %4550 = vmatprep.subr.mxu0 0.0
        %4551 = vmatpush1.msra.mxu0 0.0
        %4552 = vmatprep.subr.mxu0 0.0
        %4553 = vmatpush1.msra.mxu0 0.0
        %4554 = vmatprep.subr.mxu0 0.0
        %4555 = vmatpush1.msra.mxu0 0.0
        %4556 = vmatprep.subr.mxu0 0.0
        %4557 = vmatpush1.msra.mxu0 0.0
        %4558 = vmatprep.subr.mxu0 0.0
        %4559 = vmatpush1.msra.mxu0 0.0
        %4560 = vmatprep.subr.mxu0 0.0
        %4561 = vmatpush1.msra.mxu0 0.0
        %4562 = vmatprep.subr.mxu0 0.0
        %4563 = vmatpush1.msra.mxu0 0.0
        %4564 = vmatprep.subr.mxu0 0.0
        %4565 = vmatpush1.msra.mxu0 0.0
        %4566 = vmatprep.subr.mxu0 0.0
        %4567 = vmatpush1.msra.mxu0 0.0
        %4568 = vmatprep.subr.mxu0 0.0
        %4569 = vmatpush1.msra.mxu0 0.0
        %4570 = vmatprep.subr.mxu0 0.0
        %4571 = vmatpush1.msra.mxu0 0.0
        %4572 = vmatprep.subr.mxu0 0.0
        %4573 = vmatpush1.msra.mxu0 0.0
        %4574 = vmatprep.subr.mxu0 0.0
        %4575 = vmatpush1.msra.mxu0 0.0
        %4576 = vmatprep.subr.mxu0 0.0
        %4577 = vmatpush1.msra.mxu0 0.0
        %4578 = vmatprep.subr.mxu0 0.0
        %4579 = vmatpush1.msra.mxu0 0.0
        %4580 = vmatprep.subr.mxu0 0.0
        %4581 = vmatpush1.msra.mxu0 0.0
        %4582 = vmatprep.mubr.f32.mxu0 0.0
        %4583 = vmatmul.mubr.f32.gmra.mrb[0].mxu0 %v1839
        %v4584 = vpop.f32.mrb[0].mxu0
        %v4585 = vadd.f32 0.0, %v4584
        %v4586 = vpop.f32.mrb[0].mxu0
        %4587 = vdwg.mxu0
        %4589 = vrot.lane.b32.xlu0 %v3637, 96
        %v4590 = vpop.permute.xlu0 %4589
        %4592 = vmatprep.subr.mxu0 0.0
        %4593 = vmatpush1.msra.mxu0 %v4590
        %4594 = vmatprep.subr.mxu0 0.0
        %4595 = vmatpush1.msra.mxu0 0.0
        %4596 = vmatprep.subr.mxu0 0.0
        %4597 = vmatpush1.msra.mxu0 0.0
        %4598 = vmatprep.subr.mxu0 0.0
        %4599 = vmatpush1.msra.mxu0 0.0
        %4600 = vmatprep.subr.mxu0 0.0
        %4601 = vmatpush1.msra.mxu0 0.0
        %4602 = vmatprep.subr.mxu0 0.0
        %4603 = vmatpush1.msra.mxu0 0.0
        %4604 = vmatprep.subr.mxu0 0.0
        %4605 = vmatpush1.msra.mxu0 0.0
        %4606 = vmatprep.subr.mxu0 0.0
        %4607 = vmatpush1.msra.mxu0 0.0
        %4608 = vmatprep.subr.mxu0 0.0
        %4609 = vmatpush1.msra.mxu0 0.0
        %4610 = vmatprep.subr.mxu0 0.0
        %4611 = vmatpush1.msra.mxu0 0.0
        %4612 = vmatprep.subr.mxu0 0.0
        %4613 = vmatpush1.msra.mxu0 0.0
        %4614 = vmatprep.subr.mxu0 0.0
        %4615 = vmatpush1.msra.mxu0 0.0
        %4616 = vmatprep.subr.mxu0 0.0
        %4617 = vmatpush1.msra.mxu0 0.0
        %4618 = vmatprep.subr.mxu0 0.0
        %4619 = vmatpush1.msra.mxu0 0.0
        %4620 = vmatprep.subr.mxu0 0.0
        %4621 = vmatpush1.msra.mxu0 0.0
        %4622 = vmatprep.subr.mxu0 0.0
        %4623 = vmatpush1.msra.mxu0 0.0
        %4624 = vmatprep.subr.mxu0 0.0
        %4625 = vmatpush1.msra.mxu0 0.0
        %4626 = vmatprep.subr.mxu0 0.0
        %4627 = vmatpush1.msra.mxu0 0.0
        %4628 = vmatprep.subr.mxu0 0.0
        %4629 = vmatpush1.msra.mxu0 0.0
        %4630 = vmatprep.subr.mxu0 0.0
        %4631 = vmatpush1.msra.mxu0 0.0
        %4632 = vmatprep.subr.mxu0 0.0
        %4633 = vmatpush1.msra.mxu0 0.0
        %4634 = vmatprep.subr.mxu0 0.0
        %4635 = vmatpush1.msra.mxu0 0.0
        %4636 = vmatprep.subr.mxu0 0.0
        %4637 = vmatpush1.msra.mxu0 0.0
        %4638 = vmatprep.subr.mxu0 0.0
        %4639 = vmatpush1.msra.mxu0 0.0
        %4640 = vmatprep.subr.mxu0 0.0
        %4641 = vmatpush1.msra.mxu0 0.0
        %4642 = vmatprep.subr.mxu0 0.0
        %4643 = vmatpush1.msra.mxu0 0.0
        %4644 = vmatprep.subr.mxu0 0.0
        %4645 = vmatpush1.msra.mxu0 0.0
        %4646 = vmatprep.subr.mxu0 0.0
        %4647 = vmatpush1.msra.mxu0 0.0
        %4648 = vmatprep.subr.mxu0 0.0
        %4649 = vmatpush1.msra.mxu0 0.0
        %4650 = vmatprep.subr.mxu0 0.0
        %4651 = vmatpush1.msra.mxu0 0.0
        %4652 = vmatprep.subr.mxu0 0.0
        %4653 = vmatpush1.msra.mxu0 0.0
        %4654 = vmatprep.subr.mxu0 0.0
        %4655 = vmatpush1.msra.mxu0 0.0
        %4656 = vmatprep.mubr.f32.mxu0 0.0
        %4657 = vmatmul.mubr.f32.gmra.mrb[0].mxu0 %v1916
        %v4658 = vpop.f32.mrb[0].mxu0
        %v4659 = vadd.f32 0.0, %v4658
        %v4660 = vpop.f32.mrb[0].mxu0
        %4661 = vdwg.mxu0
        %4663 = vrot.lane.b32.xlu0 %v3642, 96
        %v4664 = vpop.permute.xlu0 %4663
        %4666 = vmatprep.subr.mxu0 0.0
        %4667 = vmatpush1.msra.mxu0 %v4664
        %4668 = vmatprep.subr.mxu0 0.0
        %4669 = vmatpush1.msra.mxu0 0.0
        %4670 = vmatprep.subr.mxu0 0.0
        %4671 = vmatpush1.msra.mxu0 0.0
        %4672 = vmatprep.subr.mxu0 0.0
        %4673 = vmatpush1.msra.mxu0 0.0
        %4674 = vmatprep.subr.mxu0 0.0
        %4675 = vmatpush1.msra.mxu0 0.0
        %4676 = vmatprep.subr.mxu0 0.0
        %4677 = vmatpush1.msra.mxu0 0.0
        %4678 = vmatprep.subr.mxu0 0.0
        %4679 = vmatpush1.msra.mxu0 0.0
        %4680 = vmatprep.subr.mxu0 0.0
        %4681 = vmatpush1.msra.mxu0 0.0
        %4682 = vmatprep.subr.mxu0 0.0
        %4683 = vmatpush1.msra.mxu0 0.0
        %4684 = vmatprep.subr.mxu0 0.0
        %4685 = vmatpush1.msra.mxu0 0.0
        %4686 = vmatprep.subr.mxu0 0.0
        %4687 = vmatpush1.msra.mxu0 0.0
        %4688 = vmatprep.subr.mxu0 0.0
        %4689 = vmatpush1.msra.mxu0 0.0
        %4690 = vmatprep.subr.mxu0 0.0
        %4691 = vmatpush1.msra.mxu0 0.0
        %4692 = vmatprep.subr.mxu0 0.0
        %4693 = vmatpush1.msra.mxu0 0.0
        %4694 = vmatprep.subr.mxu0 0.0
        %4695 = vmatpush1.msra.mxu0 0.0
        %4696 = vmatprep.subr.mxu0 0.0
        %4697 = vmatpush1.msra.mxu0 0.0
        %4698 = vmatprep.subr.mxu0 0.0
        %4699 = vmatpush1.msra.mxu0 0.0
        %4700 = vmatprep.subr.mxu0 0.0
        %4701 = vmatpush1.msra.mxu0 0.0
        %4702 = vmatprep.subr.mxu0 0.0
        %4703 = vmatpush1.msra.mxu0 0.0
        %4704 = vmatprep.subr.mxu0 0.0
        %4705 = vmatpush1.msra.mxu0 0.0
        %4706 = vmatprep.subr.mxu0 0.0
        %4707 = vmatpush1.msra.mxu0 0.0
        %4708 = vmatprep.subr.mxu0 0.0
        %4709 = vmatpush1.msra.mxu0 0.0
        %4710 = vmatprep.subr.mxu0 0.0
        %4711 = vmatpush1.msra.mxu0 0.0
        %4712 = vmatprep.subr.mxu0 0.0
        %4713 = vmatpush1.msra.mxu0 0.0
        %4714 = vmatprep.subr.mxu0 0.0
        %4715 = vmatpush1.msra.mxu0 0.0
        %4716 = vmatprep.subr.mxu0 0.0
        %4717 = vmatpush1.msra.mxu0 0.0
        %4718 = vmatprep.subr.mxu0 0.0
        %4719 = vmatpush1.msra.mxu0 0.0
        %4720 = vmatprep.subr.mxu0 0.0
        %4721 = vmatpush1.msra.mxu0 0.0
        %4722 = vmatprep.subr.mxu0 0.0
        %4723 = vmatpush1.msra.mxu0 0.0
        %4724 = vmatprep.subr.mxu0 0.0
        %4725 = vmatpush1.msra.mxu0 0.0
        %4726 = vmatprep.subr.mxu0 0.0
        %4727 = vmatpush1.msra.mxu0 0.0
        %4728 = vmatprep.subr.mxu0 0.0
        %4729 = vmatpush1.msra.mxu0 0.0
        %4730 = vmatprep.mubr.f32.mxu0 0.0
        %4731 = vmatmul.mubr.f32.gmra.mrb[0].mxu0 %v1993
        %v4732 = vpop.f32.mrb[0].mxu0
        %v4733 = vadd.f32 0.0, %v4732
        %v4734 = vpop.f32.mrb[0].mxu0
        %4735 = vdwg.mxu0
        %4737 = vrot.lane.b32.xlu0 %v3647, 96
        %v4738 = vpop.permute.xlu0 %4737
        %4740 = vmatprep.subr.mxu0 0.0
        %4741 = vmatpush1.msra.mxu0 %v4738
        %4742 = vmatprep.subr.mxu0 0.0
        %4743 = vmatpush1.msra.mxu0 0.0
        %4744 = vmatprep.subr.mxu0 0.0
        %4745 = vmatpush1.msra.mxu0 0.0
        %4746 = vmatprep.subr.mxu0 0.0
        %4747 = vmatpush1.msra.mxu0 0.0
        %4748 = vmatprep.subr.mxu0 0.0
        %4749 = vmatpush1.msra.mxu0 0.0
        %4750 = vmatprep.subr.mxu0 0.0
        %4751 = vmatpush1.msra.mxu0 0.0
        %4752 = vmatprep.subr.mxu0 0.0
        %4753 = vmatpush1.msra.mxu0 0.0
        %4754 = vmatprep.subr.mxu0 0.0
        %4755 = vmatpush1.msra.mxu0 0.0
        %4756 = vmatprep.subr.mxu0 0.0
        %4757 = vmatpush1.msra.mxu0 0.0
        %4758 = vmatprep.subr.mxu0 0.0
        %4759 = vmatpush1.msra.mxu0 0.0
        %4760 = vmatprep.subr.mxu0 0.0
        %4761 = vmatpush1.msra.mxu0 0.0
        %4762 = vmatprep.subr.mxu0 0.0
        %4763 = vmatpush1.msra.mxu0 0.0
        %4764 = vmatprep.subr.mxu0 0.0
        %4765 = vmatpush1.msra.mxu0 0.0
        %4766 = vmatprep.subr.mxu0 0.0
        %4767 = vmatpush1.msra.mxu0 0.0
        %4768 = vmatprep.subr.mxu0 0.0
        %4769 = vmatpush1.msra.mxu0 0.0
        %4770 = vmatprep.subr.mxu0 0.0
        %4771 = vmatpush1.msra.mxu0 0.0
        %4772 = vmatprep.subr.mxu0 0.0
        %4773 = vmatpush1.msra.mxu0 0.0
        %4774 = vmatprep.subr.mxu0 0.0
        %4775 = vmatpush1.msra.mxu0 0.0
        %4776 = vmatprep.subr.mxu0 0.0
        %4777 = vmatpush1.msra.mxu0 0.0
        %4778 = vmatprep.subr.mxu0 0.0
        %4779 = vmatpush1.msra.mxu0 0.0
        %4780 = vmatprep.subr.mxu0 0.0
        %4781 = vmatpush1.msra.mxu0 0.0
        %4782 = vmatprep.subr.mxu0 0.0
        %4783 = vmatpush1.msra.mxu0 0.0
        %4784 = vmatprep.subr.mxu0 0.0
        %4785 = vmatpush1.msra.mxu0 0.0
        %4786 = vmatprep.subr.mxu0 0.0
        %4787 = vmatpush1.msra.mxu0 0.0
        %4788 = vmatprep.subr.mxu0 0.0
        %4789 = vmatpush1.msra.mxu0 0.0
        %4790 = vmatprep.subr.mxu0 0.0
        %4791 = vmatpush1.msra.mxu0 0.0
        %4792 = vmatprep.subr.mxu0 0.0
        %4793 = vmatpush1.msra.mxu0 0.0
        %4794 = vmatprep.subr.mxu0 0.0
        %4795 = vmatpush1.msra.mxu0 0.0
        %4796 = vmatprep.subr.mxu0 0.0
        %4797 = vmatpush1.msra.mxu0 0.0
        %4798 = vmatprep.subr.mxu0 0.0
        %4799 = vmatpush1.msra.mxu0 0.0
        %4800 = vmatprep.subr.mxu0 0.0
        %4801 = vmatpush1.msra.mxu0 0.0
        %4802 = vmatprep.subr.mxu0 0.0
        %4803 = vmatpush1.msra.mxu0 0.0
        %4804 = vmatprep.mubr.f32.mxu0 0.0
        %4805 = vmatmul.mubr.f32.gmra.mrb[0].mxu0 %v2070
        %v4806 = vpop.f32.mrb[0].mxu0
        %v4807 = vadd.f32 0.0, %v4806
        %v4808 = vpop.f32.mrb[0].mxu0
        %4809 = vdwg.mxu0
        %v4810 = vadd.f32 %v4210, %v4289
        %v4811 = vadd.f32 %v4211, %v4363
        %v4812 = vadd.f32 %v4212, %v4437
        %v4813 = vadd.f32 %v4213, %v4511
        %v4814 = vadd.f32 %v4214, %v4585
        %v4815 = vadd.f32 %v4215, %v4659
        %v4816 = vadd.f32 %v4216, %v4733
        %v4817 = vadd.f32 %v4217, %v4807
        %4818 = vrot.lane.b32.xlu0 %v3612, 64
        %v4819 = vpop.permute.xlu0 %4818
        %4821 = vmatprep.subr.mxu0 0.0
        %4822 = vmatpush1.msra.mxu0 %v4819
        %4823 = vmatprep.subr.mxu0 0.0
        %4824 = vmatpush1.msra.mxu0 0.0
        %4825 = vmatprep.subr.mxu0 0.0
        %4826 = vmatpush1.msra.mxu0 0.0
        %4827 = vmatprep.subr.mxu0 0.0
        %4828 = vmatpush1.msra.mxu0 0.0
        %4829 = vmatprep.subr.mxu0 0.0
        %4830 = vmatpush1.msra.mxu0 0.0
        %4831 = vmatprep.subr.mxu0 0.0
        %4832 = vmatpush1.msra.mxu0 0.0
        %4833 = vmatprep.subr.mxu0 0.0
        %4834 = vmatpush1.msra.mxu0 0.0
        %4835 = vmatprep.subr.mxu0 0.0
        %4836 = vmatpush1.msra.mxu0 0.0
        %4837 = vmatprep.subr.mxu0 0.0
        %4838 = vmatpush1.msra.mxu0 0.0
        %4839 = vmatprep.subr.mxu0 0.0
        %4840 = vmatpush1.msra.mxu0 0.0
        %4841 = vmatprep.subr.mxu0 0.0
        %4842 = vmatpush1.msra.mxu0 0.0
        %4843 = vmatprep.subr.mxu0 0.0
        %4844 = vmatpush1.msra.mxu0 0.0
        %4845 = vmatprep.subr.mxu0 0.0
        %4846 = vmatpush1.msra.mxu0 0.0
        %4847 = vmatprep.subr.mxu0 0.0
        %4848 = vmatpush1.msra.mxu0 0.0
        %4849 = vmatprep.subr.mxu0 0.0
        %4850 = vmatpush1.msra.mxu0 0.0
        %4851 = vmatprep.subr.mxu0 0.0
        %4852 = vmatpush1.msra.mxu0 0.0
        %4853 = vmatprep.subr.mxu0 0.0
        %4854 = vmatpush1.msra.mxu0 0.0
        %4855 = vmatprep.subr.mxu0 0.0
        %4856 = vmatpush1.msra.mxu0 0.0
        %4857 = vmatprep.subr.mxu0 0.0
        %4858 = vmatpush1.msra.mxu0 0.0
        %4859 = vmatprep.subr.mxu0 0.0
        %4860 = vmatpush1.msra.mxu0 0.0
        %4861 = vmatprep.subr.mxu0 0.0
        %4862 = vmatpush1.msra.mxu0 0.0
        %4863 = vmatprep.subr.mxu0 0.0
        %4864 = vmatpush1.msra.mxu0 0.0
        %4865 = vmatprep.subr.mxu0 0.0
        %4866 = vmatpush1.msra.mxu0 0.0
        %4867 = vmatprep.subr.mxu0 0.0
        %4868 = vmatpush1.msra.mxu0 0.0
        %4869 = vmatprep.subr.mxu0 0.0
        %4870 = vmatpush1.msra.mxu0 0.0
        %4871 = vmatprep.subr.mxu0 0.0
        %4872 = vmatpush1.msra.mxu0 0.0
        %4873 = vmatprep.subr.mxu0 0.0
        %4874 = vmatpush1.msra.mxu0 0.0
        %4875 = vmatprep.subr.mxu0 0.0
        %4876 = vmatpush1.msra.mxu0 0.0
        %4877 = vmatprep.subr.mxu0 0.0
        %4878 = vmatpush1.msra.mxu0 0.0
        %4879 = vmatprep.subr.mxu0 0.0
        %4880 = vmatpush1.msra.mxu0 0.0
        %4881 = vmatprep.subr.mxu0 0.0
        %4882 = vmatpush1.msra.mxu0 0.0
        %4883 = vmatprep.subr.mxu0 0.0
        %4884 = vmatpush1.msra.mxu0 0.0
        %4885 = vmatprep.mubr.f32.mxu0 0.0
        %4886 = vmatmul.mubr.f32.gmra.mrb[0].mxu0 %v2154
        %v4887 = vpop.f32.mrb[0].mxu0
        %v4888 = vadd.f32 0.0, %v4887
        %v4889 = vpop.f32.mrb[0].mxu0
        %4890 = vdwg.mxu0
        %4891 = vrot.lane.b32.xlu0 %v3617, 64
        %v4892 = vpop.permute.xlu0 %4891
        %4894 = vmatprep.subr.mxu0 0.0
        %4895 = vmatpush1.msra.mxu0 %v4892
        %4896 = vmatprep.subr.mxu0 0.0
        %4897 = vmatpush1.msra.mxu0 0.0
        %4898 = vmatprep.subr.mxu0 0.0
        %4899 = vmatpush1.msra.mxu0 0.0
        %4900 = vmatprep.subr.mxu0 0.0
        %4901 = vmatpush1.msra.mxu0 0.0
        %4902 = vmatprep.subr.mxu0 0.0
        %4903 = vmatpush1.msra.mxu0 0.0
        %4904 = vmatprep.subr.mxu0 0.0
        %4905 = vmatpush1.msra.mxu0 0.0
        %4906 = vmatprep.subr.mxu0 0.0
        %4907 = vmatpush1.msra.mxu0 0.0
        %4908 = vmatprep.subr.mxu0 0.0
        %4909 = vmatpush1.msra.mxu0 0.0
        %4910 = vmatprep.subr.mxu0 0.0
        %4911 = vmatpush1.msra.mxu0 0.0
        %4912 = vmatprep.subr.mxu0 0.0
        %4913 = vmatpush1.msra.mxu0 0.0
        %4914 = vmatprep.subr.mxu0 0.0
        %4915 = vmatpush1.msra.mxu0 0.0
        %4916 = vmatprep.subr.mxu0 0.0
        %4917 = vmatpush1.msra.mxu0 0.0
        %4918 = vmatprep.subr.mxu0 0.0
        %4919 = vmatpush1.msra.mxu0 0.0
        %4920 = vmatprep.subr.mxu0 0.0
        %4921 = vmatpush1.msra.mxu0 0.0
        %4922 = vmatprep.subr.mxu0 0.0
        %4923 = vmatpush1.msra.mxu0 0.0
        %4924 = vmatprep.subr.mxu0 0.0
        %4925 = vmatpush1.msra.mxu0 0.0
        %4926 = vmatprep.subr.mxu0 0.0
        %4927 = vmatpush1.msra.mxu0 0.0
        %4928 = vmatprep.subr.mxu0 0.0
        %4929 = vmatpush1.msra.mxu0 0.0
        %4930 = vmatprep.subr.mxu0 0.0
        %4931 = vmatpush1.msra.mxu0 0.0
        %4932 = vmatprep.subr.mxu0 0.0
        %4933 = vmatpush1.msra.mxu0 0.0
        %4934 = vmatprep.subr.mxu0 0.0
        %4935 = vmatpush1.msra.mxu0 0.0
        %4936 = vmatprep.subr.mxu0 0.0
        %4937 = vmatpush1.msra.mxu0 0.0
        %4938 = vmatprep.subr.mxu0 0.0
        %4939 = vmatpush1.msra.mxu0 0.0
        %4940 = vmatprep.subr.mxu0 0.0
        %4941 = vmatpush1.msra.mxu0 0.0
        %4942 = vmatprep.subr.mxu0 0.0
        %4943 = vmatpush1.msra.mxu0 0.0
        %4944 = vmatprep.subr.mxu0 0.0
        %4945 = vmatpush1.msra.mxu0 0.0
        %4946 = vmatprep.subr.mxu0 0.0
        %4947 = vmatpush1.msra.mxu0 0.0
        %4948 = vmatprep.subr.mxu0 0.0
        %4949 = vmatpush1.msra.mxu0 0.0
        %4950 = vmatprep.subr.mxu0 0.0
        %4951 = vmatpush1.msra.mxu0 0.0
        %4952 = vmatprep.subr.mxu0 0.0
        %4953 = vmatpush1.msra.mxu0 0.0
        %4954 = vmatprep.subr.mxu0 0.0
        %4955 = vmatpush1.msra.mxu0 0.0
        %4956 = vmatprep.subr.mxu0 0.0
        %4957 = vmatpush1.msra.mxu0 0.0
        %4958 = vmatprep.mubr.f32.mxu0 0.0
        %4959 = vmatmul.mubr.f32.gmra.mrb[0].mxu0 %v2230
        %v4960 = vpop.f32.mrb[0].mxu0
        %v4961 = vadd.f32 0.0, %v4960
        %v4962 = vpop.f32.mrb[0].mxu0
        %4963 = vdwg.mxu0
        %4964 = vrot.lane.b32.xlu0 %v3622, 64
        %v4965 = vpop.permute.xlu0 %4964
        %4967 = vmatprep.subr.mxu0 0.0
        %4968 = vmatpush1.msra.mxu0 %v4965
        %4969 = vmatprep.subr.mxu0 0.0
        %4970 = vmatpush1.msra.mxu0 0.0
        %4971 = vmatprep.subr.mxu0 0.0
        %4972 = vmatpush1.msra.mxu0 0.0
        %4973 = vmatprep.subr.mxu0 0.0
        %4974 = vmatpush1.msra.mxu0 0.0
        %4975 = vmatprep.subr.mxu0 0.0
        %4976 = vmatpush1.msra.mxu0 0.0
        %4977 = vmatprep.subr.mxu0 0.0
        %4978 = vmatpush1.msra.mxu0 0.0
        %4979 = vmatprep.subr.mxu0 0.0
        %4980 = vmatpush1.msra.mxu0 0.0
        %4981 = vmatprep.subr.mxu0 0.0
        %4982 = vmatpush1.msra.mxu0 0.0
        %4983 = vmatprep.subr.mxu0 0.0
        %4984 = vmatpush1.msra.mxu0 0.0
        %4985 = vmatprep.subr.mxu0 0.0
        %4986 = vmatpush1.msra.mxu0 0.0
        %4987 = vmatprep.subr.mxu0 0.0
        %4988 = vmatpush1.msra.mxu0 0.0
        %4989 = vmatprep.subr.mxu0 0.0
        %4990 = vmatpush1.msra.mxu0 0.0
        %4991 = vmatprep.subr.mxu0 0.0
        %4992 = vmatpush1.msra.mxu0 0.0
        %4993 = vmatprep.subr.mxu0 0.0
        %4994 = vmatpush1.msra.mxu0 0.0
        %4995 = vmatprep.subr.mxu0 0.0
        %4996 = vmatpush1.msra.mxu0 0.0
        %4997 = vmatprep.subr.mxu0 0.0
        %4998 = vmatpush1.msra.mxu0 0.0
        %4999 = vmatprep.subr.mxu0 0.0
        %5000 = vmatpush1.msra.mxu0 0.0
        %5001 = vmatprep.subr.mxu0 0.0
        %5002 = vmatpush1.msra.mxu0 0.0
        %5003 = vmatprep.subr.mxu0 0.0
        %5004 = vmatpush1.msra.mxu0 0.0
        %5005 = vmatprep.subr.mxu0 0.0
        %5006 = vmatpush1.msra.mxu0 0.0
        %5007 = vmatprep.subr.mxu0 0.0
        %5008 = vmatpush1.msra.mxu0 0.0
        %5009 = vmatprep.subr.mxu0 0.0
        %5010 = vmatpush1.msra.mxu0 0.0
        %5011 = vmatprep.subr.mxu0 0.0
        %5012 = vmatpush1.msra.mxu0 0.0
        %5013 = vmatprep.subr.mxu0 0.0
        %5014 = vmatpush1.msra.mxu0 0.0
        %5015 = vmatprep.subr.mxu0 0.0
        %5016 = vmatpush1.msra.mxu0 0.0
        %5017 = vmatprep.subr.mxu0 0.0
        %5018 = vmatpush1.msra.mxu0 0.0
        %5019 = vmatprep.subr.mxu0 0.0
        %5020 = vmatpush1.msra.mxu0 0.0
        %5021 = vmatprep.subr.mxu0 0.0
        %5022 = vmatpush1.msra.mxu0 0.0
        %5023 = vmatprep.subr.mxu0 0.0
        %5024 = vmatpush1.msra.mxu0 0.0
        %5025 = vmatprep.subr.mxu0 0.0
        %5026 = vmatpush1.msra.mxu0 0.0
        %5027 = vmatprep.subr.mxu0 0.0
        %5028 = vmatpush1.msra.mxu0 0.0
        %5029 = vmatprep.subr.mxu0 0.0
        %5030 = vmatpush1.msra.mxu0 0.0
        %5031 = vmatprep.mubr.f32.mxu0 0.0
        %5032 = vmatmul.mubr.f32.gmra.mrb[0].mxu0 %v2306
        %v5033 = vpop.f32.mrb[0].mxu0
        %v5034 = vadd.f32 0.0, %v5033
        %v5035 = vpop.f32.mrb[0].mxu0
        %5036 = vdwg.mxu0
        %5037 = vrot.lane.b32.xlu0 %v3627, 64
        %v5038 = vpop.permute.xlu0 %5037
        %5040 = vmatprep.subr.mxu0 0.0
        %5041 = vmatpush1.msra.mxu0 %v5038
        %5042 = vmatprep.subr.mxu0 0.0
        %5043 = vmatpush1.msra.mxu0 0.0
        %5044 = vmatprep.subr.mxu0 0.0
        %5045 = vmatpush1.msra.mxu0 0.0
        %5046 = vmatprep.subr.mxu0 0.0
        %5047 = vmatpush1.msra.mxu0 0.0
        %5048 = vmatprep.subr.mxu0 0.0
        %5049 = vmatpush1.msra.mxu0 0.0
        %5050 = vmatprep.subr.mxu0 0.0
        %5051 = vmatpush1.msra.mxu0 0.0
        %5052 = vmatprep.subr.mxu0 0.0
        %5053 = vmatpush1.msra.mxu0 0.0
        %5054 = vmatprep.subr.mxu0 0.0
        %5055 = vmatpush1.msra.mxu0 0.0
        %5056 = vmatprep.subr.mxu0 0.0
        %5057 = vmatpush1.msra.mxu0 0.0
        %5058 = vmatprep.subr.mxu0 0.0
        %5059 = vmatpush1.msra.mxu0 0.0
        %5060 = vmatprep.subr.mxu0 0.0
        %5061 = vmatpush1.msra.mxu0 0.0
        %5062 = vmatprep.subr.mxu0 0.0
        %5063 = vmatpush1.msra.mxu0 0.0
        %5064 = vmatprep.subr.mxu0 0.0
        %5065 = vmatpush1.msra.mxu0 0.0
        %5066 = vmatprep.subr.mxu0 0.0
        %5067 = vmatpush1.msra.mxu0 0.0
        %5068 = vmatprep.subr.mxu0 0.0
        %5069 = vmatpush1.msra.mxu0 0.0
        %5070 = vmatprep.subr.mxu0 0.0
        %5071 = vmatpush1.msra.mxu0 0.0
        %5072 = vmatprep.subr.mxu0 0.0
        %5073 = vmatpush1.msra.mxu0 0.0
        %5074 = vmatprep.subr.mxu0 0.0
        %5075 = vmatpush1.msra.mxu0 0.0
        %5076 = vmatprep.subr.mxu0 0.0
        %5077 = vmatpush1.msra.mxu0 0.0
        %5078 = vmatprep.subr.mxu0 0.0
        %5079 = vmatpush1.msra.mxu0 0.0
        %5080 = vmatprep.subr.mxu0 0.0
        %5081 = vmatpush1.msra.mxu0 0.0
        %5082 = vmatprep.subr.mxu0 0.0
        %5083 = vmatpush1.msra.mxu0 0.0
        %5084 = vmatprep.subr.mxu0 0.0
        %5085 = vmatpush1.msra.mxu0 0.0
        %5086 = vmatprep.subr.mxu0 0.0
        %5087 = vmatpush1.msra.mxu0 0.0
        %5088 = vmatprep.subr.mxu0 0.0
        %5089 = vmatpush1.msra.mxu0 0.0
        %5090 = vmatprep.subr.mxu0 0.0
        %5091 = vmatpush1.msra.mxu0 0.0
        %5092 = vmatprep.subr.mxu0 0.0
        %5093 = vmatpush1.msra.mxu0 0.0
        %5094 = vmatprep.subr.mxu0 0.0
        %5095 = vmatpush1.msra.mxu0 0.0
        %5096 = vmatprep.subr.mxu0 0.0
        %5097 = vmatpush1.msra.mxu0 0.0
        %5098 = vmatprep.subr.mxu0 0.0
        %5099 = vmatpush1.msra.mxu0 0.0
        %5100 = vmatprep.subr.mxu0 0.0
        %5101 = vmatpush1.msra.mxu0 0.0
        %5102 = vmatprep.subr.mxu0 0.0
        %5103 = vmatpush1.msra.mxu0 0.0
        %5104 = vmatprep.mubr.f32.mxu0 0.0
        %5105 = vmatmul.mubr.f32.gmra.mrb[0].mxu0 %v2382
        %v5106 = vpop.f32.mrb[0].mxu0
        %v5107 = vadd.f32 0.0, %v5106
        %v5108 = vpop.f32.mrb[0].mxu0
        %5109 = vdwg.mxu0
        %5110 = vrot.lane.b32.xlu0 %v3632, 64
        %v5111 = vpop.permute.xlu0 %5110
        %5113 = vmatprep.subr.mxu0 0.0
        %5114 = vmatpush1.msra.mxu0 %v5111
        %5115 = vmatprep.subr.mxu0 0.0
        %5116 = vmatpush1.msra.mxu0 0.0
        %5117 = vmatprep.subr.mxu0 0.0
        %5118 = vmatpush1.msra.mxu0 0.0
        %5119 = vmatprep.subr.mxu0 0.0
        %5120 = vmatpush1.msra.mxu0 0.0
        %5121 = vmatprep.subr.mxu0 0.0
        %5122 = vmatpush1.msra.mxu0 0.0
        %5123 = vmatprep.subr.mxu0 0.0
        %5124 = vmatpush1.msra.mxu0 0.0
        %5125 = vmatprep.subr.mxu0 0.0
        %5126 = vmatpush1.msra.mxu0 0.0
        %5127 = vmatprep.subr.mxu0 0.0
        %5128 = vmatpush1.msra.mxu0 0.0
        %5129 = vmatprep.subr.mxu0 0.0
        %5130 = vmatpush1.msra.mxu0 0.0
        %5131 = vmatprep.subr.mxu0 0.0
        %5132 = vmatpush1.msra.mxu0 0.0
        %5133 = vmatprep.subr.mxu0 0.0
        %5134 = vmatpush1.msra.mxu0 0.0
        %5135 = vmatprep.subr.mxu0 0.0
        %5136 = vmatpush1.msra.mxu0 0.0
        %5137 = vmatprep.subr.mxu0 0.0
        %5138 = vmatpush1.msra.mxu0 0.0
        %5139 = vmatprep.subr.mxu0 0.0
        %5140 = vmatpush1.msra.mxu0 0.0
        %5141 = vmatprep.subr.mxu0 0.0
        %5142 = vmatpush1.msra.mxu0 0.0
        %5143 = vmatprep.subr.mxu0 0.0
        %5144 = vmatpush1.msra.mxu0 0.0
        %5145 = vmatprep.subr.mxu0 0.0
        %5146 = vmatpush1.msra.mxu0 0.0
        %5147 = vmatprep.subr.mxu0 0.0
        %5148 = vmatpush1.msra.mxu0 0.0
        %5149 = vmatprep.subr.mxu0 0.0
        %5150 = vmatpush1.msra.mxu0 0.0
        %5151 = vmatprep.subr.mxu0 0.0
        %5152 = vmatpush1.msra.mxu0 0.0
        %5153 = vmatprep.subr.mxu0 0.0
        %5154 = vmatpush1.msra.mxu0 0.0
        %5155 = vmatprep.subr.mxu0 0.0
        %5156 = vmatpush1.msra.mxu0 0.0
        %5157 = vmatprep.subr.mxu0 0.0
        %5158 = vmatpush1.msra.mxu0 0.0
        %5159 = vmatprep.subr.mxu0 0.0
        %5160 = vmatpush1.msra.mxu0 0.0
        %5161 = vmatprep.subr.mxu0 0.0
        %5162 = vmatpush1.msra.mxu0 0.0
        %5163 = vmatprep.subr.mxu0 0.0
        %5164 = vmatpush1.msra.mxu0 0.0
        %5165 = vmatprep.subr.mxu0 0.0
        %5166 = vmatpush1.msra.mxu0 0.0
        %5167 = vmatprep.subr.mxu0 0.0
        %5168 = vmatpush1.msra.mxu0 0.0
        %5169 = vmatprep.subr.mxu0 0.0
        %5170 = vmatpush1.msra.mxu0 0.0
        %5171 = vmatprep.subr.mxu0 0.0
        %5172 = vmatpush1.msra.mxu0 0.0
        %5173 = vmatprep.subr.mxu0 0.0
        %5174 = vmatpush1.msra.mxu0 0.0
        %5175 = vmatprep.subr.mxu0 0.0
        %5176 = vmatpush1.msra.mxu0 0.0
        %5177 = vmatprep.mubr.f32.mxu0 0.0
        %5178 = vmatmul.mubr.f32.gmra.mrb[0].mxu0 %v2458
        %v5179 = vpop.f32.mrb[0].mxu0
        %v5180 = vadd.f32 0.0, %v5179
        %v5181 = vpop.f32.mrb[0].mxu0
        %5182 = vdwg.mxu0
        %5183 = vrot.lane.b32.xlu0 %v3637, 64
        %v5184 = vpop.permute.xlu0 %5183
        %5186 = vmatprep.subr.mxu0 0.0
        %5187 = vmatpush1.msra.mxu0 %v5184
        %5188 = vmatprep.subr.mxu0 0.0
        %5189 = vmatpush1.msra.mxu0 0.0
        %5190 = vmatprep.subr.mxu0 0.0
        %5191 = vmatpush1.msra.mxu0 0.0
        %5192 = vmatprep.subr.mxu0 0.0
        %5193 = vmatpush1.msra.mxu0 0.0
        %5194 = vmatprep.subr.mxu0 0.0
        %5195 = vmatpush1.msra.mxu0 0.0
        %5196 = vmatprep.subr.mxu0 0.0
        %5197 = vmatpush1.msra.mxu0 0.0
        %5198 = vmatprep.subr.mxu0 0.0
        %5199 = vmatpush1.msra.mxu0 0.0
        %5200 = vmatprep.subr.mxu0 0.0
        %5201 = vmatpush1.msra.mxu0 0.0
        %5202 = vmatprep.subr.mxu0 0.0
        %5203 = vmatpush1.msra.mxu0 0.0
        %5204 = vmatprep.subr.mxu0 0.0
        %5205 = vmatpush1.msra.mxu0 0.0
        %5206 = vmatprep.subr.mxu0 0.0
        %5207 = vmatpush1.msra.mxu0 0.0
        %5208 = vmatprep.subr.mxu0 0.0
        %5209 = vmatpush1.msra.mxu0 0.0
        %5210 = vmatprep.subr.mxu0 0.0
        %5211 = vmatpush1.msra.mxu0 0.0
        %5212 = vmatprep.subr.mxu0 0.0
        %5213 = vmatpush1.msra.mxu0 0.0
        %5214 = vmatprep.subr.mxu0 0.0
        %5215 = vmatpush1.msra.mxu0 0.0
        %5216 = vmatprep.subr.mxu0 0.0
        %5217 = vmatpush1.msra.mxu0 0.0
        %5218 = vmatprep.subr.mxu0 0.0
        %5219 = vmatpush1.msra.mxu0 0.0
        %5220 = vmatprep.subr.mxu0 0.0
        %5221 = vmatpush1.msra.mxu0 0.0
        %5222 = vmatprep.subr.mxu0 0.0
        %5223 = vmatpush1.msra.mxu0 0.0
        %5224 = vmatprep.subr.mxu0 0.0
        %5225 = vmatpush1.msra.mxu0 0.0
        %5226 = vmatprep.subr.mxu0 0.0
        %5227 = vmatpush1.msra.mxu0 0.0
        %5228 = vmatprep.subr.mxu0 0.0
        %5229 = vmatpush1.msra.mxu0 0.0
        %5230 = vmatprep.subr.mxu0 0.0
        %5231 = vmatpush1.msra.mxu0 0.0
        %5232 = vmatprep.subr.mxu0 0.0
        %5233 = vmatpush1.msra.mxu0 0.0
        %5234 = vmatprep.subr.mxu0 0.0
        %5235 = vmatpush1.msra.mxu0 0.0
        %5236 = vmatprep.subr.mxu0 0.0
        %5237 = vmatpush1.msra.mxu0 0.0
        %5238 = vmatprep.subr.mxu0 0.0
        %5239 = vmatpush1.msra.mxu0 0.0
        %5240 = vmatprep.subr.mxu0 0.0
        %5241 = vmatpush1.msra.mxu0 0.0
        %5242 = vmatprep.subr.mxu0 0.0
        %5243 = vmatpush1.msra.mxu0 0.0
        %5244 = vmatprep.subr.mxu0 0.0
        %5245 = vmatpush1.msra.mxu0 0.0
        %5246 = vmatprep.subr.mxu0 0.0
        %5247 = vmatpush1.msra.mxu0 0.0
        %5248 = vmatprep.subr.mxu0 0.0
        %5249 = vmatpush1.msra.mxu0 0.0
        %5250 = vmatprep.mubr.f32.mxu0 0.0
        %5251 = vmatmul.mubr.f32.gmra.mrb[0].mxu0 %v2534
        %v5252 = vpop.f32.mrb[0].mxu0
        %v5253 = vadd.f32 0.0, %v5252
        %v5254 = vpop.f32.mrb[0].mxu0
        %5255 = vdwg.mxu0
        %5256 = vrot.lane.b32.xlu0 %v3642, 64
        %v5257 = vpop.permute.xlu0 %5256
        %5259 = vmatprep.subr.mxu0 0.0
        %5260 = vmatpush1.msra.mxu0 %v5257
        %5261 = vmatprep.subr.mxu0 0.0
        %5262 = vmatpush1.msra.mxu0 0.0
        %5263 = vmatprep.subr.mxu0 0.0
        %5264 = vmatpush1.msra.mxu0 0.0
        %5265 = vmatprep.subr.mxu0 0.0
        %5266 = vmatpush1.msra.mxu0 0.0
        %5267 = vmatprep.subr.mxu0 0.0
        %5268 = vmatpush1.msra.mxu0 0.0
        %5269 = vmatprep.subr.mxu0 0.0
        %5270 = vmatpush1.msra.mxu0 0.0
        %5271 = vmatprep.subr.mxu0 0.0
        %5272 = vmatpush1.msra.mxu0 0.0
        %5273 = vmatprep.subr.mxu0 0.0
        %5274 = vmatpush1.msra.mxu0 0.0
        %5275 = vmatprep.subr.mxu0 0.0
        %5276 = vmatpush1.msra.mxu0 0.0
        %5277 = vmatprep.subr.mxu0 0.0
        %5278 = vmatpush1.msra.mxu0 0.0
        %5279 = vmatprep.subr.mxu0 0.0
        %5280 = vmatpush1.msra.mxu0 0.0
        %5281 = vmatprep.subr.mxu0 0.0
        %5282 = vmatpush1.msra.mxu0 0.0
        %5283 = vmatprep.subr.mxu0 0.0
        %5284 = vmatpush1.msra.mxu0 0.0
        %5285 = vmatprep.subr.mxu0 0.0
        %5286 = vmatpush1.msra.mxu0 0.0
        %5287 = vmatprep.subr.mxu0 0.0
        %5288 = vmatpush1.msra.mxu0 0.0
        %5289 = vmatprep.subr.mxu0 0.0
        %5290 = vmatpush1.msra.mxu0 0.0
        %5291 = vmatprep.subr.mxu0 0.0
        %5292 = vmatpush1.msra.mxu0 0.0
        %5293 = vmatprep.subr.mxu0 0.0
        %5294 = vmatpush1.msra.mxu0 0.0
        %5295 = vmatprep.subr.mxu0 0.0
        %5296 = vmatpush1.msra.mxu0 0.0
        %5297 = vmatprep.subr.mxu0 0.0
        %5298 = vmatpush1.msra.mxu0 0.0
        %5299 = vmatprep.subr.mxu0 0.0
        %5300 = vmatpush1.msra.mxu0 0.0
        %5301 = vmatprep.subr.mxu0 0.0
        %5302 = vmatpush1.msra.mxu0 0.0
        %5303 = vmatprep.subr.mxu0 0.0
        %5304 = vmatpush1.msra.mxu0 0.0
        %5305 = vmatprep.subr.mxu0 0.0
        %5306 = vmatpush1.msra.mxu0 0.0
        %5307 = vmatprep.subr.mxu0 0.0
        %5308 = vmatpush1.msra.mxu0 0.0
        %5309 = vmatprep.subr.mxu0 0.0
        %5310 = vmatpush1.msra.mxu0 0.0
        %5311 = vmatprep.subr.mxu0 0.0
        %5312 = vmatpush1.msra.mxu0 0.0
        %5313 = vmatprep.subr.mxu0 0.0
        %5314 = vmatpush1.msra.mxu0 0.0
        %5315 = vmatprep.subr.mxu0 0.0
        %5316 = vmatpush1.msra.mxu0 0.0
        %5317 = vmatprep.subr.mxu0 0.0
        %5318 = vmatpush1.msra.mxu0 0.0
        %5319 = vmatprep.subr.mxu0 0.0
        %5320 = vmatpush1.msra.mxu0 0.0
        %5321 = vmatprep.subr.mxu0 0.0
        %5322 = vmatpush1.msra.mxu0 0.0
        %5323 = vmatprep.mubr.f32.mxu0 0.0
        %5324 = vmatmul.mubr.f32.gmra.mrb[0].mxu0 %v2610
        %v5325 = vpop.f32.mrb[0].mxu0
        %v5326 = vadd.f32 0.0, %v5325
        %v5327 = vpop.f32.mrb[0].mxu0
        %5328 = vdwg.mxu0
        %5329 = vrot.lane.b32.xlu0 %v3647, 64
        %v5330 = vpop.permute.xlu0 %5329
        %5332 = vmatprep.subr.mxu0 0.0
        %5333 = vmatpush1.msra.mxu0 %v5330
        %5334 = vmatprep.subr.mxu0 0.0
        %5335 = vmatpush1.msra.mxu0 0.0
        %5336 = vmatprep.subr.mxu0 0.0
        %5337 = vmatpush1.msra.mxu0 0.0
        %5338 = vmatprep.subr.mxu0 0.0
        %5339 = vmatpush1.msra.mxu0 0.0
        %5340 = vmatprep.subr.mxu0 0.0
        %5341 = vmatpush1.msra.mxu0 0.0
        %5342 = vmatprep.subr.mxu0 0.0
        %5343 = vmatpush1.msra.mxu0 0.0
        %5344 = vmatprep.subr.mxu0 0.0
        %5345 = vmatpush1.msra.mxu0 0.0
        %5346 = vmatprep.subr.mxu0 0.0
        %5347 = vmatpush1.msra.mxu0 0.0
        %5348 = vmatprep.subr.mxu0 0.0
        %5349 = vmatpush1.msra.mxu0 0.0
        %5350 = vmatprep.subr.mxu0 0.0
        %5351 = vmatpush1.msra.mxu0 0.0
        %5352 = vmatprep.subr.mxu0 0.0
        %5353 = vmatpush1.msra.mxu0 0.0
        %5354 = vmatprep.subr.mxu0 0.0
        %5355 = vmatpush1.msra.mxu0 0.0
        %5356 = vmatprep.subr.mxu0 0.0
        %5357 = vmatpush1.msra.mxu0 0.0
        %5358 = vmatprep.subr.mxu0 0.0
        %5359 = vmatpush1.msra.mxu0 0.0
        %5360 = vmatprep.subr.mxu0 0.0
        %5361 = vmatpush1.msra.mxu0 0.0
        %5362 = vmatprep.subr.mxu0 0.0
        %5363 = vmatpush1.msra.mxu0 0.0
        %5364 = vmatprep.subr.mxu0 0.0
        %5365 = vmatpush1.msra.mxu0 0.0
        %5366 = vmatprep.subr.mxu0 0.0
        %5367 = vmatpush1.msra.mxu0 0.0
        %5368 = vmatprep.subr.mxu0 0.0
        %5369 = vmatpush1.msra.mxu0 0.0
        %5370 = vmatprep.subr.mxu0 0.0
        %5371 = vmatpush1.msra.mxu0 0.0
        %5372 = vmatprep.subr.mxu0 0.0
        %5373 = vmatpush1.msra.mxu0 0.0
        %5374 = vmatprep.subr.mxu0 0.0
        %5375 = vmatpush1.msra.mxu0 0.0
        %5376 = vmatprep.subr.mxu0 0.0
        %5377 = vmatpush1.msra.mxu0 0.0
        %5378 = vmatprep.subr.mxu0 0.0
        %5379 = vmatpush1.msra.mxu0 0.0
        %5380 = vmatprep.subr.mxu0 0.0
        %5381 = vmatpush1.msra.mxu0 0.0
        %5382 = vmatprep.subr.mxu0 0.0
        %5383 = vmatpush1.msra.mxu0 0.0
        %5384 = vmatprep.subr.mxu0 0.0
        %5385 = vmatpush1.msra.mxu0 0.0
        %5386 = vmatprep.subr.mxu0 0.0
        %5387 = vmatpush1.msra.mxu0 0.0
        %5388 = vmatprep.subr.mxu0 0.0
        %5389 = vmatpush1.msra.mxu0 0.0
        %5390 = vmatprep.subr.mxu0 0.0
        %5391 = vmatpush1.msra.mxu0 0.0
        %5392 = vmatprep.subr.mxu0 0.0
        %5393 = vmatpush1.msra.mxu0 0.0
        %5394 = vmatprep.subr.mxu0 0.0
        %5395 = vmatpush1.msra.mxu0 0.0
        %5396 = vmatprep.mubr.f32.mxu0 0.0
        %5397 = vmatmul.mubr.f32.gmra.mrb[0].mxu0 %v2686
        %v5398 = vpop.f32.mrb[0].mxu0
        %v5399 = vadd.f32 0.0, %v5398
        %v5400 = vpop.f32.mrb[0].mxu0
        %5401 = vdwg.mxu0
        %v5402 = vadd.f32 %v4810, %v4888
        %v5403 = vadd.f32 %v4811, %v4961
        %v5404 = vadd.f32 %v4812, %v5034
        %v5405 = vadd.f32 %v4813, %v5107
        %v5406 = vadd.f32 %v4814, %v5180
        %v5407 = vadd.f32 %v4815, %v5253
        %v5408 = vadd.f32 %v4816, %v5326
        %v5409 = vadd.f32 %v4817, %v5399
        %5410 = vrot.lane.b32.xlu0 %v3612, 32
        %v5411 = vpop.permute.xlu0 %5410
        %5413 = vmatprep.subr.mxu0 0.0
        %5414 = vmatpush1.msra.mxu0 %v5411
        %5415 = vmatprep.subr.mxu0 0.0
        %5416 = vmatpush1.msra.mxu0 0.0
        %5417 = vmatprep.subr.mxu0 0.0
        %5418 = vmatpush1.msra.mxu0 0.0
        %5419 = vmatprep.subr.mxu0 0.0
        %5420 = vmatpush1.msra.mxu0 0.0
        %5421 = vmatprep.subr.mxu0 0.0
        %5422 = vmatpush1.msra.mxu0 0.0
        %5423 = vmatprep.subr.mxu0 0.0
        %5424 = vmatpush1.msra.mxu0 0.0
        %5425 = vmatprep.subr.mxu0 0.0
        %5426 = vmatpush1.msra.mxu0 0.0
        %5427 = vmatprep.subr.mxu0 0.0
        %5428 = vmatpush1.msra.mxu0 0.0
        %5429 = vmatprep.subr.mxu0 0.0
        %5430 = vmatpush1.msra.mxu0 0.0
        %5431 = vmatprep.subr.mxu0 0.0
        %5432 = vmatpush1.msra.mxu0 0.0
        %5433 = vmatprep.subr.mxu0 0.0
        %5434 = vmatpush1.msra.mxu0 0.0
        %5435 = vmatprep.subr.mxu0 0.0
        %5436 = vmatpush1.msra.mxu0 0.0
        %5437 = vmatprep.subr.mxu0 0.0
        %5438 = vmatpush1.msra.mxu0 0.0
        %5439 = vmatprep.subr.mxu0 0.0
        %5440 = vmatpush1.msra.mxu0 0.0
        %5441 = vmatprep.subr.mxu0 0.0
        %5442 = vmatpush1.msra.mxu0 0.0
        %5443 = vmatprep.subr.mxu0 0.0
        %5444 = vmatpush1.msra.mxu0 0.0
        %5445 = vmatprep.subr.mxu0 0.0
        %5446 = vmatpush1.msra.mxu0 0.0
        %5447 = vmatprep.subr.mxu0 0.0
        %5448 = vmatpush1.msra.mxu0 0.0
        %5449 = vmatprep.subr.mxu0 0.0
        %5450 = vmatpush1.msra.mxu0 0.0
        %5451 = vmatprep.subr.mxu0 0.0
        %5452 = vmatpush1.msra.mxu0 0.0
        %5453 = vmatprep.subr.mxu0 0.0
        %5454 = vmatpush1.msra.mxu0 0.0
        %5455 = vmatprep.subr.mxu0 0.0
        %5456 = vmatpush1.msra.mxu0 0.0
        %5457 = vmatprep.subr.mxu0 0.0
        %5458 = vmatpush1.msra.mxu0 0.0
        %5459 = vmatprep.subr.mxu0 0.0
        %5460 = vmatpush1.msra.mxu0 0.0
        %5461 = vmatprep.subr.mxu0 0.0
        %5462 = vmatpush1.msra.mxu0 0.0
        %5463 = vmatprep.subr.mxu0 0.0
        %5464 = vmatpush1.msra.mxu0 0.0
        %5465 = vmatprep.subr.mxu0 0.0
        %5466 = vmatpush1.msra.mxu0 0.0
        %5467 = vmatprep.subr.mxu0 0.0
        %5468 = vmatpush1.msra.mxu0 0.0
        %5469 = vmatprep.subr.mxu0 0.0
        %5470 = vmatpush1.msra.mxu0 0.0
        %5471 = vmatprep.subr.mxu0 0.0
        %5472 = vmatpush1.msra.mxu0 0.0
        %5473 = vmatprep.subr.mxu0 0.0
        %5474 = vmatpush1.msra.mxu0 0.0
        %5475 = vmatprep.subr.mxu0 0.0
        %5476 = vmatpush1.msra.mxu0 0.0
        %5477 = vmatprep.mubr.f32.mxu0 0.0
        %5478 = vmatmul.mubr.f32.gmra.mrb[0].mxu0 %v2770
        %v5479 = vpop.f32.mrb[0].mxu0
        %v5480 = vadd.f32 0.0, %v5479
        %v5481 = vpop.f32.mrb[0].mxu0
        %5482 = vdwg.mxu0
        %5483 = vrot.lane.b32.xlu0 %v3617, 32
        %v5484 = vpop.permute.xlu0 %5483
        %5486 = vmatprep.subr.mxu0 0.0
        %5487 = vmatpush1.msra.mxu0 %v5484
        %5488 = vmatprep.subr.mxu0 0.0
        %5489 = vmatpush1.msra.mxu0 0.0
        %5490 = vmatprep.subr.mxu0 0.0
        %5491 = vmatpush1.msra.mxu0 0.0
        %5492 = vmatprep.subr.mxu0 0.0
        %5493 = vmatpush1.msra.mxu0 0.0
        %5494 = vmatprep.subr.mxu0 0.0
        %5495 = vmatpush1.msra.mxu0 0.0
        %5496 = vmatprep.subr.mxu0 0.0
        %5497 = vmatpush1.msra.mxu0 0.0
        %5498 = vmatprep.subr.mxu0 0.0
        %5499 = vmatpush1.msra.mxu0 0.0
        %5500 = vmatprep.subr.mxu0 0.0
        %5501 = vmatpush1.msra.mxu0 0.0
        %5502 = vmatprep.subr.mxu0 0.0
        %5503 = vmatpush1.msra.mxu0 0.0
        %5504 = vmatprep.subr.mxu0 0.0
        %5505 = vmatpush1.msra.mxu0 0.0
        %5506 = vmatprep.subr.mxu0 0.0
        %5507 = vmatpush1.msra.mxu0 0.0
        %5508 = vmatprep.subr.mxu0 0.0
        %5509 = vmatpush1.msra.mxu0 0.0
        %5510 = vmatprep.subr.mxu0 0.0
        %5511 = vmatpush1.msra.mxu0 0.0
        %5512 = vmatprep.subr.mxu0 0.0
        %5513 = vmatpush1.msra.mxu0 0.0
        %5514 = vmatprep.subr.mxu0 0.0
        %5515 = vmatpush1.msra.mxu0 0.0
        %5516 = vmatprep.subr.mxu0 0.0
        %5517 = vmatpush1.msra.mxu0 0.0
        %5518 = vmatprep.subr.mxu0 0.0
        %5519 = vmatpush1.msra.mxu0 0.0
        %5520 = vmatprep.subr.mxu0 0.0
        %5521 = vmatpush1.msra.mxu0 0.0
        %5522 = vmatprep.subr.mxu0 0.0
        %5523 = vmatpush1.msra.mxu0 0.0
        %5524 = vmatprep.subr.mxu0 0.0
        %5525 = vmatpush1.msra.mxu0 0.0
        %5526 = vmatprep.subr.mxu0 0.0
        %5527 = vmatpush1.msra.mxu0 0.0
        %5528 = vmatprep.subr.mxu0 0.0
        %5529 = vmatpush1.msra.mxu0 0.0
        %5530 = vmatprep.subr.mxu0 0.0
        %5531 = vmatpush1.msra.mxu0 0.0
        %5532 = vmatprep.subr.mxu0 0.0
        %5533 = vmatpush1.msra.mxu0 0.0
        %5534 = vmatprep.subr.mxu0 0.0
        %5535 = vmatpush1.msra.mxu0 0.0
        %5536 = vmatprep.subr.mxu0 0.0
        %5537 = vmatpush1.msra.mxu0 0.0
        %5538 = vmatprep.subr.mxu0 0.0
        %5539 = vmatpush1.msra.mxu0 0.0
        %5540 = vmatprep.subr.mxu0 0.0
        %5541 = vmatpush1.msra.mxu0 0.0
        %5542 = vmatprep.subr.mxu0 0.0
        %5543 = vmatpush1.msra.mxu0 0.0
        %5544 = vmatprep.subr.mxu0 0.0
        %5545 = vmatpush1.msra.mxu0 0.0
        %5546 = vmatprep.subr.mxu0 0.0
        %5547 = vmatpush1.msra.mxu0 0.0
        %5548 = vmatprep.subr.mxu0 0.0
        %5549 = vmatpush1.msra.mxu0 0.0
        %5550 = vmatprep.mubr.f32.mxu0 0.0
        %5551 = vmatmul.mubr.f32.gmra.mrb[0].mxu0 %v2846
        %v5552 = vpop.f32.mrb[0].mxu0
        %v5553 = vadd.f32 0.0, %v5552
        %v5554 = vpop.f32.mrb[0].mxu0
        %5555 = vdwg.mxu0
        %5556 = vrot.lane.b32.xlu0 %v3622, 32
        %v5557 = vpop.permute.xlu0 %5556
        %5559 = vmatprep.subr.mxu0 0.0
        %5560 = vmatpush1.msra.mxu0 %v5557
        %5561 = vmatprep.subr.mxu0 0.0
        %5562 = vmatpush1.msra.mxu0 0.0
        %5563 = vmatprep.subr.mxu0 0.0
        %5564 = vmatpush1.msra.mxu0 0.0
        %5565 = vmatprep.subr.mxu0 0.0
        %5566 = vmatpush1.msra.mxu0 0.0
        %5567 = vmatprep.subr.mxu0 0.0
        %5568 = vmatpush1.msra.mxu0 0.0
        %5569 = vmatprep.subr.mxu0 0.0
        %5570 = vmatpush1.msra.mxu0 0.0
        %5571 = vmatprep.subr.mxu0 0.0
        %5572 = vmatpush1.msra.mxu0 0.0
        %5573 = vmatprep.subr.mxu0 0.0
        %5574 = vmatpush1.msra.mxu0 0.0
        %5575 = vmatprep.subr.mxu0 0.0
        %5576 = vmatpush1.msra.mxu0 0.0
        %5577 = vmatprep.subr.mxu0 0.0
        %5578 = vmatpush1.msra.mxu0 0.0
        %5579 = vmatprep.subr.mxu0 0.0
        %5580 = vmatpush1.msra.mxu0 0.0
        %5581 = vmatprep.subr.mxu0 0.0
        %5582 = vmatpush1.msra.mxu0 0.0
        %5583 = vmatprep.subr.mxu0 0.0
        %5584 = vmatpush1.msra.mxu0 0.0
        %5585 = vmatprep.subr.mxu0 0.0
        %5586 = vmatpush1.msra.mxu0 0.0
        %5587 = vmatprep.subr.mxu0 0.0
        %5588 = vmatpush1.msra.mxu0 0.0
        %5589 = vmatprep.subr.mxu0 0.0
        %5590 = vmatpush1.msra.mxu0 0.0
        %5591 = vmatprep.subr.mxu0 0.0
        %5592 = vmatpush1.msra.mxu0 0.0
        %5593 = vmatprep.subr.mxu0 0.0
        %5594 = vmatpush1.msra.mxu0 0.0
        %5595 = vmatprep.subr.mxu0 0.0
        %5596 = vmatpush1.msra.mxu0 0.0
        %5597 = vmatprep.subr.mxu0 0.0
        %5598 = vmatpush1.msra.mxu0 0.0
        %5599 = vmatprep.subr.mxu0 0.0
        %5600 = vmatpush1.msra.mxu0 0.0
        %5601 = vmatprep.subr.mxu0 0.0
        %5602 = vmatpush1.msra.mxu0 0.0
        %5603 = vmatprep.subr.mxu0 0.0
        %5604 = vmatpush1.msra.mxu0 0.0
        %5605 = vmatprep.subr.mxu0 0.0
        %5606 = vmatpush1.msra.mxu0 0.0
        %5607 = vmatprep.subr.mxu0 0.0
        %5608 = vmatpush1.msra.mxu0 0.0
        %5609 = vmatprep.subr.mxu0 0.0
        %5610 = vmatpush1.msra.mxu0 0.0
        %5611 = vmatprep.subr.mxu0 0.0
        %5612 = vmatpush1.msra.mxu0 0.0
        %5613 = vmatprep.subr.mxu0 0.0
        %5614 = vmatpush1.msra.mxu0 0.0
        %5615 = vmatprep.subr.mxu0 0.0
        %5616 = vmatpush1.msra.mxu0 0.0
        %5617 = vmatprep.subr.mxu0 0.0
        %5618 = vmatpush1.msra.mxu0 0.0
        %5619 = vmatprep.subr.mxu0 0.0
        %5620 = vmatpush1.msra.mxu0 0.0
        %5621 = vmatprep.subr.mxu0 0.0
        %5622 = vmatpush1.msra.mxu0 0.0
        %5623 = vmatprep.mubr.f32.mxu0 0.0
        %5624 = vmatmul.mubr.f32.gmra.mrb[0].mxu0 %v2922
        %v5625 = vpop.f32.mrb[0].mxu0
        %v5626 = vadd.f32 0.0, %v5625
        %v5627 = vpop.f32.mrb[0].mxu0
        %5628 = vdwg.mxu0
        %5629 = vrot.lane.b32.xlu0 %v3627, 32
        %v5630 = vpop.permute.xlu0 %5629
        %5632 = vmatprep.subr.mxu0 0.0
        %5633 = vmatpush1.msra.mxu0 %v5630
        %5634 = vmatprep.subr.mxu0 0.0
        %5635 = vmatpush1.msra.mxu0 0.0
        %5636 = vmatprep.subr.mxu0 0.0
        %5637 = vmatpush1.msra.mxu0 0.0
        %5638 = vmatprep.subr.mxu0 0.0
        %5639 = vmatpush1.msra.mxu0 0.0
        %5640 = vmatprep.subr.mxu0 0.0
        %5641 = vmatpush1.msra.mxu0 0.0
        %5642 = vmatprep.subr.mxu0 0.0
        %5643 = vmatpush1.msra.mxu0 0.0
        %5644 = vmatprep.subr.mxu0 0.0
        %5645 = vmatpush1.msra.mxu0 0.0
        %5646 = vmatprep.subr.mxu0 0.0
        %5647 = vmatpush1.msra.mxu0 0.0
        %5648 = vmatprep.subr.mxu0 0.0
        %5649 = vmatpush1.msra.mxu0 0.0
        %5650 = vmatprep.subr.mxu0 0.0
        %5651 = vmatpush1.msra.mxu0 0.0
        %5652 = vmatprep.subr.mxu0 0.0
        %5653 = vmatpush1.msra.mxu0 0.0
        %5654 = vmatprep.subr.mxu0 0.0
        %5655 = vmatpush1.msra.mxu0 0.0
        %5656 = vmatprep.subr.mxu0 0.0
        %5657 = vmatpush1.msra.mxu0 0.0
        %5658 = vmatprep.subr.mxu0 0.0
        %5659 = vmatpush1.msra.mxu0 0.0
        %5660 = vmatprep.subr.mxu0 0.0
        %5661 = vmatpush1.msra.mxu0 0.0
        %5662 = vmatprep.subr.mxu0 0.0
        %5663 = vmatpush1.msra.mxu0 0.0
        %5664 = vmatprep.subr.mxu0 0.0
        %5665 = vmatpush1.msra.mxu0 0.0
        %5666 = vmatprep.subr.mxu0 0.0
        %5667 = vmatpush1.msra.mxu0 0.0
        %5668 = vmatprep.subr.mxu0 0.0
        %5669 = vmatpush1.msra.mxu0 0.0
        %5670 = vmatprep.subr.mxu0 0.0
        %5671 = vmatpush1.msra.mxu0 0.0
        %5672 = vmatprep.subr.mxu0 0.0
        %5673 = vmatpush1.msra.mxu0 0.0
        %5674 = vmatprep.subr.mxu0 0.0
        %5675 = vmatpush1.msra.mxu0 0.0
        %5676 = vmatprep.subr.mxu0 0.0
        %5677 = vmatpush1.msra.mxu0 0.0
        %5678 = vmatprep.subr.mxu0 0.0
        %5679 = vmatpush1.msra.mxu0 0.0
        %5680 = vmatprep.subr.mxu0 0.0
        %5681 = vmatpush1.msra.mxu0 0.0
        %5682 = vmatprep.subr.mxu0 0.0
        %5683 = vmatpush1.msra.mxu0 0.0
        %5684 = vmatprep.subr.mxu0 0.0
        %5685 = vmatpush1.msra.mxu0 0.0
        %5686 = vmatprep.subr.mxu0 0.0
        %5687 = vmatpush1.msra.mxu0 0.0
        %5688 = vmatprep.subr.mxu0 0.0
        %5689 = vmatpush1.msra.mxu0 0.0
        %5690 = vmatprep.subr.mxu0 0.0
        %5691 = vmatpush1.msra.mxu0 0.0
        %5692 = vmatprep.subr.mxu0 0.0
        %5693 = vmatpush1.msra.mxu0 0.0
        %5694 = vmatprep.subr.mxu0 0.0
        %5695 = vmatpush1.msra.mxu0 0.0
        %5696 = vmatprep.mubr.f32.mxu0 0.0
        %5697 = vmatmul.mubr.f32.gmra.mrb[0].mxu0 %v2998
        %v5698 = vpop.f32.mrb[0].mxu0
        %v5699 = vadd.f32 0.0, %v5698
        %v5700 = vpop.f32.mrb[0].mxu0
        %5701 = vdwg.mxu0
        %5702 = vrot.lane.b32.xlu0 %v3632, 32
        %v5703 = vpop.permute.xlu0 %5702
        %5705 = vmatprep.subr.mxu0 0.0
        %5706 = vmatpush1.msra.mxu0 %v5703
        %5707 = vmatprep.subr.mxu0 0.0
        %5708 = vmatpush1.msra.mxu0 0.0
        %5709 = vmatprep.subr.mxu0 0.0
        %5710 = vmatpush1.msra.mxu0 0.0
        %5711 = vmatprep.subr.mxu0 0.0
        %5712 = vmatpush1.msra.mxu0 0.0
        %5713 = vmatprep.subr.mxu0 0.0
        %5714 = vmatpush1.msra.mxu0 0.0
        %5715 = vmatprep.subr.mxu0 0.0
        %5716 = vmatpush1.msra.mxu0 0.0
        %5717 = vmatprep.subr.mxu0 0.0
        %5718 = vmatpush1.msra.mxu0 0.0
        %5719 = vmatprep.subr.mxu0 0.0
        %5720 = vmatpush1.msra.mxu0 0.0
        %5721 = vmatprep.subr.mxu0 0.0
        %5722 = vmatpush1.msra.mxu0 0.0
        %5723 = vmatprep.subr.mxu0 0.0
        %5724 = vmatpush1.msra.mxu0 0.0
        %5725 = vmatprep.subr.mxu0 0.0
        %5726 = vmatpush1.msra.mxu0 0.0
        %5727 = vmatprep.subr.mxu0 0.0
        %5728 = vmatpush1.msra.mxu0 0.0
        %5729 = vmatprep.subr.mxu0 0.0
        %5730 = vmatpush1.msra.mxu0 0.0
        %5731 = vmatprep.subr.mxu0 0.0
        %5732 = vmatpush1.msra.mxu0 0.0
        %5733 = vmatprep.subr.mxu0 0.0
        %5734 = vmatpush1.msra.mxu0 0.0
        %5735 = vmatprep.subr.mxu0 0.0
        %5736 = vmatpush1.msra.mxu0 0.0
        %5737 = vmatprep.subr.mxu0 0.0
        %5738 = vmatpush1.msra.mxu0 0.0
        %5739 = vmatprep.subr.mxu0 0.0
        %5740 = vmatpush1.msra.mxu0 0.0
        %5741 = vmatprep.subr.mxu0 0.0
        %5742 = vmatpush1.msra.mxu0 0.0
        %5743 = vmatprep.subr.mxu0 0.0
        %5744 = vmatpush1.msra.mxu0 0.0
        %5745 = vmatprep.subr.mxu0 0.0
        %5746 = vmatpush1.msra.mxu0 0.0
        %5747 = vmatprep.subr.mxu0 0.0
        %5748 = vmatpush1.msra.mxu0 0.0
        %5749 = vmatprep.subr.mxu0 0.0
        %5750 = vmatpush1.msra.mxu0 0.0
        %5751 = vmatprep.subr.mxu0 0.0
        %5752 = vmatpush1.msra.mxu0 0.0
        %5753 = vmatprep.subr.mxu0 0.0
        %5754 = vmatpush1.msra.mxu0 0.0
        %5755 = vmatprep.subr.mxu0 0.0
        %5756 = vmatpush1.msra.mxu0 0.0
        %5757 = vmatprep.subr.mxu0 0.0
        %5758 = vmatpush1.msra.mxu0 0.0
        %5759 = vmatprep.subr.mxu0 0.0
        %5760 = vmatpush1.msra.mxu0 0.0
        %5761 = vmatprep.subr.mxu0 0.0
        %5762 = vmatpush1.msra.mxu0 0.0
        %5763 = vmatprep.subr.mxu0 0.0
        %5764 = vmatpush1.msra.mxu0 0.0
        %5765 = vmatprep.subr.mxu0 0.0
        %5766 = vmatpush1.msra.mxu0 0.0
        %5767 = vmatprep.subr.mxu0 0.0
        %5768 = vmatpush1.msra.mxu0 0.0
        %5769 = vmatprep.mubr.f32.mxu0 0.0
        %5770 = vmatmul.mubr.f32.gmra.mrb[0].mxu0 %v3074
        %v5771 = vpop.f32.mrb[0].mxu0
        %v5772 = vadd.f32 0.0, %v5771
        %v5773 = vpop.f32.mrb[0].mxu0
        %5774 = vdwg.mxu0
        %5775 = vrot.lane.b32.xlu0 %v3637, 32
        %v5776 = vpop.permute.xlu0 %5775
        %5778 = vmatprep.subr.mxu0 0.0
        %5779 = vmatpush1.msra.mxu0 %v5776
        %5780 = vmatprep.subr.mxu0 0.0
        %5781 = vmatpush1.msra.mxu0 0.0
        %5782 = vmatprep.subr.mxu0 0.0
        %5783 = vmatpush1.msra.mxu0 0.0
        %5784 = vmatprep.subr.mxu0 0.0
        %5785 = vmatpush1.msra.mxu0 0.0
        %5786 = vmatprep.subr.mxu0 0.0
        %5787 = vmatpush1.msra.mxu0 0.0
        %5788 = vmatprep.subr.mxu0 0.0
        %5789 = vmatpush1.msra.mxu0 0.0
        %5790 = vmatprep.subr.mxu0 0.0
        %5791 = vmatpush1.msra.mxu0 0.0
        %5792 = vmatprep.subr.mxu0 0.0
        %5793 = vmatpush1.msra.mxu0 0.0
        %5794 = vmatprep.subr.mxu0 0.0
        %5795 = vmatpush1.msra.mxu0 0.0
        %5796 = vmatprep.subr.mxu0 0.0
        %5797 = vmatpush1.msra.mxu0 0.0
        %5798 = vmatprep.subr.mxu0 0.0
        %5799 = vmatpush1.msra.mxu0 0.0
        %5800 = vmatprep.subr.mxu0 0.0
        %5801 = vmatpush1.msra.mxu0 0.0
        %5802 = vmatprep.subr.mxu0 0.0
        %5803 = vmatpush1.msra.mxu0 0.0
        %5804 = vmatprep.subr.mxu0 0.0
        %5805 = vmatpush1.msra.mxu0 0.0
        %5806 = vmatprep.subr.mxu0 0.0
        %5807 = vmatpush1.msra.mxu0 0.0
        %5808 = vmatprep.subr.mxu0 0.0
        %5809 = vmatpush1.msra.mxu0 0.0
        %5810 = vmatprep.subr.mxu0 0.0
        %5811 = vmatpush1.msra.mxu0 0.0
        %5812 = vmatprep.subr.mxu0 0.0
        %5813 = vmatpush1.msra.mxu0 0.0
        %5814 = vmatprep.subr.mxu0 0.0
        %5815 = vmatpush1.msra.mxu0 0.0
        %5816 = vmatprep.subr.mxu0 0.0
        %5817 = vmatpush1.msra.mxu0 0.0
        %5818 = vmatprep.subr.mxu0 0.0
        %5819 = vmatpush1.msra.mxu0 0.0
        %5820 = vmatprep.subr.mxu0 0.0
        %5821 = vmatpush1.msra.mxu0 0.0
        %5822 = vmatprep.subr.mxu0 0.0
        %5823 = vmatpush1.msra.mxu0 0.0
        %5824 = vmatprep.subr.mxu0 0.0
        %5825 = vmatpush1.msra.mxu0 0.0
        %5826 = vmatprep.subr.mxu0 0.0
        %5827 = vmatpush1.msra.mxu0 0.0
        %5828 = vmatprep.subr.mxu0 0.0
        %5829 = vmatpush1.msra.mxu0 0.0
        %5830 = vmatprep.subr.mxu0 0.0
        %5831 = vmatpush1.msra.mxu0 0.0
        %5832 = vmatprep.subr.mxu0 0.0
        %5833 = vmatpush1.msra.mxu0 0.0
        %5834 = vmatprep.subr.mxu0 0.0
        %5835 = vmatpush1.msra.mxu0 0.0
        %5836 = vmatprep.subr.mxu0 0.0
        %5837 = vmatpush1.msra.mxu0 0.0
        %5838 = vmatprep.subr.mxu0 0.0
        %5839 = vmatpush1.msra.mxu0 0.0
        %5840 = vmatprep.subr.mxu0 0.0
        %5841 = vmatpush1.msra.mxu0 0.0
        %5842 = vmatprep.mubr.f32.mxu0 0.0
        %5843 = vmatmul.mubr.f32.gmra.mrb[0].mxu0 %v3150
        %v5844 = vpop.f32.mrb[0].mxu0
        %v5845 = vadd.f32 0.0, %v5844
        %v5846 = vpop.f32.mrb[0].mxu0
        %5847 = vdwg.mxu0
        %5848 = vrot.lane.b32.xlu0 %v3642, 32
        %v5849 = vpop.permute.xlu0 %5848
        %5851 = vmatprep.subr.mxu0 0.0
        %5852 = vmatpush1.msra.mxu0 %v5849
        %5853 = vmatprep.subr.mxu0 0.0
        %5854 = vmatpush1.msra.mxu0 0.0
        %5855 = vmatprep.subr.mxu0 0.0
        %5856 = vmatpush1.msra.mxu0 0.0
        %5857 = vmatprep.subr.mxu0 0.0
        %5858 = vmatpush1.msra.mxu0 0.0
        %5859 = vmatprep.subr.mxu0 0.0
        %5860 = vmatpush1.msra.mxu0 0.0
        %5861 = vmatprep.subr.mxu0 0.0
        %5862 = vmatpush1.msra.mxu0 0.0
        %5863 = vmatprep.subr.mxu0 0.0
        %5864 = vmatpush1.msra.mxu0 0.0
        %5865 = vmatprep.subr.mxu0 0.0
        %5866 = vmatpush1.msra.mxu0 0.0
        %5867 = vmatprep.subr.mxu0 0.0
        %5868 = vmatpush1.msra.mxu0 0.0
        %5869 = vmatprep.subr.mxu0 0.0
        %5870 = vmatpush1.msra.mxu0 0.0
        %5871 = vmatprep.subr.mxu0 0.0
        %5872 = vmatpush1.msra.mxu0 0.0
        %5873 = vmatprep.subr.mxu0 0.0
        %5874 = vmatpush1.msra.mxu0 0.0
        %5875 = vmatprep.subr.mxu0 0.0
        %5876 = vmatpush1.msra.mxu0 0.0
        %5877 = vmatprep.subr.mxu0 0.0
        %5878 = vmatpush1.msra.mxu0 0.0
        %5879 = vmatprep.subr.mxu0 0.0
        %5880 = vmatpush1.msra.mxu0 0.0
        %5881 = vmatprep.subr.mxu0 0.0
        %5882 = vmatpush1.msra.mxu0 0.0
        %5883 = vmatprep.subr.mxu0 0.0
        %5884 = vmatpush1.msra.mxu0 0.0
        %5885 = vmatprep.subr.mxu0 0.0
        %5886 = vmatpush1.msra.mxu0 0.0
        %5887 = vmatprep.subr.mxu0 0.0
        %5888 = vmatpush1.msra.mxu0 0.0
        %5889 = vmatprep.subr.mxu0 0.0
        %5890 = vmatpush1.msra.mxu0 0.0
        %5891 = vmatprep.subr.mxu0 0.0
        %5892 = vmatpush1.msra.mxu0 0.0
        %5893 = vmatprep.subr.mxu0 0.0
        %5894 = vmatpush1.msra.mxu0 0.0
        %5895 = vmatprep.subr.mxu0 0.0
        %5896 = vmatpush1.msra.mxu0 0.0
        %5897 = vmatprep.subr.mxu0 0.0
        %5898 = vmatpush1.msra.mxu0 0.0
        %5899 = vmatprep.subr.mxu0 0.0
        %5900 = vmatpush1.msra.mxu0 0.0
        %5901 = vmatprep.subr.mxu0 0.0
        %5902 = vmatpush1.msra.mxu0 0.0
        %5903 = vmatprep.subr.mxu0 0.0
        %5904 = vmatpush1.msra.mxu0 0.0
        %5905 = vmatprep.subr.mxu0 0.0
        %5906 = vmatpush1.msra.mxu0 0.0
        %5907 = vmatprep.subr.mxu0 0.0
        %5908 = vmatpush1.msra.mxu0 0.0
        %5909 = vmatprep.subr.mxu0 0.0
        %5910 = vmatpush1.msra.mxu0 0.0
        %5911 = vmatprep.subr.mxu0 0.0
        %5912 = vmatpush1.msra.mxu0 0.0
        %5913 = vmatprep.subr.mxu0 0.0
        %5914 = vmatpush1.msra.mxu0 0.0
        %5915 = vmatprep.mubr.f32.mxu0 0.0
        %5916 = vmatmul.mubr.f32.gmra.mrb[0].mxu0 %v3226
        %v5917 = vpop.f32.mrb[0].mxu0
        %v5918 = vadd.f32 0.0, %v5917
        %v5919 = vpop.f32.mrb[0].mxu0
        %5920 = vdwg.mxu0
        %5921 = vrot.lane.b32.xlu0 %v3647, 32
        %v5922 = vpop.permute.xlu0 %5921
        %5924 = vmatprep.subr.mxu0 0.0
        %5925 = vmatpush1.msra.mxu0 %v5922
        %5926 = vmatprep.subr.mxu0 0.0
        %5927 = vmatpush1.msra.mxu0 0.0
        %5928 = vmatprep.subr.mxu0 0.0
        %5929 = vmatpush1.msra.mxu0 0.0
        %5930 = vmatprep.subr.mxu0 0.0
        %5931 = vmatpush1.msra.mxu0 0.0
        %5932 = vmatprep.subr.mxu0 0.0
        %5933 = vmatpush1.msra.mxu0 0.0
        %5934 = vmatprep.subr.mxu0 0.0
        %5935 = vmatpush1.msra.mxu0 0.0
        %5936 = vmatprep.subr.mxu0 0.0
        %5937 = vmatpush1.msra.mxu0 0.0
        %5938 = vmatprep.subr.mxu0 0.0
        %5939 = vmatpush1.msra.mxu0 0.0
        %5940 = vmatprep.subr.mxu0 0.0
        %5941 = vmatpush1.msra.mxu0 0.0
        %5942 = vmatprep.subr.mxu0 0.0
        %5943 = vmatpush1.msra.mxu0 0.0
        %5944 = vmatprep.subr.mxu0 0.0
        %5945 = vmatpush1.msra.mxu0 0.0
        %5946 = vmatprep.subr.mxu0 0.0
        %5947 = vmatpush1.msra.mxu0 0.0
        %5948 = vmatprep.subr.mxu0 0.0
        %5949 = vmatpush1.msra.mxu0 0.0
        %5950 = vmatprep.subr.mxu0 0.0
        %5951 = vmatpush1.msra.mxu0 0.0
        %5952 = vmatprep.subr.mxu0 0.0
        %5953 = vmatpush1.msra.mxu0 0.0
        %5954 = vmatprep.subr.mxu0 0.0
        %5955 = vmatpush1.msra.mxu0 0.0
        %5956 = vmatprep.subr.mxu0 0.0
        %5957 = vmatpush1.msra.mxu0 0.0
        %5958 = vmatprep.subr.mxu0 0.0
        %5959 = vmatpush1.msra.mxu0 0.0
        %5960 = vmatprep.subr.mxu0 0.0
        %5961 = vmatpush1.msra.mxu0 0.0
        %5962 = vmatprep.subr.mxu0 0.0
        %5963 = vmatpush1.msra.mxu0 0.0
        %5964 = vmatprep.subr.mxu0 0.0
        %5965 = vmatpush1.msra.mxu0 0.0
        %5966 = vmatprep.subr.mxu0 0.0
        %5967 = vmatpush1.msra.mxu0 0.0
        %5968 = vmatprep.subr.mxu0 0.0
        %5969 = vmatpush1.msra.mxu0 0.0
        %5970 = vmatprep.subr.mxu0 0.0
        %5971 = vmatpush1.msra.mxu0 0.0
        %5972 = vmatprep.subr.mxu0 0.0
        %5973 = vmatpush1.msra.mxu0 0.0
        %5974 = vmatprep.subr.mxu0 0.0
        %5975 = vmatpush1.msra.mxu0 0.0
        %5976 = vmatprep.subr.mxu0 0.0
        %5977 = vmatpush1.msra.mxu0 0.0
        %5978 = vmatprep.subr.mxu0 0.0
        %5979 = vmatpush1.msra.mxu0 0.0
        %5980 = vmatprep.subr.mxu0 0.0
        %5981 = vmatpush1.msra.mxu0 0.0
        %5982 = vmatprep.subr.mxu0 0.0
        %5983 = vmatpush1.msra.mxu0 0.0
        %5984 = vmatprep.subr.mxu0 0.0
        %5985 = vmatpush1.msra.mxu0 0.0
        %5986 = vmatprep.subr.mxu0 0.0
        %5987 = vmatpush1.msra.mxu0 0.0
        %5988 = vmatprep.mubr.f32.mxu0 0.0
        %5989 = vmatmul.mubr.f32.gmra.mrb[0].mxu0 %v3302
        %v5990 = vpop.f32.mrb[0].mxu0
        %v5991 = vadd.f32 0.0, %v5990
        %v5992 = vpop.f32.mrb[0].mxu0
        %5993 = vdwg.mxu0
        %v5994 = vadd.f32 %v5402, %v5480
        %v5995 = vadd.f32 %v5403, %v5553
        %v5996 = vadd.f32 %v5404, %v5626
        %v5997 = vadd.f32 %v5405, %v5699
        %v5998 = vadd.f32 %v5406, %v5772
        %v5999 = vadd.f32 %v5407, %v5845
        %v6000 = vadd.f32 %v5408, %v5918
        %v6001 = vadd.f32 %v5409, %v5991
        %v6002 = vmax.f32 %v5994, 0.0
        %v6003 = vmax.f32 %v5995, 0.0
        %v6004 = vmax.f32 %v5996, 0.0
        %v6005 = vmax.f32 %v5997, 0.0
        %v6006 = vmax.f32 %v5998, 0.0
        %v6007 = vmax.f32 %v5999, 0.0
        %v6008 = vmax.f32 %v6000, 0.0
        %v6009 = vmax.f32 %v6001, 0.0
        %v6010 = vmul.f32 %v6002, %v430
        %v6011 = vmul.f32 %v6003, %v435
        %v6012 = vmul.f32 %v6004, %v440
        %v6013 = vmul.f32 %v6005, %v445
        %v6014 = vmul.f32 %v6006, %v450
        %v6015 = vmul.f32 %v6007, %v455
        %v6016 = vmul.f32 %v6008, %v460
        %v6017 = vmul.f32 %v6009, %v465
        %v6018 = vsel %vm694, %v6010, 0.0
        %v6019 = vrot.slane %v6018, 4
        %v6020 = vadd.f32 %v6018, %v6019
        %v6021 = vrot.slane %v6020, 2
        %v6022 = vadd.f32 %v6020, %v6021
        %v6023 = vrot.slane %v6022, 1
        %v6024 = vadd.f32 %v6022, %v6023
        %v6025 = vsel %vm694, %v6011, 0.0
        %v6026 = vrot.slane %v6025, 4
        %v6027 = vadd.f32 %v6025, %v6026
        %v6028 = vrot.slane %v6027, 2
        %v6029 = vadd.f32 %v6027, %v6028
        %v6030 = vrot.slane %v6029, 1
        %v6031 = vadd.f32 %v6029, %v6030
        %v6032 = vsel %vm694, %v6012, 0.0
        %v6033 = vrot.slane %v6032, 4
        %v6034 = vadd.f32 %v6032, %v6033
        %v6035 = vrot.slane %v6034, 2
        %v6036 = vadd.f32 %v6034, %v6035
        %v6037 = vrot.slane %v6036, 1
        %v6038 = vadd.f32 %v6036, %v6037
        %v6039 = vsel %vm694, %v6013, 0.0
        %v6040 = vrot.slane %v6039, 4
        %v6041 = vadd.f32 %v6039, %v6040
        %v6042 = vrot.slane %v6041, 2
        %v6043 = vadd.f32 %v6041, %v6042
        %v6044 = vrot.slane %v6043, 1
        %v6045 = vadd.f32 %v6043, %v6044
        %v6046 = vsel %vm694, %v6014, 0.0
        %v6047 = vrot.slane %v6046, 4
        %v6048 = vadd.f32 %v6046, %v6047
        %v6049 = vrot.slane %v6048, 2
        %v6050 = vadd.f32 %v6048, %v6049
        %v6051 = vrot.slane %v6050, 1
        %v6052 = vadd.f32 %v6050, %v6051
        %v6053 = vsel %vm694, %v6015, 0.0
        %v6054 = vrot.slane %v6053, 4
        %v6055 = vadd.f32 %v6053, %v6054
        %v6056 = vrot.slane %v6055, 2
        %v6057 = vadd.f32 %v6055, %v6056
        %v6058 = vrot.slane %v6057, 1
        %v6059 = vadd.f32 %v6057, %v6058
        %v6060 = vsel %vm694, %v6016, 0.0
        %v6061 = vrot.slane %v6060, 4
        %v6062 = vadd.f32 %v6060, %v6061
        %v6063 = vrot.slane %v6062, 2
        %v6064 = vadd.f32 %v6062, %v6063
        %v6065 = vrot.slane %v6064, 1
        %v6066 = vadd.f32 %v6064, %v6065
        %v6067 = vsel %vm694, %v6017, 0.0
        %v6068 = vrot.slane %v6067, 4
        %v6069 = vadd.f32 %v6067, %v6068
        %v6070 = vrot.slane %v6069, 2
        %v6071 = vadd.f32 %v6069, %v6070
        %v6072 = vrot.slane %v6071, 1
        %v6073 = vadd.f32 %v6071, %v6072
        %v6074 = vmul.f32 %v6024, 0.125
        %v6075 = vmul.f32 %v6031, 0.125
        %v6076 = vmul.f32 %v6038, 0.125
        %v6077 = vmul.f32 %v6045, 0.125
        %v6078 = vmul.f32 %v6052, 0.125
        %v6079 = vmul.f32 %v6059, 0.125
        %v6080 = vmul.f32 %v6066, 0.125
        %v6081 = vmul.f32 %v6073, 0.125
        %v6090 = vrot.slane %v6011, 7
        %vm6091 = vcmask 1041409
        %v6092 = vsel %vm6091, %v6090, %v6010
        %v6093 = vrot.slane %v6012, 6
        %vm6094 = vcmask 1042434
        %v6095 = vsel %vm6094, %v6093, %v6092
        %v6096 = vrot.slane %v6013, 5
        %vm6097 = vcmask 1043459
        %v6098 = vsel %vm6097, %v6096, %v6095
        %v6099 = vrot.slane %v6014, 4
        %vm6100 = vcmask 1044484
        %v6101 = vsel %vm6100, %v6099, %v6098
        %v6102 = vrot.slane %v6015, 3
        %vm6103 = vcmask 1045509
        %v6104 = vsel %vm6103, %v6102, %v6101
        %v6105 = vrot.slane %v6016, 2
        %vm6106 = vcmask 1046534
        %v6107 = vsel %vm6106, %v6105, %v6104
        %v6108 = vrot.slane %v6017, 1
        %vm6109 = vcmask 1047559
        %v6110 = vsel %vm6109, %v6108, %v6107
        %v6120 = vsel %vm6091, %v6075, %v6074
        %v6121 = vsel %vm6094, %v6076, %v6120
        %v6122 = vsel %vm6097, %v6077, %v6121
        %v6123 = vsel %vm6100, %v6078, %v6122
        %v6124 = vsel %vm6103, %v6079, %v6123
        %v6125 = vsel %vm6106, %v6080, %v6124
        %v6126 = vsel %vm6109, %v6081, %v6125
        %6127 = vrot.lane.b32.xlu0 %v6126, 32
        %v6128 = vpop.permute.xlu0 %6127
        %v6130 = vsel %vm694, %v6110, %v6128
        %v6131 = vld [vmem:[%s7] sm:$0xff]
        %v6132 = vld [vmem:[%s7 + $0x8] sm:$0xff]
        %v6133 = vld [vmem:[%s7 + $0x10] sm:$0xff]
        %v6134 = vld [vmem:[%s7 + $0x18] sm:$0xff]
        %v6135 = vld [vmem:[%s7 + $0x20] sm:$0xff]
        %v6136 = vld [vmem:[%s7 + $0x28] sm:$0xff]
        %v6137 = vld [vmem:[%s7 + $0x30] sm:$0xff]
        %v6138 = vld [vmem:[%s7 + $0x38] sm:$0xff]
        %v6139 = vld [vmem:[%s8] sm:$0x1]
        %v6141 = vlaneseq
        %v6142 = vshrl.u32 %v6141, 7
        %v6143 = vsub.s32 0, %v6142
        %v6144 = vrot.slane %v6139, %v6143
        %vm6146 = vcmask 523264
        %v6148 = vsel %vm6146, %v6130, 0
        %6150 = vmatprep.subr.mxu0 0.0
        %6151 = vmatpush1.msra.mxu0 %v6131
        %6152 = vmatprep.subr.mxu0 0.0
        %6153 = vmatpush1.msra.mxu0 %v6132
        %6154 = vmatprep.subr.mxu0 0.0
        %6155 = vmatpush1.msra.mxu0 %v6133
        %6156 = vmatprep.subr.mxu0 0.0
        %6157 = vmatpush1.msra.mxu0 %v6134
        %6158 = vmatprep.subr.mxu0 0.0
        %6159 = vmatpush1.msra.mxu0 %v6135
        %6160 = vmatprep.subr.mxu0 0.0
        %6161 = vmatpush1.msra.mxu0 %v6136
        %6162 = vmatprep.subr.mxu0 0.0
        %6163 = vmatpush1.msra.mxu0 %v6137
        %6164 = vmatprep.subr.mxu0 0.0
        %6165 = vmatpush1.msra.mxu0 %v6138
        %6166 = vmatprep.subr.mxu0 0.0
        %6167 = vmatpush1.msra.mxu0 0.0
        %6168 = vmatprep.subr.mxu0 0.0
        %6169 = vmatpush1.msra.mxu0 0.0
        %6170 = vmatprep.subr.mxu0 0.0
        %6171 = vmatpush1.msra.mxu0 0.0
        %6172 = vmatprep.subr.mxu0 0.0
        %6173 = vmatpush1.msra.mxu0 0.0
        %6174 = vmatprep.subr.mxu0 0.0
        %6175 = vmatpush1.msra.mxu0 0.0
        %6176 = vmatprep.subr.mxu0 0.0
        %6177 = vmatpush1.msra.mxu0 0.0
        %6178 = vmatprep.subr.mxu0 0.0
        %6179 = vmatpush1.msra.mxu0 0.0
        %6180 = vmatprep.subr.mxu0 0.0
        %6181 = vmatpush1.msra.mxu0 0.0
        %6182 = vmatprep.subr.mxu0 0.0
        %6183 = vmatpush1.msra.mxu0 0.0
        %6184 = vmatprep.subr.mxu0 0.0
        %6185 = vmatpush1.msra.mxu0 0.0
        %6186 = vmatprep.subr.mxu0 0.0
        %6187 = vmatpush1.msra.mxu0 0.0
        %6188 = vmatprep.subr.mxu0 0.0
        %6189 = vmatpush1.msra.mxu0 0.0
        %6190 = vmatprep.subr.mxu0 0.0
        %6191 = vmatpush1.msra.mxu0 0.0
        %6192 = vmatprep.subr.mxu0 0.0
        %6193 = vmatpush1.msra.mxu0 0.0
        %6194 = vmatprep.subr.mxu0 0.0
        %6195 = vmatpush1.msra.mxu0 0.0
        %6196 = vmatprep.subr.mxu0 0.0
        %6197 = vmatpush1.msra.mxu0 0.0
        %6198 = vmatprep.subr.mxu0 0.0
        %6199 = vmatpush1.msra.mxu0 0.0
        %6200 = vmatprep.subr.mxu0 0.0
        %6201 = vmatpush1.msra.mxu0 0.0
        %6202 = vmatprep.subr.mxu0 0.0
        %6203 = vmatpush1.msra.mxu0 0.0
        %6204 = vmatprep.subr.mxu0 0.0
        %6205 = vmatpush1.msra.mxu0 0.0
        %6206 = vmatprep.subr.mxu0 0.0
        %6207 = vmatpush1.msra.mxu0 0.0
        %6208 = vmatprep.subr.mxu0 0.0
        %6209 = vmatpush1.msra.mxu0 0.0
        %6210 = vmatprep.subr.mxu0 0.0
        %6211 = vmatpush1.msra.mxu0 0.0
        %6212 = vmatprep.subr.mxu0 0.0
        %6213 = vmatpush1.msra.mxu0 0.0
        %6214 = vmatprep.mubr.f32.mxu0 0.0
        %6215 = vmatmul.mubr.f32.gmra.mrb[0].mxu0 %v6148
        %v6216 = vpop.f32.mrb[0].mxu0
        %v6217 = vadd.f32 %v6144, %v6216
        %v6218 = vpop.f32.mrb[0].mxu0
        %6219 = vdwg.mxu0
        %6220 = vmax.xlane.f32.xlu0 %v6217
        %v6221 = vpop.xlane.xlu0 %6220
        %v6222 = vsub.f32 %v6217, %v6221
        %v6223 = vmul.f32 %v6222, 1.442695
        %v6224 = vpow.pop %v6223
        %6225 = vadd.xlane.f32.xlu0 %v6224
        %v6226 = vpop.xlane.xlu0 %6225
        %v6227 = vrcp.pop %v6226
        %v6228 = vmul.f32 %v6224, %v6227
        %6229 = vst [vmem:[%s372] sm:$0xff] %v6228
        %s6230 = sand.u32 %s240, 1
        %s6231 = scalar_lea.sflag [#allocation3], %s6230
        %s6232 = sand.u32 %s240, 1
        %s6233 = smul.addr %s6232, 8
        %s6234 = scalar_lea.vmem [#allocation2], %s6233
        // Predicated region
        $region57: #{tpu_custom_call.1} parent=55 // pred_check
          %p6235 = pneg %p250
        $region58: #{tpu_custom_call.1} parent=55 // pred_check_branch
          %6237 = sbr.rel (%p6235) target = $region60
        $region59: #{tpu_custom_call.1} parent=55 // pred_region
          %s6239 = ssub.s32 128, 128
          %6240 = vsyncadd %s6231, %s6239
          %s6241 = smul.addr %s23, 128
          %s6242 = scalar_lea.hbm %s9, %s6241
          %s6244 = sshll.u32 %s6234, 4
          %s6245 = int_to_ptr.vmem [resolvable:$true] %s6244
          %6247 = dma.vmem_to_hbm [thread:$0]  %s6245, 128, %s6242, %s6231
        $region60: #{tpu_custom_call.1} parent=55 // pred_fallthru
          _
      $region56: #{tpu_custom_call.1} parent=5 // pred_fallthru
        _
      %p6248 = scmp.le.s32.totalorder 2, %s18
      // Predicated region
      $region61: #{tpu_custom_call.1} parent=5 // pred_check
        %p6249 = pneg %p6248
      $region62: #{tpu_custom_call.1} parent=5 // pred_check_branch
        %6251 = sbr.rel (%p6249) target = $region64
      $region63: #{tpu_custom_call.1} parent=5 // pred_region
        %s6252 = ssub.s32 %s18, 2
        // Predicated region
        $region65: #{tpu_custom_call.1} parent=63 // pred_check
          %p6253 = pneg %p256
        $region66: #{tpu_custom_call.1} parent=63 // pred_check_branch
          %6255 = sbr.rel (%p6253) target = $region68
        $region67: #{tpu_custom_call.1} parent=63 // pred_region
          %s6256 = sand.u32 %s241, 1
          %s6257 = scalar_lea.sflag [#allocation3], %s6256
          %s6258 = sand.u32 %s241, 1
          %s6259 = smul.addr %s6258, 8
          %s6260 = scalar_lea.vmem [#allocation2], %s6259
          %6261 = dma.done %s6257, 128
        $region68: #{tpu_custom_call.1} parent=63 // pred_fallthru
          _
      $region64: #{tpu_custom_call.1} parent=5 // pred_fallthru
        _
    $region6: #{tpu_custom_call.1} parent=1 // loop_footer
      %s22 = sadd.s32 1, %s18
    $region7: #{tpu_custom_call.1} parent=1 // loop_footer_branch
      %17 = sbr.rel target = $region3
    $region8: #{tpu_custom_call.1} parent=1 // loop_exit
      _
    %6262 = vsyncpa [#allocation3], 1
    %s6263 = scalar_lea.sflag [#allocation3], 1
    %6264 = vsyncpa %s6263, 1

</llo_original>
